<compile_context>
chip_gen: v7x
topology: tpu7x:2x2x1
jax: 0.10.0
libtpu: 0.0.40
codegen_flags: <defaults>
</compile_context>

<pallas_src>
import jax
import jax.numpy as jnp
from jax import lax
from jax.experimental import pallas as pl
from jax.experimental.pallas import tpu as pltpu

EPS = 1e-5                      # torch.nn.LayerNorm default
MATMUL_DTYPE = jnp.bfloat16     # matmul operand dtype (f32 accumulation)
BRANCH_DTYPE = jnp.bfloat16     # dtype of the projected branch intermediates

_VMEM_LIMIT_CACHE = None


def _vmem_limit_bytes():
    """Generation-aware VMEM budget: ~75% of physical VMEM, capped at 100 MiB.
    v7x (64 MiB) -> 48 MiB; v5e/v6e (128 MiB) -> 96 MiB."""
    global _VMEM_LIMIT_CACHE
    if _VMEM_LIMIT_CACHE is None:
        try:
            cap = int(pltpu.get_tpu_info().vmem_capacity_bytes)
        except Exception:
            cap = 64 * 1024 * 1024          # conservative (v7x-sized) default
        _VMEM_LIMIT_CACHE = min((cap * 3) // 4, 100 * 1024 * 1024)
    return _VMEM_LIMIT_CACHE


def _gelu(x):
    # exact (erf-based) GELU, matching torch.nn.GELU(approximate='none')
    return 0.5 * x * (1.0 + lax.erf(x * 0.7071067811865476))


def _pick_tile(n, target=512):
    """Largest divisor of n <= target that is a multiple of 16 (bf16-safe
    sublanes), else a multiple of 8, else the full axis (a full-extent block
    is always a legal BlockSpec)."""
    t = min(n, target)
    if t == n:
        return n
    for step in (16, 8):
        start = (t // step) * step
        for cand in range(start, step - 1, -step):
            if n % cand == 0:
                return cand
    return n


def _const_spec_maker(single_buffer):
    """BlockSpec factory for operands with a constant index_map: single-buffer
    them (pl.Buffered(1)) so they are not pointlessly double-buffered."""
    if single_buffer:
        def make(shape, index_map):
            return pl.BlockSpec(shape, index_map, pipeline_mode=pl.Buffered(1))
    else:
        def make(shape, index_map):
            return pl.BlockSpec(shape, index_map)
    return make


# ---------------------------------------------------------------------------
# Kernel 1: fused LayerNorm1 + proj (C -> 3C, three contiguous bf16 outputs)
#           + per-tile channel-sum of the LN output (partial sums)
# ---------------------------------------------------------------------------
def ln_proj_kernel(x_ref, g_ref, be_ref, w_ref, bias_ref,
                   p1_ref, p2_ref, p3_ref, s_ref):
    x = x_ref[0]                                             # (tile, C)  f32
    mu = jnp.mean(x, axis=-1, keepdims=True)
    xc = x - mu
    var = jnp.mean(xc * xc, axis=-1, keepdims=True)
    y = (xc * lax.rsqrt(var + EPS)) * g_ref[...] + be_ref[...]

    part = jnp.dot(y.astype(w_ref.dtype), w_ref[...],
                   preferred_element_type=jnp.float32) + bias_ref[...]  # (tile, 3C)
    C = x.shape[-1]
    p1_ref[0] = part[:, 0 * C:1 * C].astype(p1_ref.dtype)
    p2_ref[0] = part[:, 1 * C:2 * C].astype(p2_ref.dtype)
    p3_ref[0] = part[:, 2 * C:3 * C].astype(p3_ref.dtype)

    # Per-tile channel sum of LN1(x); reduced across tiles in XLA.  Keeping
    # this a per-step output (not a += accumulator) lets both grid axes be
    # 'parallel' without any ordering dependency.
    s_ref[0, 0] = jnp.sum(y, axis=0, keepdims=True)


def ln_proj(x, gamma, beta, w_bf, bias, *, tile, single_buffer):
    b, HW, C = x.shape
    C3 = w_bf.shape[1]
    nj = HW // tile
    tok = lambda i, j: (i, j, 0)
    const = _const_spec_maker(single_buffer)
    return pl.pallas_call(
        ln_proj_kernel,
        out_shape=(jax.ShapeDtypeStruct((b, HW, C), BRANCH_DTYPE),     # p1 raw
                   jax.ShapeDtypeStruct((b, HW, C), BRANCH_DTYPE),     # p2 raw
                   jax.ShapeDtypeStruct((b, HW, C), BRANCH_DTYPE),     # p3
                   jax.ShapeDtypeStruct((b, nj, 1, C), jnp.float32)),  # s parts
        grid=(b, nj),
        in_specs=[
            pl.BlockSpec((1, tile, C), tok),                 # x tokens
            const((1, C), lambda i, j: (0, 0)),              # ln1 gamma
            const((1, C), lambda i, j: (0, 0)),              # ln1 beta
            const((C, C3), lambda i, j: (0, 0)),             # proj W (bf16)
            const((1, C3), lambda i, j: (0, 0)),             # proj bias
        ],
        out_specs=(
            pl.BlockSpec((1, tile, C), tok),
            pl.BlockSpec((1, tile, C), tok),
            pl.BlockSpec((1, tile, C), tok),
            pl.BlockSpec((1, 1, 1, C), lambda i, j: (i, j, 0, 0)),
        ),
        compiler_params=pltpu.CompilerParams(
            dimension_semantics=("parallel", "parallel"),
            vmem_limit_bytes=_vmem_limit_bytes()),
    )(x, gamma, beta, w_bf, bias)


# ---------------------------------------------------------------------------
# Kernel 2: attn-weighted branch sum + residual + LayerNorm2 + fc1 + GELU
#           + fc2 + residual.  Attention weights are a tiny precomputed input.
# ---------------------------------------------------------------------------
def fused_attn_mlp_kernel(attn_ref, p1_ref, p2_ref, p3_ref, x_ref,
                          g2_ref, b2_ref, w1_ref, bb1_ref, w2_ref, bb2_ref,
                          o_ref):
    attn = attn_ref[0]                                       # (3, C) f32
    x2 = (attn[0:1, :] * p1_ref[0].astype(jnp.float32)
          + attn[1:2, :] * p2_ref[0].astype(jnp.float32)
          + attn[2:3, :] * p3_ref[0].astype(jnp.float32)
          + x_ref[0])                                        # (tile, C) f32

    # --- LayerNorm2 ---
    mu = jnp.mean(x2, axis=-1, keepdims=True)
    xc = x2 - mu
    var = jnp.mean(xc * xc, axis=-1, keepdims=True)
    y = (xc * lax.rsqrt(var + EPS)) * g2_ref[...] + b2_ref[...]

    # --- MLP: fc1 -> GELU -> (bf16) -> fc2; hidden never touches HBM ---
    h = jnp.dot(y.astype(w1_ref.dtype), w1_ref[...],
                preferred_element_type=jnp.float32) + bb1_ref[...]
    h = _gelu(h).astype(w2_ref.dtype)        # cast right after GELU: halves
                                             # the (tile, 4C) hidden footprint
    out = jnp.dot(h, w2_ref[...],
                  preferred_element_type=jnp.float32) + bb2_ref[...]

    # --- second residual ---
    o_ref[0] = out + x2


def fused_attn_mlp(attn, p1, p2, p3, x, g2, b2, fc1_w, fc1_b, fc2_w, fc2_b,
                   *, tile, single_buffer):
    b, HW, C = x.shape
    D = fc1_w.shape[1]
    tok = lambda i, j: (i, j, 0)
    c2 = lambda i, j: (0, 0)
    const = _const_spec_maker(single_buffer)
    return pl.pallas_call(
        fused_attn_mlp_kernel,
        out_shape=jax.ShapeDtypeStruct((b, HW, C), jnp.float32),
        grid=(b, HW // tile),
        in_specs=[
            pl.BlockSpec((1, 3, C), lambda i, j: (i, 0, 0)),  # attn weights
            pl.BlockSpec((1, tile, C), tok),                  # p1 (spun, bf16)
            pl.BlockSpec((1, tile, C), tok),                  # p2 (spun, bf16)
            pl.BlockSpec((1, tile, C), tok),                  # p3 (bf16)
            pl.BlockSpec((1, tile, C), tok),                  # x residual (f32)
            const((1, C), c2),                                # ln2 gamma
            const((1, C), c2),                                # ln2 beta
            const((C, D), c2),                                # fc1_w (bf16)
            const((1, D), c2),                                # fc1_b
            const((D, C), c2),                                # fc2_w (bf16)
            const((1, C), c2),                                # fc2_b
        ],
        out_specs=pl.BlockSpec((1, tile, C), tok),
        input_output_aliases={4: 0},   # reuse the residual buffer for the out
        compiler_params=pltpu.CompilerParams(
            dimension_semantics=("parallel", "parallel"),
            vmem_limit_bytes=_vmem_limit_bytes()),
    )(attn, p1, p2, p3, x, g2, b2, fc1_w, fc1_b, fc2_w, fc2_b)


# ---------------------------------------------------------------------------
# JAX glue: spin() (pure data movement: rot90 on the (h, w) plane)
# ---------------------------------------------------------------------------
def spin(p, group, direction=False):
    flipflag = 2 if direction else 0
    parts = jnp.split(p, group, axis=-1)
    new = []
    for idx, q in enumerate(parts):
        if idx % 2:
            new.append(jnp.rot90(q, 1 + flipflag, axes=(1, 2)))
        else:
            new.append(jnp.rot90(q, 2, axes=(1, 2)))
    return jnp.concatenate(new, axis=-1)


# ---------------------------------------------------------------------------
# Full SpinMLPBlock forward
# ---------------------------------------------------------------------------
def spin_mlp_block(x, params, *, tile_target=512, single_buffer_consts=True):
    b, h, w, C = x.shape
    assert h == w, "spin() requires square spatial dims (rot90 by 1)"
    HW = h * w
    tile = _pick_tile(HW, tile_target)
    xf = x.reshape(b, HW, C)

    proj_w = params["proj_w"]                     # (C, 3C) f32
    proj_b = params["proj_b"]                     # (1, 3C) f32

    # ---- Kernel 1: LN1 + proj (3 contiguous bf16 branches + LN partial sums)
    p1r, p2r, p3f, s_part = ln_proj(
        xf, params["ln1_g"], params["ln1_b"],
        proj_w.astype(MATMUL_DTYPE), proj_b,
        tile=tile, single_buffer=single_buffer_consts)

    # ---- spin() rot90 permutations (contiguous bf16 tensors, XLA movement)
    p1f = spin(p1r.reshape(b, h, w, C), group=2, direction=False).reshape(b, HW, C)
    p2f = spin(p2r.reshape(b, h, w, C), group=2, direction=True).reshape(b, HW, C)

    # ---- SplitAttention weights in plain XLA (O(b*C^2), negligible).
    # The reference pools with a SUM over branches and h*w; since rot90 is a
    # permutation and the proj is linear, the pooled input is linear in
    # s = sum_hw LN1(x):   a = s @ (w0+w1+w2) + HW*(b0+b1+b2).
    s = s_part.reshape(b, -1, C).sum(axis=1)                    # (b, C)
    wsum = proj_w.reshape(C, 3, C).sum(axis=1)                  # (C, C)
    bsum = proj_b.reshape(3, C).sum(axis=0) * float(HW)         # (C,)
    a = s @ wsum + bsum
    hat = _gelu(a @ params["sa_w1"]) @ params["sa_w2"]          # (b, 3C)
    attn = jax.nn.softmax(hat.reshape(b, 3, C), axis=1)         # (b, 3, C) f32

    # ---- Kernel 2: attn + weighted sum + residual + LN2 + MLP + residual ----
    out = fused_attn_mlp(
        attn, p1f, p2f, p3f, xf,
        params["ln2_g"], params["ln2_b"],
        params["fc1_w"].astype(MATMUL_DTYPE), params["fc1_b"],
        params["fc2_w"].astype(MATMUL_DTYPE), params["fc2_b"],
        tile=tile, single_buffer=single_buffer_consts)
    return out.reshape(b, h, w, C)


# ---------------------------------------------------------------------------
if __name__ == "__main__":
    key = jax.random.PRNGKey(0)
    # C is a multiple of 128 so every streamed block is lane-dense (unmasked
    # stores, non-degenerate MXU K/N); spatial stays small so the demo is fast.
    b, h, w, C = 2, 8, 8, 128
    E = 4  # expansion_factor

    keys = jax.random.split(key, 13)

    def nrm(k, shape, scale):
        return (scale * jax.random.normal(k, shape)).astype(jnp.float32)

    params = {
        "ln1_g": (1.0 + nrm(keys[0], (1, C), 0.1)).astype(jnp.float32),
        "ln1_b": nrm(keys[1], (1, C), 0.1),
        "proj_w": nrm(keys[2], (C, 3 * C), float(C) ** -0.5),
        "proj_b": nrm(keys[3], (1, 3 * C), 0.02),
        "sa_w1": nrm(keys[4], (C, C), float(C) ** -0.5),
        "sa_w2": nrm(keys[5], (C, 3 * C), float(C) ** -0.5),
        "ln2_g": (1.0 + nrm(keys[6], (1, C), 0.1)).astype(jnp.float32),
        "ln2_b": nrm(keys[7], (1, C), 0.1),
        "fc1_w": nrm(keys[8], (C, C * E), float(C) ** -0.5),
        "fc1_b": nrm(keys[9], (1, C * E), 0.02),
        "fc2_w": nrm(keys[10], (C * E, C), float(C * E) ** -0.5),
        "fc2_b": nrm(keys[11], (1, C), 0.02),
    }

    x = nrm(keys[12], (b, h, w, C), 1.0)

    try:
        fwd = jax.jit(lambda xx, pp: spin_mlp_block(xx, pp, single_buffer_consts=True))
        out = jax.block_until_ready(fwd(x, params))
    except Exception:
        # pl.Buffered(1) single-buffering of constant operands may be
        # unavailable on some jax/jaxlib builds; fall back to default buffering.
        fwd = jax.jit(lambda xx, pp: spin_mlp_block(xx, pp, single_buffer_consts=False))
        out = jax.block_until_ready(fwd(x, params))

    assert out.shape == (b, h, w, C)
    assert bool(jnp.all(jnp.isfinite(out)))
    print("KERNEL_OK")
</pallas_src>

<mosaic_0001>
module attributes {stable_mosaic.version = 11 : i64} {
  func.func @ln_proj_kernel(%arg0: i32, %arg1: i32, %arg2: memref<1x64x128xf32, #tpu.memory_space<vmem>>, %arg3: memref<1x128xf32, #tpu.memory_space<vmem>>, %arg4: memref<1x128xf32, #tpu.memory_space<vmem>>, %arg5: memref<128x384xbf16, #tpu.memory_space<vmem>>, %arg6: memref<1x384xf32, #tpu.memory_space<vmem>>, %arg7: memref<1x64x128xbf16, #tpu.memory_space<vmem>>, %arg8: memref<1x64x128xbf16, #tpu.memory_space<vmem>>, %arg9: memref<1x64x128xbf16, #tpu.memory_space<vmem>>, %arg10: memref<1x1x1x128xf32, #tpu.memory_space<vmem>>) attributes {dimension_semantics = [#tpu.dimension_semantics<parallel>, #tpu.dimension_semantics<parallel>], iteration_bounds = array<i64: 2, 1>, scalar_prefetch = 0 : i64, scratch_operands = 0 : i64, tpu.core_type = #tpu.core_type<tc>, window_params = [{transform_indices = @transform_0, window_bounds = array<i64: 1, 64, 128>}, {pipeline_mode = #tpu.pipeline_mode<synchronous>, transform_indices = @transform_1, window_bounds = array<i64: 1, 128>}, {pipeline_mode = #tpu.pipeline_mode<synchronous>, transform_indices = @transform_2, window_bounds = array<i64: 1, 128>}, {pipeline_mode = #tpu.pipeline_mode<synchronous>, transform_indices = @transform_3, window_bounds = array<i64: 128, 384>}, {pipeline_mode = #tpu.pipeline_mode<synchronous>, transform_indices = @transform_4, window_bounds = array<i64: 1, 384>}, {transform_indices = @transform_5, window_bounds = array<i64: 1, 64, 128>}, {transform_indices = @transform_6, window_bounds = array<i64: 1, 64, 128>}, {transform_indices = @transform_7, window_bounds = array<i64: 1, 64, 128>}, {transform_indices = @transform_8, window_bounds = array<i64: 1, 1, 1, 128>}]} {
    %c0 = arith.constant 0 : index
    %c0_0 = arith.constant 0 : index
    %c0_1 = arith.constant 0 : index
    %0 = vector.load %arg2[%c0, %c0_0, %c0_1] : memref<1x64x128xf32, #tpu.memory_space<vmem>>, vector<1x64x128xf32>
    %1 = vector.shape_cast %0 : vector<1x64x128xf32> to vector<64x128xf32>
    %cst = arith.constant dense<0.000000e+00> : vector<64xf32>
    %2 = vector.multi_reduction <add>, %1, %cst [1] : vector<64x128xf32> to vector<64xf32>
    %3 = vector.shape_cast %2 : vector<64xf32> to vector<64x1xf32>
    %cst_2 = arith.constant 1.280000e+02 : f32
    %4 = vector.broadcast %cst_2 : f32 to vector<64x1xf32>
    %5 = arith.divf %3, %4 : vector<64x1xf32>
    %6 = vector.broadcast %5 : vector<64x1xf32> to vector<64x128xf32>
    %7 = arith.subf %1, %6 : vector<64x128xf32>
    %8 = arith.mulf %7, %7 : vector<64x128xf32>
    %cst_3 = arith.constant dense<0.000000e+00> : vector<64xf32>
    %9 = vector.multi_reduction <add>, %8, %cst_3 [1] : vector<64x128xf32> to vector<64xf32>
    %10 = vector.shape_cast %9 : vector<64xf32> to vector<64x1xf32>
    %cst_4 = arith.constant 1.280000e+02 : f32
    %11 = vector.broadcast %cst_4 : f32 to vector<64x1xf32>
    %12 = arith.divf %10, %11 : vector<64x1xf32>
    %cst_5 = arith.constant 9.99999974E-6 : f32
    %13 = vector.broadcast %cst_5 : f32 to vector<64x1xf32>
    %14 = arith.addf %12, %13 : vector<64x1xf32>
    %15 = math.rsqrt %14 : vector<64x1xf32>
    %16 = vector.broadcast %15 : vector<64x1xf32> to vector<64x128xf32>
    %17 = arith.mulf %7, %16 : vector<64x128xf32>
    %c0_6 = arith.constant 0 : index
    %c0_7 = arith.constant 0 : index
    %18 = vector.load %arg3[%c0_6, %c0_7] : memref<1x128xf32, #tpu.memory_space<vmem>>, vector<1x128xf32>
    %19 = vector.broadcast %18 : vector<1x128xf32> to vector<64x128xf32>
    %20 = arith.mulf %17, %19 : vector<64x128xf32>
    %c0_8 = arith.constant 0 : index
    %c0_9 = arith.constant 0 : index
    %21 = vector.load %arg4[%c0_8, %c0_9] : memref<1x128xf32, #tpu.memory_space<vmem>>, vector<1x128xf32>
    %22 = vector.broadcast %21 : vector<1x128xf32> to vector<64x128xf32>
    %23 = arith.addf %20, %22 : vector<64x128xf32>
    %24 = arith.truncf %23 : vector<64x128xf32> to vector<64x128xbf16>
    %c0_10 = arith.constant 0 : index
    %c0_11 = arith.constant 0 : index
    %25 = vector.load %arg5[%c0_10, %c0_11] : memref<128x384xbf16, #tpu.memory_space<vmem>>, vector<128x384xbf16>
    %cst_12 = arith.constant dense<0.000000e+00> : vector<64x384xf32>
    %26 = tpu.matmul %24, %25, %cst_12 {dimension_numbers = #tpu.dot_dimension_numbers<[1], [0], [0], [1], [0, 0, 1, 1], [], []>} : vector<64x128xbf16>, vector<128x384xbf16>, vector<64x384xf32> -> vector<64x384xf32>
    %c0_13 = arith.constant 0 : index
    %c0_14 = arith.constant 0 : index
    %27 = vector.load %arg6[%c0_13, %c0_14] : memref<1x384xf32, #tpu.memory_space<vmem>>, vector<1x384xf32>
    %28 = vector.broadcast %27 : vector<1x384xf32> to vector<64x384xf32>
    %29 = arith.addf %26, %28 : vector<64x384xf32>
    %30 = vector.extract_strided_slice %29 {offsets = [0, 0], sizes = [64, 128], strides = [1, 1]} : vector<64x384xf32> to vector<64x128xf32>
    %31 = arith.truncf %30 : vector<64x128xf32> to vector<64x128xbf16>
    %c0_15 = arith.constant 0 : index
    %c0_16 = arith.constant 0 : index
    %c0_17 = arith.constant 0 : index
    %32 = vector.load %arg7[%c0_15, %c0_16, %c0_17] : memref<1x64x128xbf16, #tpu.memory_space<vmem>>, vector<1x64x128xbf16>
    %33 = vector.shape_cast %32 : vector<1x64x128xbf16> to vector<64x128xbf16>
    %34 = vector.shape_cast %31 : vector<64x128xbf16> to vector<1x64x128xbf16>
    tpu.vector_store %arg7[%c0_15, %c0_16, %c0_17], %34 {strides = array<i32>} : memref<1x64x128xbf16, #tpu.memory_space<vmem>>, vector<1x64x128xbf16>,
    %35 = vector.extract_strided_slice %29 {offsets = [0, 128], sizes = [64, 128], strides = [1, 1]} : vector<64x384xf32> to vector<64x128xf32>
    %36 = arith.truncf %35 : vector<64x128xf32> to vector<64x128xbf16>
    %c0_18 = arith.constant 0 : index
    %c0_19 = arith.constant 0 : index
    %c0_20 = arith.constant 0 : index
    %37 = vector.load %arg8[%c0_18, %c0_19, %c0_20] : memref<1x64x128xbf16, #tpu.memory_space<vmem>>, vector<1x64x128xbf16>
    %38 = vector.shape_cast %37 : vector<1x64x128xbf16> to vector<64x128xbf16>
    %39 = vector.shape_cast %36 : vector<64x128xbf16> to vector<1x64x128xbf16>
    tpu.vector_store %arg8[%c0_18, %c0_19, %c0_20], %39 {strides = array<i32>} : memref<1x64x128xbf16, #tpu.memory_space<vmem>>, vector<1x64x128xbf16>,
    %40 = vector.extract_strided_slice %29 {offsets = [0, 256], sizes = [64, 128], strides = [1, 1]} : vector<64x384xf32> to vector<64x128xf32>
    %41 = arith.truncf %40 : vector<64x128xf32> to vector<64x128xbf16>
    %c0_21 = arith.constant 0 : index
    %c0_22 = arith.constant 0 : index
    %c0_23 = arith.constant 0 : index
    %42 = vector.load %arg9[%c0_21, %c0_22, %c0_23] : memref<1x64x128xbf16, #tpu.memory_space<vmem>>, vector<1x64x128xbf16>
    %43 = vector.shape_cast %42 : vector<1x64x128xbf16> to vector<64x128xbf16>
    %44 = vector.shape_cast %41 : vector<64x128xbf16> to vector<1x64x128xbf16>
    tpu.vector_store %arg9[%c0_21, %c0_22, %c0_23], %44 {strides = array<i32>} : memref<1x64x128xbf16, #tpu.memory_space<vmem>>, vector<1x64x128xbf16>,
    %cst_24 = arith.constant dense<0.000000e+00> : vector<128xf32>
    %45 = vector.multi_reduction <add>, %23, %cst_24 [0] : vector<64x128xf32> to vector<128xf32>
    %46 = vector.shape_cast %45 : vector<128xf32> to vector<1x128xf32>
    %c0_25 = arith.constant 0 : index
    %c0_26 = arith.constant 0 : index
    %c0_27 = arith.constant 0 : index
    %c0_28 = arith.constant 0 : index
    %47 = vector.load %arg10[%c0_25, %c0_26, %c0_27, %c0_28] : memref<1x1x1x128xf32, #tpu.memory_space<vmem>>, vector<1x1x1x128xf32>
    %48 = vector.shape_cast %47 : vector<1x1x1x128xf32> to vector<1x128xf32>
    %49 = vector.shape_cast %46 : vector<1x128xf32> to vector<1x1x1x128xf32>
    tpu.vector_store %arg10[%c0_25, %c0_26, %c0_27, %c0_28], %49 {strides = array<i32>} : memref<1x1x1x128xf32, #tpu.memory_space<vmem>>, vector<1x1x1x128xf32>,
    return
  }
  func.func @transform_0(%arg0: i32, %arg1: i32) -> (i32, i32, i32) {
    %c0_i32 = arith.constant 0 : i32
    %c0_i32_0 = arith.constant 0 : i32
    return %arg0, %arg1, %c0_i32 : i32, i32, i32
  }
  func.func @transform_1(%arg0: i32, %arg1: i32) -> (i32, i32) {
    %c0_i32 = arith.constant 0 : i32
    %c0_i32_0 = arith.constant 0 : i32
    %c0_i32_1 = arith.constant 0 : i32
    return %c0_i32, %c0_i32_0 : i32, i32
  }
  func.func @transform_2(%arg0: i32, %arg1: i32) -> (i32, i32) {
    %c0_i32 = arith.constant 0 : i32
    %c0_i32_0 = arith.constant 0 : i32
    %c0_i32_1 = arith.constant 0 : i32
    return %c0_i32, %c0_i32_0 : i32, i32
  }
  func.func @transform_3(%arg0: i32, %arg1: i32) -> (i32, i32) {
    %c0_i32 = arith.constant 0 : i32
    %c0_i32_0 = arith.constant 0 : i32
    %c0_i32_1 = arith.constant 0 : i32
    return %c0_i32, %c0_i32_0 : i32, i32
  }
  func.func @transform_4(%arg0: i32, %arg1: i32) -> (i32, i32) {
    %c0_i32 = arith.constant 0 : i32
    %c0_i32_0 = arith.constant 0 : i32
    %c0_i32_1 = arith.constant 0 : i32
    return %c0_i32, %c0_i32_0 : i32, i32
  }
  func.func @transform_5(%arg0: i32, %arg1: i32) -> (i32, i32, i32) {
    %c0_i32 = arith.constant 0 : i32
    %c0_i32_0 = arith.constant 0 : i32
    return %arg0, %arg1, %c0_i32 : i32, i32, i32
  }
  func.func @transform_6(%arg0: i32, %arg1: i32) -> (i32, i32, i32) {
    %c0_i32 = arith.constant 0 : i32
    %c0_i32_0 = arith.constant 0 : i32
    return %arg0, %arg1, %c0_i32 : i32, i32, i32
  }
  func.func @transform_7(%arg0: i32, %arg1: i32) -> (i32, i32, i32) {
    %c0_i32 = arith.constant 0 : i32
    %c0_i32_0 = arith.constant 0 : i32
    return %arg0, %arg1, %c0_i32 : i32, i32, i32
  }
  func.func @transform_8(%arg0: i32, %arg1: i32) -> (i32, i32, i32, i32) {
    %c0_i32 = arith.constant 0 : i32
    %c0_i32_0 = arith.constant 0 : i32
    %c0_i32_1 = arith.constant 0 : i32
    return %arg0, %arg1, %c0_i32, %c0_i32_0 : i32, i32, i32, i32
  }
}

module attributes {stable_mosaic.version = 11 : i64} {
  func.func @fused_attn_mlp_kernel(%arg0: i32, %arg1: i32, %arg2: memref<1x3x128xf32, #tpu.memory_space<vmem>>, %arg3: memref<1x64x128xbf16, #tpu.memory_space<vmem>>, %arg4: memref<1x64x128xbf16, #tpu.memory_space<vmem>>, %arg5: memref<1x64x128xbf16, #tpu.memory_space<vmem>>, %arg6: memref<1x64x128xf32, #tpu.memory_space<vmem>>, %arg7: memref<1x128xf32, #tpu.memory_space<vmem>>, %arg8: memref<1x128xf32, #tpu.memory_space<vmem>>, %arg9: memref<128x512xbf16, #tpu.memory_space<vmem>>, %arg10: memref<1x512xf32, #tpu.memory_space<vmem>>, %arg11: memref<512x128xbf16, #tpu.memory_space<vmem>>, %arg12: memref<1x128xf32, #tpu.memory_space<vmem>>, %arg13: memref<1x64x128xf32, #tpu.memory_space<vmem>>) attributes {dimension_semantics = [#tpu.dimension_semantics<parallel>, #tpu.dimension_semantics<parallel>], iteration_bounds = array<i64: 2, 1>, scalar_prefetch = 0 : i64, scratch_operands = 0 : i64, tpu.core_type = #tpu.core_type<tc>, window_params = [{transform_indices = @transform_0, window_bounds = array<i64: 1, 3, 128>}, {transform_indices = @transform_1, window_bounds = array<i64: 1, 64, 128>}, {transform_indices = @transform_2, window_bounds = array<i64: 1, 64, 128>}, {transform_indices = @transform_3, window_bounds = array<i64: 1, 64, 128>}, {transform_indices = @transform_4, window_bounds = array<i64: 1, 64, 128>}, {pipeline_mode = #tpu.pipeline_mode<synchronous>, transform_indices = @transform_5, window_bounds = array<i64: 1, 128>}, {pipeline_mode = #tpu.pipeline_mode<synchronous>, transform_indices = @transform_6, window_bounds = array<i64: 1, 128>}, {pipeline_mode = #tpu.pipeline_mode<synchronous>, transform_indices = @transform_7, window_bounds = array<i64: 128, 512>}, {pipeline_mode = #tpu.pipeline_mode<synchronous>, transform_indices = @transform_8, window_bounds = array<i64: 1, 512>}, {pipeline_mode = #tpu.pipeline_mode<synchronous>, transform_indices = @transform_9, window_bounds = array<i64: 512, 128>}, {pipeline_mode = #tpu.pipeline_mode<synchronous>, transform_indices = @transform_10, window_bounds = array<i64: 1, 128>}, {transform_indices = @transform_11, window_bounds = array<i64: 1, 64, 128>}]} {
    %c0 = arith.constant 0 : index
    %c0_0 = arith.constant 0 : index
    %c0_1 = arith.constant 0 : index
    %0 = vector.load %arg2[%c0, %c0_0, %c0_1] : memref<1x3x128xf32, #tpu.memory_space<vmem>>, vector<1x3x128xf32>
    %1 = vector.shape_cast %0 : vector<1x3x128xf32> to vector<3x128xf32>
    %2 = vector.extract_strided_slice %1 {offsets = [0, 0], sizes = [1, 128], strides = [1, 1]} : vector<3x128xf32> to vector<1x128xf32>
    %c0_2 = arith.constant 0 : index
    %c0_3 = arith.constant 0 : index
    %c0_4 = arith.constant 0 : index
    %3 = vector.load %arg3[%c0_2, %c0_3, %c0_4] : memref<1x64x128xbf16, #tpu.memory_space<vmem>>, vector<1x64x128xbf16>
    %4 = vector.shape_cast %3 : vector<1x64x128xbf16> to vector<64x128xbf16>
    %5 = arith.extf %4 : vector<64x128xbf16> to vector<64x128xf32>
    %6 = vector.broadcast %2 : vector<1x128xf32> to vector<64x128xf32>
    %7 = arith.mulf %6, %5 : vector<64x128xf32>
    %8 = vector.extract_strided_slice %1 {offsets = [1, 0], sizes = [1, 128], strides = [1, 1]} : vector<3x128xf32> to vector<1x128xf32>
    %c0_5 = arith.constant 0 : index
    %c0_6 = arith.constant 0 : index
    %c0_7 = arith.constant 0 : index
    %9 = vector.load %arg4[%c0_5, %c0_6, %c0_7] : memref<1x64x128xbf16, #tpu.memory_space<vmem>>, vector<1x64x128xbf16>
    %10 = vector.shape_cast %9 : vector<1x64x128xbf16> to vector<64x128xbf16>
    %11 = arith.extf %10 : vector<64x128xbf16> to vector<64x128xf32>
    %12 = vector.broadcast %8 : vector<1x128xf32> to vector<64x128xf32>
    %13 = arith.mulf %12, %11 : vector<64x128xf32>
    %14 = arith.addf %7, %13 : vector<64x128xf32>
    %15 = vector.extract_strided_slice %1 {offsets = [2, 0], sizes = [1, 128], strides = [1, 1]} : vector<3x128xf32> to vector<1x128xf32>
    %c0_8 = arith.constant 0 : index
    %c0_9 = arith.constant 0 : index
    %c0_10 = arith.constant 0 : index
    %16 = vector.load %arg5[%c0_8, %c0_9, %c0_10] : memref<1x64x128xbf16, #tpu.memory_space<vmem>>, vector<1x64x128xbf16>
    %17 = vector.shape_cast %16 : vector<1x64x128xbf16> to vector<64x128xbf16>
    %18 = arith.extf %17 : vector<64x128xbf16> to vector<64x128xf32>
    %19 = vector.broadcast %15 : vector<1x128xf32> to vector<64x128xf32>
    %20 = arith.mulf %19, %18 : vector<64x128xf32>
    %21 = arith.addf %14, %20 : vector<64x128xf32>
    %c0_11 = arith.constant 0 : index
    %c0_12 = arith.constant 0 : index
    %c0_13 = arith.constant 0 : index
    %22 = vector.load %arg6[%c0_11, %c0_12, %c0_13] : memref<1x64x128xf32, #tpu.memory_space<vmem>>, vector<1x64x128xf32>
    %23 = vector.shape_cast %22 : vector<1x64x128xf32> to vector<64x128xf32>
    %24 = arith.addf %21, %23 : vector<64x128xf32>
    %cst = arith.constant dense<0.000000e+00> : vector<64xf32>
    %25 = vector.multi_reduction <add>, %24, %cst [1] : vector<64x128xf32> to vector<64xf32>
    %26 = vector.shape_cast %25 : vector<64xf32> to vector<64x1xf32>
    %cst_14 = arith.constant 1.280000e+02 : f32
    %27 = vector.broadcast %cst_14 : f32 to vector<64x1xf32>
    %28 = arith.divf %26, %27 : vector<64x1xf32>
    %29 = vector.broadcast %28 : vector<64x1xf32> to vector<64x128xf32>
    %30 = arith.subf %24, %29 : vector<64x128xf32>
    %31 = arith.mulf %30, %30 : vector<64x128xf32>
    %cst_15 = arith.constant dense<0.000000e+00> : vector<64xf32>
    %32 = vector.multi_reduction <add>, %31, %cst_15 [1] : vector<64x128xf32> to vector<64xf32>
    %33 = vector.shape_cast %32 : vector<64xf32> to vector<64x1xf32>
    %cst_16 = arith.constant 1.280000e+02 : f32
    %34 = vector.broadcast %cst_16 : f32 to vector<64x1xf32>
    %35 = arith.divf %33, %34 : vector<64x1xf32>
    %cst_17 = arith.constant 9.99999974E-6 : f32
    %36 = vector.broadcast %cst_17 : f32 to vector<64x1xf32>
    %37 = arith.addf %35, %36 : vector<64x1xf32>
    %38 = math.rsqrt %37 : vector<64x1xf32>
    %39 = vector.broadcast %38 : vector<64x1xf32> to vector<64x128xf32>
    %40 = arith.mulf %30, %39 : vector<64x128xf32>
    %c0_18 = arith.constant 0 : index
    %c0_19 = arith.constant 0 : index
    %41 = vector.load %arg7[%c0_18, %c0_19] : memref<1x128xf32, #tpu.memory_space<vmem>>, vector<1x128xf32>
    %42 = vector.broadcast %41 : vector<1x128xf32> to vector<64x128xf32>
    %43 = arith.mulf %40, %42 : vector<64x128xf32>
    %c0_20 = arith.constant 0 : index
    %c0_21 = arith.constant 0 : index
    %44 = vector.load %arg8[%c0_20, %c0_21] : memref<1x128xf32, #tpu.memory_space<vmem>>, vector<1x128xf32>
    %45 = vector.broadcast %44 : vector<1x128xf32> to vector<64x128xf32>
    %46 = arith.addf %43, %45 : vector<64x128xf32>
    %47 = arith.truncf %46 : vector<64x128xf32> to vector<64x128xbf16>
    %c0_22 = arith.constant 0 : index
    %c0_23 = arith.constant 0 : index
    %48 = vector.load %arg9[%c0_22, %c0_23] : memref<128x512xbf16, #tpu.memory_space<vmem>>, vector<128x512xbf16>
    %cst_24 = arith.constant dense<0.000000e+00> : vector<64x512xf32>
    %49 = tpu.matmul %47, %48, %cst_24 {dimension_numbers = #tpu.dot_dimension_numbers<[1], [0], [0], [1], [0, 0, 1, 1], [], []>} : vector<64x128xbf16>, vector<128x512xbf16>, vector<64x512xf32> -> vector<64x512xf32>
    %c0_25 = arith.constant 0 : index
    %c0_26 = arith.constant 0 : index
    %50 = vector.load %arg10[%c0_25, %c0_26] : memref<1x512xf32, #tpu.memory_space<vmem>>, vector<1x512xf32>
    %51 = vector.broadcast %50 : vector<1x512xf32> to vector<64x512xf32>
    %52 = arith.addf %49, %51 : vector<64x512xf32>
    %cst_27 = arith.constant 5.000000e-01 : f32
    %53 = vector.broadcast %cst_27 : f32 to vector<64x512xf32>
    %54 = arith.mulf %53, %52 : vector<64x512xf32>
    %cst_28 = arith.constant 0.707106769 : f32
    %55 = vector.broadcast %cst_28 : f32 to vector<64x512xf32>
    %56 = arith.mulf %52, %55 : vector<64x512xf32>
    %57 = math.erf %56 : vector<64x512xf32>
    %cst_29 = arith.constant 1.000000e+00 : f32
    %58 = vector.broadcast %cst_29 : f32 to vector<64x512xf32>
    %59 = arith.addf %58, %57 : vector<64x512xf32>
    %60 = arith.mulf %54, %59 : vector<64x512xf32>
    %61 = arith.truncf %60 : vector<64x512xf32> to vector<64x512xbf16>
    %c0_30 = arith.constant 0 : index
    %c0_31 = arith.constant 0 : index
    %62 = vector.load %arg11[%c0_30, %c0_31] : memref<512x128xbf16, #tpu.memory_space<vmem>>, vector<512x128xbf16>
    %cst_32 = arith.constant dense<0.000000e+00> : vector<64x128xf32>
    %63 = tpu.matmul %61, %62, %cst_32 {dimension_numbers = #tpu.dot_dimension_numbers<[1], [0], [0], [1], [0, 0, 1, 1], [], []>} : vector<64x512xbf16>, vector<512x128xbf16>, vector<64x128xf32> -> vector<64x128xf32>
    %c0_33 = arith.constant 0 : index
    %c0_34 = arith.constant 0 : index
    %64 = vector.load %arg12[%c0_33, %c0_34] : memref<1x128xf32, #tpu.memory_space<vmem>>, vector<1x128xf32>
    %65 = vector.broadcast %64 : vector<1x128xf32> to vector<64x128xf32>
    %66 = arith.addf %63, %65 : vector<64x128xf32>
    %67 = arith.addf %66, %24 : vector<64x128xf32>
    %c0_35 = arith.constant 0 : index
    %c0_36 = arith.constant 0 : index
    %c0_37 = arith.constant 0 : index
    %68 = vector.load %arg13[%c0_35, %c0_36, %c0_37] : memref<1x64x128xf32, #tpu.memory_space<vmem>>, vector<1x64x128xf32>
    %69 = vector.shape_cast %68 : vector<1x64x128xf32> to vector<64x128xf32>
    %70 = vector.shape_cast %67 : vector<64x128xf32> to vector<1x64x128xf32>
    tpu.vector_store %arg13[%c0_35, %c0_36, %c0_37], %70 {strides = array<i32>} : memref<1x64x128xf32, #tpu.memory_space<vmem>>, vector<1x64x128xf32>,
    return
  }
  func.func @transform_0(%arg0: i32, %arg1: i32) -> (i32, i32, i32) {
    %c0_i32 = arith.constant 0 : i32
    %c0_i32_0 = arith.constant 0 : i32
    %c0_i32_1 = arith.constant 0 : i32
    return %arg0, %c0_i32, %c0_i32_0 : i32, i32, i32
  }
  func.func @transform_1(%arg0: i32, %arg1: i32) -> (i32, i32, i32) {
    %c0_i32 = arith.constant 0 : i32
    %c0_i32_0 = arith.constant 0 : i32
    return %arg0, %arg1, %c0_i32 : i32, i32, i32
  }
  func.func @transform_2(%arg0: i32, %arg1: i32) -> (i32, i32, i32) {
    %c0_i32 = arith.constant 0 : i32
    %c0_i32_0 = arith.constant 0 : i32
    return %arg0, %arg1, %c0_i32 : i32, i32, i32
  }
  func.func @transform_3(%arg0: i32, %arg1: i32) -> (i32, i32, i32) {
    %c0_i32 = arith.constant 0 : i32
    %c0_i32_0 = arith.constant 0 : i32
    return %arg0, %arg1, %c0_i32 : i32, i32, i32
  }
  func.func @transform_4(%arg0: i32, %arg1: i32) -> (i32, i32, i32) {
    %c0_i32 = arith.constant 0 : i32
    %c0_i32_0 = arith.constant 0 : i32
    return %arg0, %arg1, %c0_i32 : i32, i32, i32
  }
  func.func @transform_5(%arg0: i32, %arg1: i32) -> (i32, i32) {
    %c0_i32 = arith.constant 0 : i32
    %c0_i32_0 = arith.constant 0 : i32
    %c0_i32_1 = arith.constant 0 : i32
    return %c0_i32, %c0_i32_0 : i32, i32
  }
  func.func @transform_6(%arg0: i32, %arg1: i32) -> (i32, i32) {
    %c0_i32 = arith.constant 0 : i32
    %c0_i32_0 = arith.constant 0 : i32
    %c0_i32_1 = arith.constant 0 : i32
    return %c0_i32, %c0_i32_0 : i32, i32
  }
  func.func @transform_7(%arg0: i32, %arg1: i32) -> (i32, i32) {
    %c0_i32 = arith.constant 0 : i32
    %c0_i32_0 = arith.constant 0 : i32
    %c0_i32_1 = arith.constant 0 : i32
    return %c0_i32, %c0_i32_0 : i32, i32
  }
  func.func @transform_8(%arg0: i32, %arg1: i32) -> (i32, i32) {
    %c0_i32 = arith.constant 0 : i32
    %c0_i32_0 = arith.constant 0 : i32
    %c0_i32_1 = arith.constant 0 : i32
    return %c0_i32, %c0_i32_0 : i32, i32
  }
  func.func @transform_9(%arg0: i32, %arg1: i32) -> (i32, i32) {
    %c0_i32 = arith.constant 0 : i32
    %c0_i32_0 = arith.constant 0 : i32
    %c0_i32_1 = arith.constant 0 : i32
    return %c0_i32, %c0_i32_0 : i32, i32
  }
  func.func @transform_10(%arg0: i32, %arg1: i32) -> (i32, i32) {
    %c0_i32 = arith.constant 0 : i32
    %c0_i32_0 = arith.constant 0 : i32
    %c0_i32_1 = arith.constant 0 : i32
    return %c0_i32, %c0_i32_0 : i32, i32
  }
  func.func @transform_11(%arg0: i32, %arg1: i32) -> (i32, i32, i32) {
    %c0_i32 = arith.constant 0 : i32
    %c0_i32_0 = arith.constant 0 : i32
    return %arg0, %arg1, %c0_i32 : i32, i32, i32
  }
}

module attributes {stable_mosaic.version = 11 : i64} {
  func.func @ln_proj_kernel(%arg0: i32, %arg1: i32, %arg2: memref<1x64x128xf32, #tpu.memory_space<vmem>>, %arg3: memref<1x128xf32, #tpu.memory_space<vmem>>, %arg4: memref<1x128xf32, #tpu.memory_space<vmem>>, %arg5: memref<128x384xbf16, #tpu.memory_space<vmem>>, %arg6: memref<1x384xf32, #tpu.memory_space<vmem>>, %arg7: memref<1x64x128xbf16, #tpu.memory_space<vmem>>, %arg8: memref<1x64x128xbf16, #tpu.memory_space<vmem>>, %arg9: memref<1x64x128xbf16, #tpu.memory_space<vmem>>, %arg10: memref<1x1x1x128xf32, #tpu.memory_space<vmem>>) attributes {dimension_semantics = [#tpu.dimension_semantics<parallel>, #tpu.dimension_semantics<parallel>], iteration_bounds = array<i64: 2, 1>, scalar_prefetch = 0 : i64, scratch_operands = 0 : i64, tpu.core_type = #tpu.core_type<tc>, window_params = [{transform_indices = @transform_0, window_bounds = array<i64: 1, 64, 128>}, {pipeline_mode = #tpu.pipeline_mode<synchronous>, transform_indices = @transform_1, window_bounds = array<i64: 1, 128>}, {pipeline_mode = #tpu.pipeline_mode<synchronous>, transform_indices = @transform_2, window_bounds = array<i64: 1, 128>}, {pipeline_mode = #tpu.pipeline_mode<synchronous>, transform_indices = @transform_3, window_bounds = array<i64: 128, 384>}, {pipeline_mode = #tpu.pipeline_mode<synchronous>, transform_indices = @transform_4, window_bounds = array<i64: 1, 384>}, {transform_indices = @transform_5, window_bounds = array<i64: 1, 64, 128>}, {transform_indices = @transform_6, window_bounds = array<i64: 1, 64, 128>}, {transform_indices = @transform_7, window_bounds = array<i64: 1, 64, 128>}, {transform_indices = @transform_8, window_bounds = array<i64: 1, 1, 1, 128>}]} {
    %c0 = arith.constant 0 : index
    %c0_0 = arith.constant 0 : index
    %c0_1 = arith.constant 0 : index
    %0 = vector.load %arg2[%c0, %c0_0, %c0_1] : memref<1x64x128xf32, #tpu.memory_space<vmem>>, vector<1x64x128xf32>
    %1 = vector.shape_cast %0 : vector<1x64x128xf32> to vector<64x128xf32>
    %cst = arith.constant dense<0.000000e+00> : vector<64xf32>
    %2 = vector.multi_reduction <add>, %1, %cst [1] : vector<64x128xf32> to vector<64xf32>
    %3 = vector.shape_cast %2 : vector<64xf32> to vector<64x1xf32>
    %cst_2 = arith.constant 1.280000e+02 : f32
    %4 = vector.broadcast %cst_2 : f32 to vector<64x1xf32>
    %5 = arith.divf %3, %4 : vector<64x1xf32>
    %6 = vector.broadcast %5 : vector<64x1xf32> to vector<64x128xf32>
    %7 = arith.subf %1, %6 : vector<64x128xf32>
    %8 = arith.mulf %7, %7 : vector<64x128xf32>
    %cst_3 = arith.constant dense<0.000000e+00> : vector<64xf32>
    %9 = vector.multi_reduction <add>, %8, %cst_3 [1] : vector<64x128xf32> to vector<64xf32>
    %10 = vector.shape_cast %9 : vector<64xf32> to vector<64x1xf32>
    %cst_4 = arith.constant 1.280000e+02 : f32
    %11 = vector.broadcast %cst_4 : f32 to vector<64x1xf32>
    %12 = arith.divf %10, %11 : vector<64x1xf32>
    %cst_5 = arith.constant 9.99999974E-6 : f32
    %13 = vector.broadcast %cst_5 : f32 to vector<64x1xf32>
    %14 = arith.addf %12, %13 : vector<64x1xf32>
    %15 = math.rsqrt %14 : vector<64x1xf32>
    %16 = vector.broadcast %15 : vector<64x1xf32> to vector<64x128xf32>
    %17 = arith.mulf %7, %16 : vector<64x128xf32>
    %c0_6 = arith.constant 0 : index
    %c0_7 = arith.constant 0 : index
    %18 = vector.load %arg3[%c0_6, %c0_7] : memref<1x128xf32, #tpu.memory_space<vmem>>, vector<1x128xf32>
    %19 = vector.broadcast %18 : vector<1x128xf32> to vector<64x128xf32>
    %20 = arith.mulf %17, %19 : vector<64x128xf32>
    %c0_8 = arith.constant 0 : index
    %c0_9 = arith.constant 0 : index
    %21 = vector.load %arg4[%c0_8, %c0_9] : memref<1x128xf32, #tpu.memory_space<vmem>>, vector<1x128xf32>
    %22 = vector.broadcast %21 : vector<1x128xf32> to vector<64x128xf32>
    %23 = arith.addf %20, %22 : vector<64x128xf32>
    %24 = arith.truncf %23 : vector<64x128xf32> to vector<64x128xbf16>
    %c0_10 = arith.constant 0 : index
    %c0_11 = arith.constant 0 : index
    %25 = vector.load %arg5[%c0_10, %c0_11] : memref<128x384xbf16, #tpu.memory_space<vmem>>, vector<128x384xbf16>
    %cst_12 = arith.constant dense<0.000000e+00> : vector<64x384xf32>
    %26 = tpu.matmul %24, %25, %cst_12 {dimension_numbers = #tpu.dot_dimension_numbers<[1], [0], [0], [1], [0, 0, 1, 1], [], []>} : vector<64x128xbf16>, vector<128x384xbf16>, vector<64x384xf32> -> vector<64x384xf32>
    %c0_13 = arith.constant 0 : index
    %c0_14 = arith.constant 0 : index
    %27 = vector.load %arg6[%c0_13, %c0_14] : memref<1x384xf32, #tpu.memory_space<vmem>>, vector<1x384xf32>
    %28 = vector.broadcast %27 : vector<1x384xf32> to vector<64x384xf32>
    %29 = arith.addf %26, %28 : vector<64x384xf32>
    %30 = vector.extract_strided_slice %29 {offsets = [0, 0], sizes = [64, 128], strides = [1, 1]} : vector<64x384xf32> to vector<64x128xf32>
    %31 = arith.truncf %30 : vector<64x128xf32> to vector<64x128xbf16>
    %c0_15 = arith.constant 0 : index
    %c0_16 = arith.constant 0 : index
    %c0_17 = arith.constant 0 : index
    %32 = vector.load %arg7[%c0_15, %c0_16, %c0_17] : memref<1x64x128xbf16, #tpu.memory_space<vmem>>, vector<1x64x128xbf16>
    %33 = vector.shape_cast %32 : vector<1x64x128xbf16> to vector<64x128xbf16>
    %34 = vector.shape_cast %31 : vector<64x128xbf16> to vector<1x64x128xbf16>
    tpu.vector_store %arg7[%c0_15, %c0_16, %c0_17], %34 {strides = array<i32>} : memref<1x64x128xbf16, #tpu.memory_space<vmem>>, vector<1x64x128xbf16>,
    %35 = vector.extract_strided_slice %29 {offsets = [0, 128], sizes = [64, 128], strides = [1, 1]} : vector<64x384xf32> to vector<64x128xf32>
    %36 = arith.truncf %35 : vector<64x128xf32> to vector<64x128xbf16>
    %c0_18 = arith.constant 0 : index
    %c0_19 = arith.constant 0 : index
    %c0_20 = arith.constant 0 : index
    %37 = vector.load %arg8[%c0_18, %c0_19, %c0_20] : memref<1x64x128xbf16, #tpu.memory_space<vmem>>, vector<1x64x128xbf16>
    %38 = vector.shape_cast %37 : vector<1x64x128xbf16> to vector<64x128xbf16>
    %39 = vector.shape_cast %36 : vector<64x128xbf16> to vector<1x64x128xbf16>
    tpu.vector_store %arg8[%c0_18, %c0_19, %c0_20], %39 {strides = array<i32>} : memref<1x64x128xbf16, #tpu.memory_space<vmem>>, vector<1x64x128xbf16>,
    %40 = vector.extract_strided_slice %29 {offsets = [0, 256], sizes = [64, 128], strides = [1, 1]} : vector<64x384xf32> to vector<64x128xf32>
    %41 = arith.truncf %40 : vector<64x128xf32> to vector<64x128xbf16>
    %c0_21 = arith.constant 0 : index
    %c0_22 = arith.constant 0 : index
    %c0_23 = arith.constant 0 : index
    %42 = vector.load %arg9[%c0_21, %c0_22, %c0_23] : memref<1x64x128xbf16, #tpu.memory_space<vmem>>, vector<1x64x128xbf16>
    %43 = vector.shape_cast %42 : vector<1x64x128xbf16> to vector<64x128xbf16>
    %44 = vector.shape_cast %41 : vector<64x128xbf16> to vector<1x64x128xbf16>
    tpu.vector_store %arg9[%c0_21, %c0_22, %c0_23], %44 {strides = array<i32>} : memref<1x64x128xbf16, #tpu.memory_space<vmem>>, vector<1x64x128xbf16>,
    %cst_24 = arith.constant dense<0.000000e+00> : vector<128xf32>
    %45 = vector.multi_reduction <add>, %23, %cst_24 [0] : vector<64x128xf32> to vector<128xf32>
    %46 = vector.shape_cast %45 : vector<128xf32> to vector<1x128xf32>
    %c0_25 = arith.constant 0 : index
    %c0_26 = arith.constant 0 : index
    %c0_27 = arith.constant 0 : index
    %c0_28 = arith.constant 0 : index
    %47 = vector.load %arg10[%c0_25, %c0_26, %c0_27, %c0_28] : memref<1x1x1x128xf32, #tpu.memory_space<vmem>>, vector<1x1x1x128xf32>
    %48 = vector.shape_cast %47 : vector<1x1x1x128xf32> to vector<1x128xf32>
    %49 = vector.shape_cast %46 : vector<1x128xf32> to vector<1x1x1x128xf32>
    tpu.vector_store %arg10[%c0_25, %c0_26, %c0_27, %c0_28], %49 {strides = array<i32>} : memref<1x1x1x128xf32, #tpu.memory_space<vmem>>, vector<1x1x1x128xf32>,
    return
  }
  func.func @transform_0(%arg0: i32, %arg1: i32) -> (i32, i32, i32) {
    %c0_i32 = arith.constant 0 : i32
    %c0_i32_0 = arith.constant 0 : i32
    return %arg0, %arg1, %c0_i32 : i32, i32, i32
  }
  func.func @transform_1(%arg0: i32, %arg1: i32) -> (i32, i32) {
    %c0_i32 = arith.constant 0 : i32
    %c0_i32_0 = arith.constant 0 : i32
    %c0_i32_1 = arith.constant 0 : i32
    return %c0_i32, %c0_i32_0 : i32, i32
  }
  func.func @transform_2(%arg0: i32, %arg1: i32) -> (i32, i32) {
    %c0_i32 = arith.constant 0 : i32
    %c0_i32_0 = arith.constant 0 : i32
    %c0_i32_1 = arith.constant 0 : i32
    return %c0_i32, %c0_i32_0 : i32, i32
  }
  func.func @transform_3(%arg0: i32, %arg1: i32) -> (i32, i32) {
    %c0_i32 = arith.constant 0 : i32
    %c0_i32_0 = arith.constant 0 : i32
    %c0_i32_1 = arith.constant 0 : i32
    return %c0_i32, %c0_i32_0 : i32, i32
  }
  func.func @transform_4(%arg0: i32, %arg1: i32) -> (i32, i32) {
    %c0_i32 = arith.constant 0 : i32
    %c0_i32_0 = arith.constant 0 : i32
    %c0_i32_1 = arith.constant 0 : i32
    return %c0_i32, %c0_i32_0 : i32, i32
  }
  func.func @transform_5(%arg0: i32, %arg1: i32) -> (i32, i32, i32) {
    %c0_i32 = arith.constant 0 : i32
    %c0_i32_0 = arith.constant 0 : i32
    return %arg0, %arg1, %c0_i32 : i32, i32, i32
  }
  func.func @transform_6(%arg0: i32, %arg1: i32) -> (i32, i32, i32) {
    %c0_i32 = arith.constant 0 : i32
    %c0_i32_0 = arith.constant 0 : i32
    return %arg0, %arg1, %c0_i32 : i32, i32, i32
  }
  func.func @transform_7(%arg0: i32, %arg1: i32) -> (i32, i32, i32) {
    %c0_i32 = arith.constant 0 : i32
    %c0_i32_0 = arith.constant 0 : i32
    return %arg0, %arg1, %c0_i32 : i32, i32, i32
  }
  func.func @transform_8(%arg0: i32, %arg1: i32) -> (i32, i32, i32, i32) {
    %c0_i32 = arith.constant 0 : i32
    %c0_i32_0 = arith.constant 0 : i32
    %c0_i32_1 = arith.constant 0 : i32
    return %arg0, %arg1, %c0_i32, %c0_i32_0 : i32, i32, i32, i32
  }
}

module attributes {stable_mosaic.version = 11 : i64} {
  func.func @fused_attn_mlp_kernel(%arg0: i32, %arg1: i32, %arg2: memref<1x3x128xf32, #tpu.memory_space<vmem>>, %arg3: memref<1x64x128xbf16, #tpu.memory_space<vmem>>, %arg4: memref<1x64x128xbf16, #tpu.memory_space<vmem>>, %arg5: memref<1x64x128xbf16, #tpu.memory_space<vmem>>, %arg6: memref<1x64x128xf32, #tpu.memory_space<vmem>>, %arg7: memref<1x128xf32, #tpu.memory_space<vmem>>, %arg8: memref<1x128xf32, #tpu.memory_space<vmem>>, %arg9: memref<128x512xbf16, #tpu.memory_space<vmem>>, %arg10: memref<1x512xf32, #tpu.memory_space<vmem>>, %arg11: memref<512x128xbf16, #tpu.memory_space<vmem>>, %arg12: memref<1x128xf32, #tpu.memory_space<vmem>>, %arg13: memref<1x64x128xf32, #tpu.memory_space<vmem>>) attributes {dimension_semantics = [#tpu.dimension_semantics<parallel>, #tpu.dimension_semantics<parallel>], iteration_bounds = array<i64: 2, 1>, scalar_prefetch = 0 : i64, scratch_operands = 0 : i64, tpu.core_type = #tpu.core_type<tc>, window_params = [{transform_indices = @transform_0, window_bounds = array<i64: 1, 3, 128>}, {transform_indices = @transform_1, window_bounds = array<i64: 1, 64, 128>}, {transform_indices = @transform_2, window_bounds = array<i64: 1, 64, 128>}, {transform_indices = @transform_3, window_bounds = array<i64: 1, 64, 128>}, {transform_indices = @transform_4, window_bounds = array<i64: 1, 64, 128>}, {pipeline_mode = #tpu.pipeline_mode<synchronous>, transform_indices = @transform_5, window_bounds = array<i64: 1, 128>}, {pipeline_mode = #tpu.pipeline_mode<synchronous>, transform_indices = @transform_6, window_bounds = array<i64: 1, 128>}, {pipeline_mode = #tpu.pipeline_mode<synchronous>, transform_indices = @transform_7, window_bounds = array<i64: 128, 512>}, {pipeline_mode = #tpu.pipeline_mode<synchronous>, transform_indices = @transform_8, window_bounds = array<i64: 1, 512>}, {pipeline_mode = #tpu.pipeline_mode<synchronous>, transform_indices = @transform_9, window_bounds = array<i64: 512, 128>}, {pipeline_mode = #tpu.pipeline_mode<synchronous>, transform_indices = @transform_10, window_bounds = array<i64: 1, 128>}, {transform_indices = @transform_11, window_bounds = array<i64: 1, 64, 128>}]} {
    %c0 = arith.constant 0 : index
    %c0_0 = arith.constant 0 : index
    %c0_1 = arith.constant 0 : index
    %0 = vector.load %arg2[%c0, %c0_0, %c0_1] : memref<1x3x128xf32, #tpu.memory_space<vmem>>, vector<1x3x128xf32>
    %1 = vector.shape_cast %0 : vector<1x3x128xf32> to vector<3x128xf32>
    %2 = vector.extract_strided_slice %1 {offsets = [0, 0], sizes = [1, 128], strides = [1, 1]} : vector<3x128xf32> to vector<1x128xf32>
    %c0_2 = arith.constant 0 : index
    %c0_3 = arith.constant 0 : index
    %c0_4 = arith.constant 0 : index
    %3 = vector.load %arg3[%c0_2, %c0_3, %c0_4] : memref<1x64x128xbf16, #tpu.memory_space<vmem>>, vector<1x64x128xbf16>
    %4 = vector.shape_cast %3 : vector<1x64x128xbf16> to vector<64x128xbf16>
    %5 = arith.extf %4 : vector<64x128xbf16> to vector<64x128xf32>
    %6 = vector.broadcast %2 : vector<1x128xf32> to vector<64x128xf32>
    %7 = arith.mulf %6, %5 : vector<64x128xf32>
    %8 = vector.extract_strided_slice %1 {offsets = [1, 0], sizes = [1, 128], strides = [1, 1]} : vector<3x128xf32> to vector<1x128xf32>
    %c0_5 = arith.constant 0 : index
    %c0_6 = arith.constant 0 : index
    %c0_7 = arith.constant 0 : index
    %9 = vector.load %arg4[%c0_5, %c0_6, %c0_7] : memref<1x64x128xbf16, #tpu.memory_space<vmem>>, vector<1x64x128xbf16>
    %10 = vector.shape_cast %9 : vector<1x64x128xbf16> to vector<64x128xbf16>
    %11 = arith.extf %10 : vector<64x128xbf16> to vector<64x128xf32>
    %12 = vector.broadcast %8 : vector<1x128xf32> to vector<64x128xf32>
    %13 = arith.mulf %12, %11 : vector<64x128xf32>
    %14 = arith.addf %7, %13 : vector<64x128xf32>
    %15 = vector.extract_strided_slice %1 {offsets = [2, 0], sizes = [1, 128], strides = [1, 1]} : vector<3x128xf32> to vector<1x128xf32>
    %c0_8 = arith.constant 0 : index
    %c0_9 = arith.constant 0 : index
    %c0_10 = arith.constant 0 : index
    %16 = vector.load %arg5[%c0_8, %c0_9, %c0_10] : memref<1x64x128xbf16, #tpu.memory_space<vmem>>, vector<1x64x128xbf16>
    %17 = vector.shape_cast %16 : vector<1x64x128xbf16> to vector<64x128xbf16>
    %18 = arith.extf %17 : vector<64x128xbf16> to vector<64x128xf32>
    %19 = vector.broadcast %15 : vector<1x128xf32> to vector<64x128xf32>
    %20 = arith.mulf %19, %18 : vector<64x128xf32>
    %21 = arith.addf %14, %20 : vector<64x128xf32>
    %c0_11 = arith.constant 0 : index
    %c0_12 = arith.constant 0 : index
    %c0_13 = arith.constant 0 : index
    %22 = vector.load %arg6[%c0_11, %c0_12, %c0_13] : memref<1x64x128xf32, #tpu.memory_space<vmem>>, vector<1x64x128xf32>
    %23 = vector.shape_cast %22 : vector<1x64x128xf32> to vector<64x128xf32>
    %24 = arith.addf %21, %23 : vector<64x128xf32>
    %cst = arith.constant dense<0.000000e+00> : vector<64xf32>
    %25 = vector.multi_reduction <add>, %24, %cst [1] : vector<64x128xf32> to vector<64xf32>
    %26 = vector.shape_cast %25 : vector<64xf32> to vector<64x1xf32>
    %cst_14 = arith.constant 1.280000e+02 : f32
    %27 = vector.broadcast %cst_14 : f32 to vector<64x1xf32>
    %28 = arith.divf %26, %27 : vector<64x1xf32>
    %29 = vector.broadcast %28 : vector<64x1xf32> to vector<64x128xf32>
    %30 = arith.subf %24, %29 : vector<64x128xf32>
    %31 = arith.mulf %30, %30 : vector<64x128xf32>
    %cst_15 = arith.constant dense<0.000000e+00> : vector<64xf32>
    %32 = vector.multi_reduction <add>, %31, %cst_15 [1] : vector<64x128xf32> to vector<64xf32>
    %33 = vector.shape_cast %32 : vector<64xf32> to vector<64x1xf32>
    %cst_16 = arith.constant 1.280000e+02 : f32
    %34 = vector.broadcast %cst_16 : f32 to vector<64x1xf32>
    %35 = arith.divf %33, %34 : vector<64x1xf32>
    %cst_17 = arith.constant 9.99999974E-6 : f32
    %36 = vector.broadcast %cst_17 : f32 to vector<64x1xf32>
    %37 = arith.addf %35, %36 : vector<64x1xf32>
    %38 = math.rsqrt %37 : vector<64x1xf32>
    %39 = vector.broadcast %38 : vector<64x1xf32> to vector<64x128xf32>
    %40 = arith.mulf %30, %39 : vector<64x128xf32>
    %c0_18 = arith.constant 0 : index
    %c0_19 = arith.constant 0 : index
    %41 = vector.load %arg7[%c0_18, %c0_19] : memref<1x128xf32, #tpu.memory_space<vmem>>, vector<1x128xf32>
    %42 = vector.broadcast %41 : vector<1x128xf32> to vector<64x128xf32>
    %43 = arith.mulf %40, %42 : vector<64x128xf32>
    %c0_20 = arith.constant 0 : index
    %c0_21 = arith.constant 0 : index
    %44 = vector.load %arg8[%c0_20, %c0_21] : memref<1x128xf32, #tpu.memory_space<vmem>>, vector<1x128xf32>
    %45 = vector.broadcast %44 : vector<1x128xf32> to vector<64x128xf32>
    %46 = arith.addf %43, %45 : vector<64x128xf32>
    %47 = arith.truncf %46 : vector<64x128xf32> to vector<64x128xbf16>
    %c0_22 = arith.constant 0 : index
    %c0_23 = arith.constant 0 : index
    %48 = vector.load %arg9[%c0_22, %c0_23] : memref<128x512xbf16, #tpu.memory_space<vmem>>, vector<128x512xbf16>
    %cst_24 = arith.constant dense<0.000000e+00> : vector<64x512xf32>
    %49 = tpu.matmul %47, %48, %cst_24 {dimension_numbers = #tpu.dot_dimension_numbers<[1], [0], [0], [1], [0, 0, 1, 1], [], []>} : vector<64x128xbf16>, vector<128x512xbf16>, vector<64x512xf32> -> vector<64x512xf32>
    %c0_25 = arith.constant 0 : index
    %c0_26 = arith.constant 0 : index
    %50 = vector.load %arg10[%c0_25, %c0_26] : memref<1x512xf32, #tpu.memory_space<vmem>>, vector<1x512xf32>
    %51 = vector.broadcast %50 : vector<1x512xf32> to vector<64x512xf32>
    %52 = arith.addf %49, %51 : vector<64x512xf32>
    %cst_27 = arith.constant 5.000000e-01 : f32
    %53 = vector.broadcast %cst_27 : f32 to vector<64x512xf32>
    %54 = arith.mulf %53, %52 : vector<64x512xf32>
    %cst_28 = arith.constant 0.707106769 : f32
    %55 = vector.broadcast %cst_28 : f32 to vector<64x512xf32>
    %56 = arith.mulf %52, %55 : vector<64x512xf32>
    %57 = math.erf %56 : vector<64x512xf32>
    %cst_29 = arith.constant 1.000000e+00 : f32
    %58 = vector.broadcast %cst_29 : f32 to vector<64x512xf32>
    %59 = arith.addf %58, %57 : vector<64x512xf32>
    %60 = arith.mulf %54, %59 : vector<64x512xf32>
    %61 = arith.truncf %60 : vector<64x512xf32> to vector<64x512xbf16>
    %c0_30 = arith.constant 0 : index
    %c0_31 = arith.constant 0 : index
    %62 = vector.load %arg11[%c0_30, %c0_31] : memref<512x128xbf16, #tpu.memory_space<vmem>>, vector<512x128xbf16>
    %cst_32 = arith.constant dense<0.000000e+00> : vector<64x128xf32>
    %63 = tpu.matmul %61, %62, %cst_32 {dimension_numbers = #tpu.dot_dimension_numbers<[1], [0], [0], [1], [0, 0, 1, 1], [], []>} : vector<64x512xbf16>, vector<512x128xbf16>, vector<64x128xf32> -> vector<64x128xf32>
    %c0_33 = arith.constant 0 : index
    %c0_34 = arith.constant 0 : index
    %64 = vector.load %arg12[%c0_33, %c0_34] : memref<1x128xf32, #tpu.memory_space<vmem>>, vector<1x128xf32>
    %65 = vector.broadcast %64 : vector<1x128xf32> to vector<64x128xf32>
    %66 = arith.addf %63, %65 : vector<64x128xf32>
    %67 = arith.addf %66, %24 : vector<64x128xf32>
    %c0_35 = arith.constant 0 : index
    %c0_36 = arith.constant 0 : index
    %c0_37 = arith.constant 0 : index
    %68 = vector.load %arg13[%c0_35, %c0_36, %c0_37] : memref<1x64x128xf32, #tpu.memory_space<vmem>>, vector<1x64x128xf32>
    %69 = vector.shape_cast %68 : vector<1x64x128xf32> to vector<64x128xf32>
    %70 = vector.shape_cast %67 : vector<64x128xf32> to vector<1x64x128xf32>
    tpu.vector_store %arg13[%c0_35, %c0_36, %c0_37], %70 {strides = array<i32>} : memref<1x64x128xf32, #tpu.memory_space<vmem>>, vector<1x64x128xf32>,
    return
  }
  func.func @transform_0(%arg0: i32, %arg1: i32) -> (i32, i32, i32) {
    %c0_i32 = arith.constant 0 : i32
    %c0_i32_0 = arith.constant 0 : i32
    %c0_i32_1 = arith.constant 0 : i32
    return %arg0, %c0_i32, %c0_i32_0 : i32, i32, i32
  }
  func.func @transform_1(%arg0: i32, %arg1: i32) -> (i32, i32, i32) {
    %c0_i32 = arith.constant 0 : i32
    %c0_i32_0 = arith.constant 0 : i32
    return %arg0, %arg1, %c0_i32 : i32, i32, i32
  }
  func.func @transform_2(%arg0: i32, %arg1: i32) -> (i32, i32, i32) {
    %c0_i32 = arith.constant 0 : i32
    %c0_i32_0 = arith.constant 0 : i32
    return %arg0, %arg1, %c0_i32 : i32, i32, i32
  }
  func.func @transform_3(%arg0: i32, %arg1: i32) -> (i32, i32, i32) {
    %c0_i32 = arith.constant 0 : i32
    %c0_i32_0 = arith.constant 0 : i32
    return %arg0, %arg1, %c0_i32 : i32, i32, i32
  }
  func.func @transform_4(%arg0: i32, %arg1: i32) -> (i32, i32, i32) {
    %c0_i32 = arith.constant 0 : i32
    %c0_i32_0 = arith.constant 0 : i32
    return %arg0, %arg1, %c0_i32 : i32, i32, i32
  }
  func.func @transform_5(%arg0: i32, %arg1: i32) -> (i32, i32) {
    %c0_i32 = arith.constant 0 : i32
    %c0_i32_0 = arith.constant 0 : i32
    %c0_i32_1 = arith.constant 0 : i32
    return %c0_i32, %c0_i32_0 : i32, i32
  }
  func.func @transform_6(%arg0: i32, %arg1: i32) -> (i32, i32) {
    %c0_i32 = arith.constant 0 : i32
    %c0_i32_0 = arith.constant 0 : i32
    %c0_i32_1 = arith.constant 0 : i32
    return %c0_i32, %c0_i32_0 : i32, i32
  }
  func.func @transform_7(%arg0: i32, %arg1: i32) -> (i32, i32) {
    %c0_i32 = arith.constant 0 : i32
    %c0_i32_0 = arith.constant 0 : i32
    %c0_i32_1 = arith.constant 0 : i32
    return %c0_i32, %c0_i32_0 : i32, i32
  }
  func.func @transform_8(%arg0: i32, %arg1: i32) -> (i32, i32) {
    %c0_i32 = arith.constant 0 : i32
    %c0_i32_0 = arith.constant 0 : i32
    %c0_i32_1 = arith.constant 0 : i32
    return %c0_i32, %c0_i32_0 : i32, i32
  }
  func.func @transform_9(%arg0: i32, %arg1: i32) -> (i32, i32) {
    %c0_i32 = arith.constant 0 : i32
    %c0_i32_0 = arith.constant 0 : i32
    %c0_i32_1 = arith.constant 0 : i32
    return %c0_i32, %c0_i32_0 : i32, i32
  }
  func.func @transform_10(%arg0: i32, %arg1: i32) -> (i32, i32) {
    %c0_i32 = arith.constant 0 : i32
    %c0_i32_0 = arith.constant 0 : i32
    %c0_i32_1 = arith.constant 0 : i32
    return %c0_i32, %c0_i32_0 : i32, i32
  }
  func.func @transform_11(%arg0: i32, %arg1: i32) -> (i32, i32, i32) {
    %c0_i32 = arith.constant 0 : i32
    %c0_i32_0 = arith.constant 0 : i32
    return %arg0, %arg1, %c0_i32 : i32, i32, i32
  }
}

</mosaic_0001>

<llo_original>
// kernel: _lambda_.2
$region0: #{_lambda_.2}
  #allocation0 [shape = 'u32[]', space=smem, size = 0x4, offset = 0x4, fixed_abs, tag = 'smem constant byte address 0x4 - core index']
  #allocation1 [shape = 'u32[144,128]{1,0:T(1,128)}', space=vmem, size = 0x12000, scoped, tag = 'internal scratch']
  %s0 = inlined_call_operand.vmem [shape: f32[2,64,128], index: 0, kind: input, shape index: {}]
  %s1 = inlined_call_operand.vmem [shape: f32[1,128], index: 1, kind: input, shape index: {}]
  %s2 = inlined_call_operand.vmem [shape: f32[1,128], index: 2, kind: input, shape index: {}]
  %s3 = inlined_call_operand.vmem [shape: bf16[128,384], index: 3, kind: input, shape index: {}]
  %s4 = inlined_call_operand.vmem [shape: f32[1,384], index: 4, kind: input, shape index: {}]
  %s5 = inlined_call_operand.vmem [shape: bf16[2,64,128], index: 5, kind: output, shape index: {0}]
  %s6 = inlined_call_operand.vmem [shape: bf16[2,64,128], index: 6, kind: output, shape index: {1}]
  %s7 = inlined_call_operand.vmem [shape: bf16[2,64,128], index: 7, kind: output, shape index: {2}]
  %s8 = inlined_call_operand.vmem [shape: f32[2,1,1,128], index: 8, kind: output, shape index: {3}]
  %9 = xla_tuple %s5, %s6, %s7, %s8
  %s10 = sld [smem:[#allocation0]]
  $region77: #{_lambda_.2} parent=0
    _
  %s12 = ssub.s32 1, %s10
  %s13 = scalar_select 0, %s12, %s10
  loop: start=0, step=1, limit=4
  $region2: #{_lambda_.2} parent=0 // loop_pre_header
    _
  $region3: #{_lambda_.2} parent=0 // loop_header
    %s15 = sphi 0, %s19
    %p16 = scmp.ge.s32.totalorder %s15, 4
    %s22 = sphi 0, %s34
    %s23 = sphi 0, %s30
    %s24 = sphi 0, %s22
    %s25 = sphi 0, %s23
    %s26 = sphi 0, %s24
    %s27 = sphi 0, %s25
    %s39 = sphi 0, %s41
    %s42 = sphi 0, %s39
    %s43 = sphi 0, %s42
    %s59 = sphi 0, %s43
    %s63 = sphi 0, %s63
    %s65 = sphi 0, %s63
    %s66 = sphi 0, %s65
    %s80 = sphi 0, %s66
    %s84 = sphi 0, %s84
    %s86 = sphi 0, %s84
    %s87 = sphi 0, %s86
    %s101 = sphi 0, %s87
    %s105 = sphi 0, %s105
    %s107 = sphi 0, %s105
    %s108 = sphi 0, %s107
    %s122 = sphi 0, %s108
    %s126 = sphi 0, %s126
    %s128 = sphi 0, %s126
    %s129 = sphi 0, %s128
    %s143 = sphi 0, %s129
    %s151 = sphi 0, %s153
    %s154 = sphi 0, %s151
    %s155 = sphi 0, %s154
    %s171 = sphi 0, %s155
    %s179 = sphi 0, %s181
    %s182 = sphi 0, %s179
    %s183 = sphi 0, %s182
    %s199 = sphi 0, %s183
    %s207 = sphi 0, %s209
    %s210 = sphi 0, %s207
    %s211 = sphi 0, %s210
    %s227 = sphi 0, %s211
    %s235 = sphi 0, %s237
    %s238 = sphi 0, %s235
    %s239 = sphi 0, %s238
    %s255 = sphi 0, %s239
  $region4: #{_lambda_.2} parent=0 // loop_header_branch
    %18 = sbr.rel (%p16) target = $region8
  $region5: #{_lambda_.2} parent=0 // loop_body
    %s20 = ssub.s32 %s15, 1
    %s21 = ssub.s32 %s15, 2
    %s28 = sadd.s32 1, %s23
    %p29 = scmp.ge.s32.totalorder %s28, 1
    %s30 = scalar_select %p29, 0, %s28
    %s31 = sadd.s32 1, %s22
    %s32 = scalar_select %p29, %s31, %s22
    %p33 = scmp.ge.s32.totalorder %s32, 2
    %s34 = scalar_select %p33, 0, %s32
    %s35 = ssub.s32 %s22, %s34
    %s36 = ssub.s32 %s23, %s30
    %s37 = sor.u32 %s35, %s36
    %p38 = scmp.eq.s32.totalorder %s37, 0
    %s40 = sadd.s32 %s39, 1
    %s41 = scalar_select %p38, %s39, %s40
    %p44 = pneg %p38
    %p45 = scmp.eq.s32.totalorder %s15, 1
    %p46 = por %p44, %p45
    %p47 = scmp.ne.s32.totalorder %s39, %s42
    %p48 = scmp.eq.s32.totalorder %s15, 0
    %p49 = por %p47, %p48
    %p50 = scmp.ne.s32.totalorder %s39, %s42
    %p51 = scmp.eq.s32.totalorder %s20, 1
    %p52 = por %p50, %p51
    %p53 = scmp.ne.s32.totalorder %s42, %s43
    %p54 = scmp.eq.s32.totalorder %s20, 0
    %p55 = por %p53, %p54
    %p56 = scmp.ne.s32.totalorder %s42, %s43
    %p57 = scmp.eq.s32.totalorder %s21, 1
    %p58 = por %p56, %p57
    %p60 = scmp.ne.s32.totalorder %s43, %s59
    %p61 = scmp.eq.s32.totalorder %s21, 0
    %p62 = por %p60, %p61
    %s64 = sadd.s32 %s63, 1
    %p67 = scmp.eq.s32.totalorder %s15, 1
    %p68 = scmp.ne.s32.totalorder %s63, %s65
    %p69 = scmp.eq.s32.totalorder %s15, 0
    %p70 = por %p68, %p69
    %p71 = scmp.ne.s32.totalorder %s63, %s65
    %p72 = scmp.eq.s32.totalorder %s20, 1
    %p73 = por %p71, %p72
    %p74 = scmp.ne.s32.totalorder %s65, %s66
    %p75 = scmp.eq.s32.totalorder %s20, 0
    %p76 = por %p74, %p75
    %p77 = scmp.ne.s32.totalorder %s65, %s66
    %p78 = scmp.eq.s32.totalorder %s21, 1
    %p79 = por %p77, %p78
    %p81 = scmp.ne.s32.totalorder %s66, %s80
    %p82 = scmp.eq.s32.totalorder %s21, 0
    %p83 = por %p81, %p82
    %s85 = sadd.s32 %s84, 1
    %p88 = scmp.eq.s32.totalorder %s15, 1
    %p89 = scmp.ne.s32.totalorder %s84, %s86
    %p90 = scmp.eq.s32.totalorder %s15, 0
    %p91 = por %p89, %p90
    %p92 = scmp.ne.s32.totalorder %s84, %s86
    %p93 = scmp.eq.s32.totalorder %s20, 1
    %p94 = por %p92, %p93
    %p95 = scmp.ne.s32.totalorder %s86, %s87
    %p96 = scmp.eq.s32.totalorder %s20, 0
    %p97 = por %p95, %p96
    %p98 = scmp.ne.s32.totalorder %s86, %s87
    %p99 = scmp.eq.s32.totalorder %s21, 1
    %p100 = por %p98, %p99
    %p102 = scmp.ne.s32.totalorder %s87, %s101
    %p103 = scmp.eq.s32.totalorder %s21, 0
    %p104 = por %p102, %p103
    %s106 = sadd.s32 %s105, 1
    %p109 = scmp.eq.s32.totalorder %s15, 1
    %p110 = scmp.ne.s32.totalorder %s105, %s107
    %p111 = scmp.eq.s32.totalorder %s15, 0
    %p112 = por %p110, %p111
    %p113 = scmp.ne.s32.totalorder %s105, %s107
    %p114 = scmp.eq.s32.totalorder %s20, 1
    %p115 = por %p113, %p114
    %p116 = scmp.ne.s32.totalorder %s107, %s108
    %p117 = scmp.eq.s32.totalorder %s20, 0
    %p118 = por %p116, %p117
    %p119 = scmp.ne.s32.totalorder %s107, %s108
    %p120 = scmp.eq.s32.totalorder %s21, 1
    %p121 = por %p119, %p120
    %p123 = scmp.ne.s32.totalorder %s108, %s122
    %p124 = scmp.eq.s32.totalorder %s21, 0
    %p125 = por %p123, %p124
    %s127 = sadd.s32 %s126, 1
    %p130 = scmp.eq.s32.totalorder %s15, 1
    %p131 = scmp.ne.s32.totalorder %s126, %s128
    %p132 = scmp.eq.s32.totalorder %s15, 0
    %p133 = por %p131, %p132
    %p134 = scmp.ne.s32.totalorder %s126, %s128
    %p135 = scmp.eq.s32.totalorder %s20, 1
    %p136 = por %p134, %p135
    %p137 = scmp.ne.s32.totalorder %s128, %s129
    %p138 = scmp.eq.s32.totalorder %s20, 0
    %p139 = por %p137, %p138
    %p140 = scmp.ne.s32.totalorder %s128, %s129
    %p141 = scmp.eq.s32.totalorder %s21, 1
    %p142 = por %p140, %p141
    %p144 = scmp.ne.s32.totalorder %s129, %s143
    %p145 = scmp.eq.s32.totalorder %s21, 0
    %p146 = por %p144, %p145
    %s147 = ssub.s32 %s22, %s34
    %s148 = ssub.s32 %s23, %s30
    %s149 = sor.u32 %s147, %s148
    %p150 = scmp.eq.s32.totalorder %s149, 0
    %s152 = sadd.s32 %s151, 1
    %s153 = scalar_select %p150, %s151, %s152
    %p156 = pneg %p150
    %p157 = scmp.eq.s32.totalorder %s15, 1
    %p158 = por %p156, %p157
    %p159 = scmp.ne.s32.totalorder %s151, %s154
    %p160 = scmp.eq.s32.totalorder %s15, 0
    %p161 = por %p159, %p160
    %p162 = scmp.ne.s32.totalorder %s151, %s154
    %p163 = scmp.eq.s32.totalorder %s20, 1
    %p164 = por %p162, %p163
    %p165 = scmp.ne.s32.totalorder %s154, %s155
    %p166 = scmp.eq.s32.totalorder %s20, 0
    %p167 = por %p165, %p166
    %p168 = scmp.ne.s32.totalorder %s154, %s155
    %p169 = scmp.eq.s32.totalorder %s21, 1
    %p170 = por %p168, %p169
    %p172 = scmp.ne.s32.totalorder %s155, %s171
    %p173 = scmp.eq.s32.totalorder %s21, 0
    %p174 = por %p172, %p173
    %s175 = ssub.s32 %s22, %s34
    %s176 = ssub.s32 %s23, %s30
    %s177 = sor.u32 %s175, %s176
    %p178 = scmp.eq.s32.totalorder %s177, 0
    %s180 = sadd.s32 %s179, 1
    %s181 = scalar_select %p178, %s179, %s180
    %p184 = pneg %p178
    %p185 = scmp.eq.s32.totalorder %s15, 1
    %p186 = por %p184, %p185
    %p187 = scmp.ne.s32.totalorder %s179, %s182
    %p188 = scmp.eq.s32.totalorder %s15, 0
    %p189 = por %p187, %p188
    %p190 = scmp.ne.s32.totalorder %s179, %s182
    %p191 = scmp.eq.s32.totalorder %s20, 1
    %p192 = por %p190, %p191
    %p193 = scmp.ne.s32.totalorder %s182, %s183
    %p194 = scmp.eq.s32.totalorder %s20, 0
    %p195 = por %p193, %p194
    %p196 = scmp.ne.s32.totalorder %s182, %s183
    %p197 = scmp.eq.s32.totalorder %s21, 1
    %p198 = por %p196, %p197
    %p200 = scmp.ne.s32.totalorder %s183, %s199
    %p201 = scmp.eq.s32.totalorder %s21, 0
    %p202 = por %p200, %p201
    %s203 = ssub.s32 %s22, %s34
    %s204 = ssub.s32 %s23, %s30
    %s205 = sor.u32 %s203, %s204
    %p206 = scmp.eq.s32.totalorder %s205, 0
    %s208 = sadd.s32 %s207, 1
    %s209 = scalar_select %p206, %s207, %s208
    %p212 = pneg %p206
    %p213 = scmp.eq.s32.totalorder %s15, 1
    %p214 = por %p212, %p213
    %p215 = scmp.ne.s32.totalorder %s207, %s210
    %p216 = scmp.eq.s32.totalorder %s15, 0
    %p217 = por %p215, %p216
    %p218 = scmp.ne.s32.totalorder %s207, %s210
    %p219 = scmp.eq.s32.totalorder %s20, 1
    %p220 = por %p218, %p219
    %p221 = scmp.ne.s32.totalorder %s210, %s211
    %p222 = scmp.eq.s32.totalorder %s20, 0
    %p223 = por %p221, %p222
    %p224 = scmp.ne.s32.totalorder %s210, %s211
    %p225 = scmp.eq.s32.totalorder %s21, 1
    %p226 = por %p224, %p225
    %p228 = scmp.ne.s32.totalorder %s211, %s227
    %p229 = scmp.eq.s32.totalorder %s21, 0
    %p230 = por %p228, %p229
    %s231 = ssub.s32 %s22, %s34
    %s232 = ssub.s32 %s23, %s30
    %s233 = sor.u32 %s231, %s232
    %p234 = scmp.eq.s32.totalorder %s233, 0
    %s236 = sadd.s32 %s235, 1
    %s237 = scalar_select %p234, %s235, %s236
    %p240 = pneg %p234
    %p241 = scmp.eq.s32.totalorder %s15, 1
    %p242 = por %p240, %p241
    %p243 = scmp.ne.s32.totalorder %s235, %s238
    %p244 = scmp.eq.s32.totalorder %s15, 0
    %p245 = por %p243, %p244
    %p246 = scmp.ne.s32.totalorder %s235, %s238
    %p247 = scmp.eq.s32.totalorder %s20, 1
    %p248 = por %p246, %p247
    %p249 = scmp.ne.s32.totalorder %s238, %s239
    %p250 = scmp.eq.s32.totalorder %s20, 0
    %p251 = por %p249, %p250
    %p252 = scmp.ne.s32.totalorder %s238, %s239
    %p253 = scmp.eq.s32.totalorder %s21, 1
    %p254 = por %p252, %p253
    %p256 = scmp.ne.s32.totalorder %s239, %s255
    %p257 = scmp.eq.s32.totalorder %s21, 0
    %p258 = por %p256, %p257
    %p259 = scmp.le.s32.totalorder 1, %s15
    %p260 = scmp.lt.s32.totalorder %s15, 3
    %p261 = pnand %p259, %p260
    %p262 = pneg %p261
    // Predicated region
    $region9: #{_lambda_.2} parent=5 // pred_check
      _
    $region10: #{_lambda_.2} parent=5 // pred_check_branch
      %264 = sbr.rel (%p261) target = $region12
    $region11: #{_lambda_.2} parent=5 // pred_region
      %s265 = ssub.s32 %s15, 1
      // Predicated region
      $region13: #{_lambda_.2} parent=11 // pred_check
        %p266 = pneg %p76
      $region14: #{_lambda_.2} parent=11 // pred_check_branch
        %268 = sbr.rel (%p266) target = $region16
      $region15: #{_lambda_.2} parent=11 // pred_region
        _
      $region16: #{_lambda_.2} parent=11 // pred_fallthru
        _
      // Predicated region
      $region17: #{_lambda_.2} parent=11 // pred_check
        %p269 = pneg %p97
      $region18: #{_lambda_.2} parent=11 // pred_check_branch
        %271 = sbr.rel (%p269) target = $region20
      $region19: #{_lambda_.2} parent=11 // pred_region
        _
      $region20: #{_lambda_.2} parent=11 // pred_fallthru
        _
      // Predicated region
      $region21: #{_lambda_.2} parent=11 // pred_check
        %p272 = pneg %p118
      $region22: #{_lambda_.2} parent=11 // pred_check_branch
        %274 = sbr.rel (%p272) target = $region24
      $region23: #{_lambda_.2} parent=11 // pred_region
        _
      $region24: #{_lambda_.2} parent=11 // pred_fallthru
        _
      // Predicated region
      $region25: #{_lambda_.2} parent=11 // pred_check
        %p275 = pneg %p139
      $region26: #{_lambda_.2} parent=11 // pred_check_branch
        %277 = sbr.rel (%p275) target = $region28
      $region27: #{_lambda_.2} parent=11 // pred_region
        _
      $region28: #{_lambda_.2} parent=11 // pred_fallthru
        _
    $region12: #{_lambda_.2} parent=5 // pred_fallthru
      _
    %p278 = scmp.lt.s32.totalorder %s15, 2
    // Predicated region
    $region29: #{_lambda_.2} parent=5 // pred_check
      %p279 = pneg %p278
    $region30: #{_lambda_.2} parent=5 // pred_check_branch
      %281 = sbr.rel (%p279) target = $region32
    $region31: #{_lambda_.2} parent=5 // pred_region
      // Predicated region
      $region33: #{_lambda_.2} parent=31 // pred_check
        %p282 = pneg %p49
      $region34: #{_lambda_.2} parent=31 // pred_check_branch
        %284 = sbr.rel (%p282) target = $region36
      $region35: #{_lambda_.2} parent=31 // pred_region
        %s285 = smul.u32 8, %s23
        %p286 = scmp.lt.s32.totalorder %s22, 1
        %s287 = scalar_select %p286, %s22, 1
        %p288 = scmp.lt.s32.totalorder %s285, 7
        %s289 = scalar_select %p288, %s285, 7
        %s290 = smul.addr %s287, 8
        %s291 = sadd.s32 %s289, %s290
        %s292 = smul.addr %s291, 8
        %s293 = scalar_lea.vmem %s0, %s292
        %s294 = smul.u32 8, %s23
      $region36: #{_lambda_.2} parent=31 // pred_fallthru
        _
    $region32: #{_lambda_.2} parent=5 // pred_fallthru
      _
    %p295 = scmp.le.s32.totalorder 1, %s15
    %p296 = scmp.lt.s32.totalorder %s15, 3
    %p297 = pnand %p295, %p296
    %p298 = pneg %p297
    // Predicated region
    $region37: #{_lambda_.2} parent=5 // pred_check
      _
    $region38: #{_lambda_.2} parent=5 // pred_check_branch
      %300 = sbr.rel (%p297) target = $region40
    $region39: #{_lambda_.2} parent=5 // pred_region
      %s301 = ssub.s32 %s15, 1
      %s302 = smul.u32 8, %s25
      %p303 = scmp.lt.s32.totalorder %s24, 1
      %s304 = scalar_select %p303, %s24, 1
      %p305 = scmp.lt.s32.totalorder %s302, 7
      %s306 = scalar_select %p305, %s302, 7
      %s307 = smul.addr %s304, 8
      %s308 = sadd.s32 %s306, %s307
      %s309 = smul.addr %s308, 8
      %s310 = scalar_lea.vmem %s0, %s309
      %p311 = pneg %p55
      %p312 = pneg %p52
      %p313 = pneg %p76
      %p314 = pneg %p73
      %p315 = pneg %p97
      %p316 = pneg %p94
      %p317 = pneg %p118
      %p318 = pneg %p115
      %p319 = pneg %p139
      %p320 = pneg %p136
      %p321 = pneg %p167
      %p322 = pneg %p164
      %s323 = smul.u32 8, %s25
      %p324 = scmp.lt.s32.totalorder %s24, 1
      %s325 = scalar_select %p324, %s24, 1
      %p326 = scmp.lt.s32.totalorder %s323, 7
      %s327 = scalar_select %p326, %s323, 7
      %s328 = smul.addr %s325, 8
      %s329 = sadd.s32 %s327, %s328
      %s330 = smul.addr %s329, 4
      %s331 = scalar_lea.vmem %s5, %s330
      %p332 = pneg %p195
      %p333 = pneg %p192
      %s334 = smul.u32 8, %s25
      %p335 = scmp.lt.s32.totalorder %s24, 1
      %s336 = scalar_select %p335, %s24, 1
      %p337 = scmp.lt.s32.totalorder %s334, 7
      %s338 = scalar_select %p337, %s334, 7
      %s339 = smul.addr %s336, 8
      %s340 = sadd.s32 %s338, %s339
      %s341 = smul.addr %s340, 4
      %s342 = scalar_lea.vmem %s6, %s341
      %p343 = pneg %p223
      %p344 = pneg %p220
      %s345 = smul.u32 8, %s25
      %p346 = scmp.lt.s32.totalorder %s24, 1
      %s347 = scalar_select %p346, %s24, 1
      %p348 = scmp.lt.s32.totalorder %s345, 7
      %s349 = scalar_select %p348, %s345, 7
      %s350 = smul.addr %s347, 8
      %s351 = sadd.s32 %s349, %s350
      %s352 = smul.addr %s351, 4
      %s353 = scalar_lea.vmem %s7, %s352
      %p354 = pneg %p251
      %p355 = pneg %p248
      %p356 = scmp.lt.s32.totalorder %s24, 1
      %s357 = scalar_select %p356, %s24, 1
      %p358 = scmp.lt.s32.totalorder %s25, 0
      %s359 = scalar_select %p358, %s25, 0
      %s360 = sadd.s32 %s359, %s357
      %s361 = scalar_lea.vmem %s8, %s360
      %s362 = smul.u32 8, %s25
      %p363 = scmp.lt.s32.totalorder %s24, 1
      %s364 = scalar_select %p363, %s24, 1
      %p365 = scmp.lt.s32.totalorder %s362, 7
      %s366 = scalar_select %p365, %s362, 7
      %s367 = smul.addr %s364, 8
      %s368 = sadd.s32 %s366, %s367
      %s369 = smul.addr %s368, 8
      %s370 = scalar_lea.vmem %s0, %s369
      %s371 = smul.u32 8, %s25
      %s372 = smul.u32 8, %s25
      %p373 = scmp.lt.s32.totalorder %s24, 1
      %s374 = scalar_select %p373, %s24, 1
      %p375 = scmp.lt.s32.totalorder %s372, 7
      %s376 = scalar_select %p375, %s372, 7
      %s377 = smul.addr %s374, 8
      %s378 = sadd.s32 %s376, %s377
      %s379 = smul.addr %s378, 4
      %s380 = scalar_lea.vmem %s5, %s379
      %s381 = smul.u32 8, %s25
      %s382 = smul.u32 8, %s25
      %p383 = scmp.lt.s32.totalorder %s24, 1
      %s384 = scalar_select %p383, %s24, 1
      %p385 = scmp.lt.s32.totalorder %s382, 7
      %s386 = scalar_select %p385, %s382, 7
      %s387 = smul.addr %s384, 8
      %s388 = sadd.s32 %s386, %s387
      %s389 = smul.addr %s388, 4
      %s390 = scalar_lea.vmem %s6, %s389
      %s391 = smul.u32 8, %s25
      %s392 = smul.u32 8, %s25
      %p393 = scmp.lt.s32.totalorder %s24, 1
      %s394 = scalar_select %p393, %s24, 1
      %p395 = scmp.lt.s32.totalorder %s392, 7
      %s396 = scalar_select %p395, %s392, 7
      %s397 = smul.addr %s394, 8
      %s398 = sadd.s32 %s396, %s397
      %s399 = smul.addr %s398, 4
      %s400 = scalar_lea.vmem %s7, %s399
      %s401 = smul.u32 8, %s25
      %p402 = scmp.lt.s32.totalorder %s24, 1
      %s403 = scalar_select %p402, %s24, 1
      %p404 = scmp.lt.s32.totalorder %s25, 0
      %s405 = scalar_select %p404, %s25, 0
      %s406 = sadd.s32 %s405, %s403
      %s407 = scalar_lea.vmem %s8, %s406
      %v409 = vld [vmem:[%s370] sm:$0xff]
      %v410 = vld [vmem:[%s370 + $0x8] sm:$0xff]
      %v411 = vld [vmem:[%s370 + $0x10] sm:$0xff]
      %v412 = vld [vmem:[%s370 + $0x18] sm:$0xff]
      %v413 = vld [vmem:[%s370 + $0x20] sm:$0xff]
      %v414 = vld [vmem:[%s370 + $0x28] sm:$0xff]
      %v415 = vld [vmem:[%s370 + $0x30] sm:$0xff]
      %v416 = vld [vmem:[%s370 + $0x38] sm:$0xff]
      %417 = vadd.xlane.f32.xlu0 %v409
      %v418 = vpop.xlane.xlu0 %417
      %419 = vadd.xlane.f32.xlu0 %v410
      %v420 = vpop.xlane.xlu0 %419
      %421 = vadd.xlane.f32.xlu0 %v411
      %v422 = vpop.xlane.xlu0 %421
      %423 = vadd.xlane.f32.xlu0 %v412
      %v424 = vpop.xlane.xlu0 %423
      %425 = vadd.xlane.f32.xlu0 %v413
      %v426 = vpop.xlane.xlu0 %425
      %427 = vadd.xlane.f32.xlu0 %v414
      %v428 = vpop.xlane.xlu0 %427
      %429 = vadd.xlane.f32.xlu0 %v415
      %v430 = vpop.xlane.xlu0 %429
      %431 = vadd.xlane.f32.xlu0 %v416
      %v432 = vpop.xlane.xlu0 %431
      %v433 = vrcp.pop 128.0
      %v434 = vmul.f32 %v418, %v433
      %v435 = vmul.f32 %v420, %v433
      %v436 = vmul.f32 %v422, %v433
      %v437 = vmul.f32 %v424, %v433
      %v438 = vmul.f32 %v426, %v433
      %v439 = vmul.f32 %v428, %v433
      %v440 = vmul.f32 %v430, %v433
      %v441 = vmul.f32 %v432, %v433
      %v442 = vsub.f32 %v409, %v434
      %v443 = vsub.f32 %v410, %v435
      %v444 = vsub.f32 %v411, %v436
      %v445 = vsub.f32 %v412, %v437
      %v446 = vsub.f32 %v413, %v438
      %v447 = vsub.f32 %v414, %v439
      %v448 = vsub.f32 %v415, %v440
      %v449 = vsub.f32 %v416, %v441
      %v450 = vmul.f32 %v442, %v442
      %v451 = vmul.f32 %v443, %v443
      %v452 = vmul.f32 %v444, %v444
      %v453 = vmul.f32 %v445, %v445
      %v454 = vmul.f32 %v446, %v446
      %v455 = vmul.f32 %v447, %v447
      %v456 = vmul.f32 %v448, %v448
      %v457 = vmul.f32 %v449, %v449
      %458 = vadd.xlane.f32.xlu0 %v450
      %v459 = vpop.xlane.xlu0 %458
      %460 = vadd.xlane.f32.xlu0 %v451
      %v461 = vpop.xlane.xlu0 %460
      %462 = vadd.xlane.f32.xlu0 %v452
      %v463 = vpop.xlane.xlu0 %462
      %464 = vadd.xlane.f32.xlu0 %v453
      %v465 = vpop.xlane.xlu0 %464
      %466 = vadd.xlane.f32.xlu0 %v454
      %v467 = vpop.xlane.xlu0 %466
      %468 = vadd.xlane.f32.xlu0 %v455
      %v469 = vpop.xlane.xlu0 %468
      %470 = vadd.xlane.f32.xlu0 %v456
      %v471 = vpop.xlane.xlu0 %470
      %472 = vadd.xlane.f32.xlu0 %v457
      %v473 = vpop.xlane.xlu0 %472
      %v474 = vmul.f32 %v459, %v433
      %v475 = vmul.f32 %v461, %v433
      %v476 = vmul.f32 %v463, %v433
      %v477 = vmul.f32 %v465, %v433
      %v478 = vmul.f32 %v467, %v433
      %v479 = vmul.f32 %v469, %v433
      %v480 = vmul.f32 %v471, %v433
      %v481 = vmul.f32 %v473, %v433
      %v482 = vadd.f32 %v474, 1e-05
      %v483 = vadd.f32 %v475, 1e-05
      %v484 = vadd.f32 %v476, 1e-05
      %v485 = vadd.f32 %v477, 1e-05
      %v486 = vadd.f32 %v478, 1e-05
      %v487 = vadd.f32 %v479, 1e-05
      %v488 = vadd.f32 %v480, 1e-05
      %v489 = vadd.f32 %v481, 1e-05
      %v490 = vrsqrt.pop %v482
      %v491 = vrsqrt.pop %v483
      %v492 = vrsqrt.pop %v484
      %v493 = vrsqrt.pop %v485
      %v494 = vrsqrt.pop %v486
      %v495 = vrsqrt.pop %v487
      %v496 = vrsqrt.pop %v488
      %v497 = vrsqrt.pop %v489
      %v498 = vmul.f32 %v442, %v490
      %v499 = vmul.f32 %v443, %v491
      %v500 = vmul.f32 %v444, %v492
      %v501 = vmul.f32 %v445, %v493
      %v502 = vmul.f32 %v446, %v494
      %v503 = vmul.f32 %v447, %v495
      %v504 = vmul.f32 %v448, %v496
      %v505 = vmul.f32 %v449, %v497
      %v506 = vld [vmem:[%s1] sm:$0x1]
      %v508 = vlaneseq
      %v509 = vshrl.u32 %v508, 7
      %v510 = vsub.s32 0, %v509
      %v511 = vrot.slane %v506, %v510
      %v513 = vmul.f32 %v498, %v511
      %v514 = vmul.f32 %v499, %v511
      %v515 = vmul.f32 %v500, %v511
      %v516 = vmul.f32 %v501, %v511
      %v517 = vmul.f32 %v502, %v511
      %v518 = vmul.f32 %v503, %v511
      %v519 = vmul.f32 %v504, %v511
      %v520 = vmul.f32 %v505, %v511
      %v521 = vld [vmem:[%s2] sm:$0x1]
      %v523 = vlaneseq
      %v524 = vshrl.u32 %v523, 7
      %v525 = vsub.s32 0, %v524
      %v526 = vrot.slane %v521, %v525
      %v528 = vadd.f32 %v513, %v526
      %v529 = vadd.f32 %v514, %v526
      %v530 = vadd.f32 %v515, %v526
      %v531 = vadd.f32 %v516, %v526
      %v532 = vadd.f32 %v517, %v526
      %v533 = vadd.f32 %v518, %v526
      %v534 = vadd.f32 %v519, %v526
      %v535 = vadd.f32 %v520, %v526
      %v536 = vpack.c.bf16 %v529, %v528
      %v537 = vpack.c.bf16 %v531, %v530
      %v538 = vpack.c.bf16 %v533, %v532
      %v539 = vpack.c.bf16 %v535, %v534
      %v540 = vld [vmem:[%s3] sm:$0xff]
      %v541 = vld [vmem:[%s3 + $0x8] sm:$0xf]
      %v542 = vld [vmem:[%s3 + $0xc] sm:$0xff]
      %v543 = vld [vmem:[%s3 + $0x14] sm:$0xf]
      %v544 = vld [vmem:[%s3 + $0x18] sm:$0xff]
      %v545 = vld [vmem:[%s3 + $0x20] sm:$0xf]
      %v546 = vld [vmem:[%s3 + $0x24] sm:$0xff]
      %v547 = vld [vmem:[%s3 + $0x2c] sm:$0xf]
      %v548 = vld [vmem:[%s3 + $0x30] sm:$0xff]
      %v549 = vld [vmem:[%s3 + $0x38] sm:$0xf]
      %v550 = vld [vmem:[%s3 + $0x3c] sm:$0xff]
      %v551 = vld [vmem:[%s3 + $0x44] sm:$0xf]
      %v552 = vld [vmem:[%s3 + $0x48] sm:$0xff]
      %v553 = vld [vmem:[%s3 + $0x50] sm:$0xf]
      %v554 = vld [vmem:[%s3 + $0x54] sm:$0xff]
      %v555 = vld [vmem:[%s3 + $0x5c] sm:$0xf]
      %v556 = vld [vmem:[%s3 + $0x60] sm:$0xff]
      %v557 = vld [vmem:[%s3 + $0x68] sm:$0xf]
      %v558 = vld [vmem:[%s3 + $0x6c] sm:$0xff]
      %v559 = vld [vmem:[%s3 + $0x74] sm:$0xf]
      %v560 = vld [vmem:[%s3 + $0x78] sm:$0xff]
      %v561 = vld [vmem:[%s3 + $0x80] sm:$0xf]
      %v562 = vld [vmem:[%s3 + $0x84] sm:$0xff]
      %v563 = vld [vmem:[%s3 + $0x8c] sm:$0xf]
      %v564 = vld [vmem:[%s3 + $0x90] sm:$0xff]
      %v565 = vld [vmem:[%s3 + $0x98] sm:$0xf]
      %v566 = vld [vmem:[%s3 + $0x9c] sm:$0xff]
      %v567 = vld [vmem:[%s3 + $0xa4] sm:$0xf]
      %v568 = vld [vmem:[%s3 + $0xa8] sm:$0xff]
      %v569 = vld [vmem:[%s3 + $0xb0] sm:$0xf]
      %v570 = vld [vmem:[%s3 + $0xb4] sm:$0xff]
      %v571 = vld [vmem:[%s3 + $0xbc] sm:$0xf]
      %v572 = vld [vmem:[%s4] sm:$0x7]
      %v574 = vlaneseq
      %v575 = vshrl.u32 %v574, 7
      %v576 = vsub.s32 0, %v575
      %v577 = vrot.slane %v572, %v576
      %v578 = vlaneseq
      %v579 = vshrl.u32 %v578, 7
      %v580 = vsub.s32 1, %v579
      %v581 = vrot.slane %v572, %v580
      %v582 = vlaneseq
      %v583 = vshrl.u32 %v582, 7
      %v584 = vsub.s32 2, %v583
      %v585 = vrot.slane %v572, %v584
      %v621 = vunpack.c.l.b16 %v540
      %v622 = vunpack.c.h.b16 %v540
      %v623 = vunpack.c.l.b16 %v541
      %v624 = vunpack.c.l.b16 %v542
      %v625 = vunpack.c.h.b16 %v542
      %v626 = vunpack.c.l.b16 %v543
      %v627 = vunpack.c.l.b16 %v544
      %v628 = vunpack.c.h.b16 %v544
      %v629 = vunpack.c.l.b16 %v545
      %v630 = vunpack.c.l.b16 %v546
      %v631 = vunpack.c.h.b16 %v546
      %v632 = vunpack.c.l.b16 %v547
      %v633 = vunpack.c.l.b16 %v548
      %v634 = vunpack.c.h.b16 %v548
      %v635 = vunpack.c.l.b16 %v549
      %v636 = vunpack.c.l.b16 %v550
      %v637 = vunpack.c.h.b16 %v550
      %v638 = vunpack.c.l.b16 %v551
      %v639 = vunpack.c.l.b16 %v552
      %v640 = vunpack.c.h.b16 %v552
      %v641 = vunpack.c.l.b16 %v553
      %v642 = vunpack.c.l.b16 %v554
      %v643 = vunpack.c.h.b16 %v554
      %v644 = vunpack.c.l.b16 %v555
      %v645 = vunpack.c.l.b16 %v556
      %v646 = vunpack.c.h.b16 %v556
      %v647 = vunpack.c.l.b16 %v557
      %v648 = vunpack.c.l.b16 %v558
      %v649 = vunpack.c.h.b16 %v558
      %v650 = vunpack.c.l.b16 %v559
      %v651 = vunpack.c.l.b16 %v560
      %v652 = vunpack.c.h.b16 %v560
      %v653 = vunpack.c.l.b16 %v561
      %v654 = vunpack.c.l.b16 %v562
      %v655 = vunpack.c.h.b16 %v562
      %v656 = vunpack.c.l.b16 %v563
      %v657 = vunpack.c.l.b16 %v564
      %v658 = vunpack.c.h.b16 %v564
      %v659 = vunpack.c.l.b16 %v565
      %v660 = vunpack.c.l.b16 %v566
      %v661 = vunpack.c.h.b16 %v566
      %v662 = vunpack.c.l.b16 %v567
      %v663 = vunpack.c.l.b16 %v568
      %v664 = vunpack.c.h.b16 %v568
      %v665 = vunpack.c.l.b16 %v569
      %v666 = vunpack.c.l.b16 %v570
      %v667 = vunpack.c.h.b16 %v570
      %v668 = vunpack.c.l.b16 %v571
      %v669 = vpack.c.b16 %v624, %v621
      %v670 = vpack.c.b16 %v625, %v622
      %v671 = vpack.c.b16 %v626, %v623
      %v672 = vpack.c.b16 %v630, %v627
      %v673 = vpack.c.b16 %v631, %v628
      %v674 = vpack.c.b16 %v632, %v629
      %v675 = vpack.c.b16 %v636, %v633
      %v676 = vpack.c.b16 %v637, %v634
      %v677 = vpack.c.b16 %v638, %v635
      %v678 = vpack.c.b16 %v642, %v639
      %v679 = vpack.c.b16 %v643, %v640
      %v680 = vpack.c.b16 %v644, %v641
      %v681 = vpack.c.b16 %v648, %v645
      %v682 = vpack.c.b16 %v649, %v646
      %v683 = vpack.c.b16 %v650, %v647
      %v684 = vpack.c.b16 %v654, %v651
      %v685 = vpack.c.b16 %v655, %v652
      %v686 = vpack.c.b16 %v656, %v653
      %v687 = vpack.c.b16 %v660, %v657
      %v688 = vpack.c.b16 %v661, %v658
      %v689 = vpack.c.b16 %v662, %v659
      %v690 = vpack.c.b16 %v666, %v663
      %v691 = vpack.c.b16 %v667, %v664
      %v692 = vpack.c.b16 %v668, %v665
      %717 = vmatprep.subr.bf16.mxu0 %v670
      %718 = vmatpush1.bf16.msra.mxu0 %v669
      %719 = vmatprep.subr.bf16.mxu0 %v673
      %720 = vmatpush1.bf16.msra.mxu0 %v672
      %721 = vmatprep.subr.bf16.mxu0 %v676
      %722 = vmatpush1.bf16.msra.mxu0 %v675
      %723 = vmatprep.subr.bf16.mxu0 %v679
      %724 = vmatpush1.bf16.msra.mxu0 %v678
      %725 = vmatprep.subr.bf16.mxu0 %v682
      %726 = vmatpush1.bf16.msra.mxu0 %v681
      %727 = vmatprep.subr.bf16.mxu0 %v685
      %728 = vmatpush1.bf16.msra.mxu0 %v684
      %729 = vmatprep.subr.bf16.mxu0 %v688
      %730 = vmatpush1.bf16.msra.mxu0 %v687
      %731 = vmatprep.subr.bf16.mxu0 %v691
      %732 = vmatpush1.bf16.msra.mxu0 %v690
      %733 = vmatprep.subr.bf16.mxu0 0
      %734 = vmatpush1.bf16.msra.mxu0 0
      %735 = vmatprep.subr.bf16.mxu0 0
      %736 = vmatpush1.bf16.msra.mxu0 0
      %737 = vmatprep.subr.bf16.mxu0 0
      %738 = vmatpush1.bf16.msra.mxu0 0
      %739 = vmatprep.subr.bf16.mxu0 0
      %740 = vmatpush1.bf16.msra.mxu0 0
      %741 = vmatprep.subr.bf16.mxu0 0
      %742 = vmatpush1.bf16.msra.mxu0 0
      %743 = vmatprep.subr.bf16.mxu0 0
      %744 = vmatpush1.bf16.msra.mxu0 0
      %745 = vmatprep.subr.bf16.mxu0 0
      %746 = vmatpush1.bf16.msra.mxu0 0
      %747 = vmatprep.subr.bf16.mxu0 0
      %748 = vmatpush1.bf16.msra.mxu0 0
      %749 = vmatprep.mubr.bf16.mxu0 0
      %750 = vmatmul.mubr.bf16.gmra.mrb[0].mxu0 %v536
      %v751 = vpop.f32.mrb[0].mxu0
      %v752 = vadd.f32 %v577, %v751
      %v753 = vpop.f32.mrb[0].mxu0
      %v754 = vadd.f32 %v581, %v753
      %v755 = vpop.f32.mrb[0].mxu0
      %v756 = vadd.f32 %v577, %v755
      %v757 = vpop.f32.mrb[0].mxu0
      %v758 = vadd.f32 %v581, %v757
      %759 = vmatprep.mubr.bf16.mxu0 0
      %760 = vmatmul.mubr.bf16.gmra.mrb[0].mxu0 %v537
      %v761 = vpop.f32.mrb[0].mxu0
      %v762 = vadd.f32 %v577, %v761
      %v763 = vpop.f32.mrb[0].mxu0
      %v764 = vadd.f32 %v581, %v763
      %v765 = vpop.f32.mrb[0].mxu0
      %v766 = vadd.f32 %v577, %v765
      %v767 = vpop.f32.mrb[0].mxu0
      %v768 = vadd.f32 %v581, %v767
      %769 = vmatprep.mubr.bf16.mxu0 0
      %770 = vmatmul.mubr.bf16.gmra.mrb[0].mxu0 %v538
      %v771 = vpop.f32.mrb[0].mxu0
      %v772 = vadd.f32 %v577, %v771
      %v773 = vpop.f32.mrb[0].mxu0
      %v774 = vadd.f32 %v581, %v773
      %v775 = vpop.f32.mrb[0].mxu0
      %v776 = vadd.f32 %v577, %v775
      %v777 = vpop.f32.mrb[0].mxu0
      %v778 = vadd.f32 %v581, %v777
      %779 = vmatprep.mubr.bf16.mxu0 0
      %780 = vmatmul.mubr.bf16.gmra.mrb[0].mxu0 %v539
      %v781 = vpop.f32.mrb[0].mxu0
      %v782 = vadd.f32 %v577, %v781
      %v783 = vpop.f32.mrb[0].mxu0
      %v784 = vadd.f32 %v581, %v783
      %v785 = vpop.f32.mrb[0].mxu0
      %v786 = vadd.f32 %v577, %v785
      %v787 = vpop.f32.mrb[0].mxu0
      %v788 = vadd.f32 %v581, %v787
      %789 = vdwg.mxu0
      %790 = vmatprep.subr.bf16.mxu0 0
      %791 = vmatpush1.bf16.msra.mxu0 %v671
      %792 = vmatprep.subr.bf16.mxu0 0
      %793 = vmatpush1.bf16.msra.mxu0 %v674
      %794 = vmatprep.subr.bf16.mxu0 0
      %795 = vmatpush1.bf16.msra.mxu0 %v677
      %796 = vmatprep.subr.bf16.mxu0 0
      %797 = vmatpush1.bf16.msra.mxu0 %v680
      %798 = vmatprep.subr.bf16.mxu0 0
      %799 = vmatpush1.bf16.msra.mxu0 %v683
      %800 = vmatprep.subr.bf16.mxu0 0
      %801 = vmatpush1.bf16.msra.mxu0 %v686
      %802 = vmatprep.subr.bf16.mxu0 0
      %803 = vmatpush1.bf16.msra.mxu0 %v689
      %804 = vmatprep.subr.bf16.mxu0 0
      %805 = vmatpush1.bf16.msra.mxu0 %v692
      %806 = vmatprep.subr.bf16.mxu0 0
      %807 = vmatpush1.bf16.msra.mxu0 0
      %808 = vmatprep.subr.bf16.mxu0 0
      %809 = vmatpush1.bf16.msra.mxu0 0
      %810 = vmatprep.subr.bf16.mxu0 0
      %811 = vmatpush1.bf16.msra.mxu0 0
      %812 = vmatprep.subr.bf16.mxu0 0
      %813 = vmatpush1.bf16.msra.mxu0 0
      %814 = vmatprep.subr.bf16.mxu0 0
      %815 = vmatpush1.bf16.msra.mxu0 0
      %816 = vmatprep.subr.bf16.mxu0 0
      %817 = vmatpush1.bf16.msra.mxu0 0
      %818 = vmatprep.subr.bf16.mxu0 0
      %819 = vmatpush1.bf16.msra.mxu0 0
      %820 = vmatprep.subr.bf16.mxu0 0
      %821 = vmatpush1.bf16.msra.mxu0 0
      %822 = vmatprep.mubr.bf16.mxu0 0
      %823 = vmatmul.mubr.bf16.gmra.mrb[0].mxu0 %v536
      %v824 = vpop.f32.mrb[0].mxu0
      %v825 = vadd.f32 %v585, %v824
      %v826 = vpop.f32.mrb[0].mxu0
      %v827 = vpop.f32.mrb[0].mxu0
      %v828 = vadd.f32 %v585, %v827
      %v829 = vpop.f32.mrb[0].mxu0
      %830 = vmatprep.mubr.bf16.mxu0 0
      %831 = vmatmul.mubr.bf16.gmra.mrb[0].mxu0 %v537
      %v832 = vpop.f32.mrb[0].mxu0
      %v833 = vadd.f32 %v585, %v832
      %v834 = vpop.f32.mrb[0].mxu0
      %v835 = vpop.f32.mrb[0].mxu0
      %v836 = vadd.f32 %v585, %v835
      %v837 = vpop.f32.mrb[0].mxu0
      %838 = vmatprep.mubr.bf16.mxu0 0
      %839 = vmatmul.mubr.bf16.gmra.mrb[0].mxu0 %v538
      %v840 = vpop.f32.mrb[0].mxu0
      %v841 = vadd.f32 %v585, %v840
      %v842 = vpop.f32.mrb[0].mxu0
      %v843 = vpop.f32.mrb[0].mxu0
      %v844 = vadd.f32 %v585, %v843
      %v845 = vpop.f32.mrb[0].mxu0
      %846 = vmatprep.mubr.bf16.mxu0 0
      %847 = vmatmul.mubr.bf16.gmra.mrb[0].mxu0 %v539
      %v848 = vpop.f32.mrb[0].mxu0
      %v849 = vadd.f32 %v585, %v848
      %v850 = vpop.f32.mrb[0].mxu0
      %v851 = vpop.f32.mrb[0].mxu0
      %v852 = vadd.f32 %v585, %v851
      %v853 = vpop.f32.mrb[0].mxu0
      %854 = vdwg.mxu0
      %v855 = vpack.c.bf16 %v756, %v752
      %v856 = vpack.c.bf16 %v766, %v762
      %v857 = vpack.c.bf16 %v776, %v772
      %v858 = vpack.c.bf16 %v786, %v782
      %v863 = vunpack.c.l.b16 %v855
      %v864 = vunpack.c.h.b16 %v855
      %v865 = vunpack.c.l.b16 %v856
      %v866 = vunpack.c.h.b16 %v856
      %v867 = vunpack.c.l.b16 %v857
      %v868 = vunpack.c.h.b16 %v857
      %v869 = vunpack.c.l.b16 %v858
      %v870 = vunpack.c.h.b16 %v858
      %v871 = vpack.c.b16 %v863, %v863
      %v872 = vpack.c.b16 %v864, %v864
      %v873 = vpack.c.b16 %v865, %v865
      %v874 = vpack.c.b16 %v866, %v866
      %v875 = vpack.c.b16 %v867, %v867
      %v876 = vpack.c.b16 %v868, %v868
      %v877 = vpack.c.b16 %v869, %v869
      %v878 = vpack.c.b16 %v870, %v870
      %887 = vst [vmem:[%s380] sm:$0xf] %v871
      %888 = vst [vmem:[%s380 + $0x4] sm:$0xf] %v872
      %889 = vst [vmem:[%s380 + $0x8] sm:$0xf] %v873
      %890 = vst [vmem:[%s380 + $0xc] sm:$0xf] %v874
      %891 = vst [vmem:[%s380 + $0x10] sm:$0xf] %v875
      %892 = vst [vmem:[%s380 + $0x14] sm:$0xf] %v876
      %893 = vst [vmem:[%s380 + $0x18] sm:$0xf] %v877
      %894 = vst [vmem:[%s380 + $0x1c] sm:$0xf] %v878
      %v895 = vpack.c.bf16 %v758, %v754
      %v896 = vpack.c.bf16 %v768, %v764
      %v897 = vpack.c.bf16 %v778, %v774
      %v898 = vpack.c.bf16 %v788, %v784
      %v903 = vunpack.c.l.b16 %v895
      %v904 = vunpack.c.h.b16 %v895
      %v905 = vunpack.c.l.b16 %v896
      %v906 = vunpack.c.h.b16 %v896
      %v907 = vunpack.c.l.b16 %v897
      %v908 = vunpack.c.h.b16 %v897
      %v909 = vunpack.c.l.b16 %v898
      %v910 = vunpack.c.h.b16 %v898
      %v911 = vpack.c.b16 %v903, %v903
      %v912 = vpack.c.b16 %v904, %v904
      %v913 = vpack.c.b16 %v905, %v905
      %v914 = vpack.c.b16 %v906, %v906
      %v915 = vpack.c.b16 %v907, %v907
      %v916 = vpack.c.b16 %v908, %v908
      %v917 = vpack.c.b16 %v909, %v909
      %v918 = vpack.c.b16 %v910, %v910
      %927 = vst [vmem:[%s390] sm:$0xf] %v911
      %928 = vst [vmem:[%s390 + $0x4] sm:$0xf] %v912
      %929 = vst [vmem:[%s390 + $0x8] sm:$0xf] %v913
      %930 = vst [vmem:[%s390 + $0xc] sm:$0xf] %v914
      %931 = vst [vmem:[%s390 + $0x10] sm:$0xf] %v915
      %932 = vst [vmem:[%s390 + $0x14] sm:$0xf] %v916
      %933 = vst [vmem:[%s390 + $0x18] sm:$0xf] %v917
      %934 = vst [vmem:[%s390 + $0x1c] sm:$0xf] %v918
      %v935 = vpack.c.bf16 %v828, %v825
      %v936 = vpack.c.bf16 %v836, %v833
      %v937 = vpack.c.bf16 %v844, %v841
      %v938 = vpack.c.bf16 %v852, %v849
      %v943 = vunpack.c.l.b16 %v935
      %v944 = vunpack.c.h.b16 %v935
      %v945 = vunpack.c.l.b16 %v936
      %v946 = vunpack.c.h.b16 %v936
      %v947 = vunpack.c.l.b16 %v937
      %v948 = vunpack.c.h.b16 %v937
      %v949 = vunpack.c.l.b16 %v938
      %v950 = vunpack.c.h.b16 %v938
      %v951 = vpack.c.b16 %v943, %v943
      %v952 = vpack.c.b16 %v944, %v944
      %v953 = vpack.c.b16 %v945, %v945
      %v954 = vpack.c.b16 %v946, %v946
      %v955 = vpack.c.b16 %v947, %v947
      %v956 = vpack.c.b16 %v948, %v948
      %v957 = vpack.c.b16 %v949, %v949
      %v958 = vpack.c.b16 %v950, %v950
      %967 = vst [vmem:[%s400] sm:$0xf] %v951
      %968 = vst [vmem:[%s400 + $0x4] sm:$0xf] %v952
      %969 = vst [vmem:[%s400 + $0x8] sm:$0xf] %v953
      %970 = vst [vmem:[%s400 + $0xc] sm:$0xf] %v954
      %971 = vst [vmem:[%s400 + $0x10] sm:$0xf] %v955
      %972 = vst [vmem:[%s400 + $0x14] sm:$0xf] %v956
      %973 = vst [vmem:[%s400 + $0x18] sm:$0xf] %v957
      %974 = vst [vmem:[%s400 + $0x1c] sm:$0xf] %v958
      %v975 = vadd.f32 %v528, %v529
      %v976 = vadd.f32 %v975, %v530
      %v977 = vadd.f32 %v976, %v531
      %v978 = vadd.f32 %v977, %v532
      %v979 = vadd.f32 %v978, %v533
      %v980 = vadd.f32 %v979, %v534
      %v981 = vadd.f32 %v980, %v535
      %v982 = vrot.slane %v981, 4
      %v983 = vadd.f32 %v981, %v982
      %v984 = vrot.slane %v983, 2
      %v985 = vadd.f32 %v983, %v984
      %v986 = vrot.slane %v985, 1
      %v987 = vadd.f32 %v985, %v986
      %988 = vst [vmem:[%s407] sm:$0x1] %v987
      %s989 = smul.u32 8, %s25
      %p990 = scmp.lt.s32.totalorder %s24, 1
      %s991 = scalar_select %p990, %s24, 1
      %p992 = scmp.lt.s32.totalorder %s989, 7
      %s993 = scalar_select %p992, %s989, 7
      %s994 = smul.addr %s991, 8
      %s995 = sadd.s32 %s993, %s994
      %s996 = smul.addr %s995, 4
      %s997 = scalar_lea.vmem %s5, %s996
      %s998 = smul.u32 8, %s25
      %p999 = scmp.lt.s32.totalorder %s24, 1
      %s1000 = scalar_select %p999, %s24, 1
      %p1001 = scmp.lt.s32.totalorder %s998, 7
      %s1002 = scalar_select %p1001, %s998, 7
      %s1003 = smul.addr %s1000, 8
      %s1004 = sadd.s32 %s1002, %s1003
      %s1005 = smul.addr %s1004, 4
      %s1006 = scalar_lea.vmem %s6, %s1005
      %s1007 = smul.u32 8, %s25
      %p1008 = scmp.lt.s32.totalorder %s24, 1
      %s1009 = scalar_select %p1008, %s24, 1
      %p1010 = scmp.lt.s32.totalorder %s1007, 7
      %s1011 = scalar_select %p1010, %s1007, 7
      %s1012 = smul.addr %s1009, 8
      %s1013 = sadd.s32 %s1011, %s1012
      %s1014 = smul.addr %s1013, 4
      %s1015 = scalar_lea.vmem %s7, %s1014
      %p1016 = scmp.lt.s32.totalorder %s24, 1
      %s1017 = scalar_select %p1016, %s24, 1
      %p1018 = scmp.lt.s32.totalorder %s25, 0
      %s1019 = scalar_select %p1018, %s25, 0
      %s1020 = sadd.s32 %s1019, %s1017
      %s1021 = scalar_lea.vmem %s8, %s1020
      // Predicated region
      $region41: #{_lambda_.2} parent=39 // pred_check
        %p1022 = pneg %p164
      $region42: #{_lambda_.2} parent=39 // pred_check_branch
        %1024 = sbr.rel (%p1022) target = $region44
      $region43: #{_lambda_.2} parent=39 // pred_region
        %s1025 = smul.u32 8, %s25
      $region44: #{_lambda_.2} parent=39 // pred_fallthru
        _
      // Predicated region
      $region45: #{_lambda_.2} parent=39 // pred_check
        %p1026 = pneg %p192
      $region46: #{_lambda_.2} parent=39 // pred_check_branch
        %1028 = sbr.rel (%p1026) target = $region48
      $region47: #{_lambda_.2} parent=39 // pred_region
        %s1029 = smul.u32 8, %s25
      $region48: #{_lambda_.2} parent=39 // pred_fallthru
        _
      // Predicated region
      $region49: #{_lambda_.2} parent=39 // pred_check
        %p1030 = pneg %p220
      $region50: #{_lambda_.2} parent=39 // pred_check_branch
        %1032 = sbr.rel (%p1030) target = $region52
      $region51: #{_lambda_.2} parent=39 // pred_region
        %s1033 = smul.u32 8, %s25
      $region52: #{_lambda_.2} parent=39 // pred_fallthru
        _
      // Predicated region
      $region53: #{_lambda_.2} parent=39 // pred_check
        %p1034 = pneg %p248
      $region54: #{_lambda_.2} parent=39 // pred_check_branch
        %1036 = sbr.rel (%p1034) target = $region56
      $region55: #{_lambda_.2} parent=39 // pred_region
        _
      $region56: #{_lambda_.2} parent=39 // pred_fallthru
        _
    $region40: #{_lambda_.2} parent=5 // pred_fallthru
      _
    %p1037 = scmp.le.s32.totalorder 2, %s15
    // Predicated region
    $region57: #{_lambda_.2} parent=5 // pred_check
      %p1038 = pneg %p1037
    $region58: #{_lambda_.2} parent=5 // pred_check_branch
      %1040 = sbr.rel (%p1038) target = $region60
    $region59: #{_lambda_.2} parent=5 // pred_region
      %s1041 = ssub.s32 %s15, 2
      // Predicated region
      $region61: #{_lambda_.2} parent=59 // pred_check
        %p1042 = pneg %p170
      $region62: #{_lambda_.2} parent=59 // pred_check_branch
        %1044 = sbr.rel (%p1042) target = $region64
      $region63: #{_lambda_.2} parent=59 // pred_region
        %s1045 = smul.u32 8, %s27
        %p1046 = scmp.lt.s32.totalorder %s26, 1
        %s1047 = scalar_select %p1046, %s26, 1
        %p1048 = scmp.lt.s32.totalorder %s1045, 7
        %s1049 = scalar_select %p1048, %s1045, 7
        %s1050 = smul.addr %s1047, 8
        %s1051 = sadd.s32 %s1049, %s1050
        %s1052 = smul.addr %s1051, 4
        %s1053 = scalar_lea.vmem %s5, %s1052
      $region64: #{_lambda_.2} parent=59 // pred_fallthru
        _
      // Predicated region
      $region65: #{_lambda_.2} parent=59 // pred_check
        %p1054 = pneg %p198
      $region66: #{_lambda_.2} parent=59 // pred_check_branch
        %1056 = sbr.rel (%p1054) target = $region68
      $region67: #{_lambda_.2} parent=59 // pred_region
        %s1057 = smul.u32 8, %s27
        %p1058 = scmp.lt.s32.totalorder %s26, 1
        %s1059 = scalar_select %p1058, %s26, 1
        %p1060 = scmp.lt.s32.totalorder %s1057, 7
        %s1061 = scalar_select %p1060, %s1057, 7
        %s1062 = smul.addr %s1059, 8
        %s1063 = sadd.s32 %s1061, %s1062
        %s1064 = smul.addr %s1063, 4
        %s1065 = scalar_lea.vmem %s6, %s1064
      $region68: #{_lambda_.2} parent=59 // pred_fallthru
        _
      // Predicated region
      $region69: #{_lambda_.2} parent=59 // pred_check
        %p1066 = pneg %p226
      $region70: #{_lambda_.2} parent=59 // pred_check_branch
        %1068 = sbr.rel (%p1066) target = $region72
      $region71: #{_lambda_.2} parent=59 // pred_region
        %s1069 = smul.u32 8, %s27
        %p1070 = scmp.lt.s32.totalorder %s26, 1
        %s1071 = scalar_select %p1070, %s26, 1
        %p1072 = scmp.lt.s32.totalorder %s1069, 7
        %s1073 = scalar_select %p1072, %s1069, 7
        %s1074 = smul.addr %s1071, 8
        %s1075 = sadd.s32 %s1073, %s1074
        %s1076 = smul.addr %s1075, 4
        %s1077 = scalar_lea.vmem %s7, %s1076
      $region72: #{_lambda_.2} parent=59 // pred_fallthru
        _
      // Predicated region
      $region73: #{_lambda_.2} parent=59 // pred_check
        %p1078 = pneg %p254
      $region74: #{_lambda_.2} parent=59 // pred_check_branch
        %1080 = sbr.rel (%p1078) target = $region76
      $region75: #{_lambda_.2} parent=59 // pred_region
        %p1081 = scmp.lt.s32.totalorder %s26, 1
        %s1082 = scalar_select %p1081, %s26, 1
        %p1083 = scmp.lt.s32.totalorder %s27, 0
        %s1084 = scalar_select %p1083, %s27, 0
        %s1085 = sadd.s32 %s1084, %s1082
        %s1086 = scalar_lea.vmem %s8, %s1085
      $region76: #{_lambda_.2} parent=59 // pred_fallthru
        _
    $region60: #{_lambda_.2} parent=5 // pred_fallthru
      _
  $region6: #{_lambda_.2} parent=0 // loop_footer
    %s19 = sadd.s32 1, %s15
  $region7: #{_lambda_.2} parent=0 // loop_footer_branch
    %14 = sbr.rel target = $region3
  $region8: #{_lambda_.2} parent=0 // loop_exit
    _

// kernel: _lambda_.3
$region0: #{_lambda_.3}
  #allocation0 [shape = 'u32[]', space=smem, size = 0x4, offset = 0x4, fixed_abs, tag = 'smem constant byte address 0x4 - core index']
  #allocation1 [shape = 'u32[144,128]{1,0:T(1,128)}', space=vmem, size = 0x12000, scoped, tag = 'internal scratch']
  %s0 = inlined_call_operand.vmem [shape: f32[2,3,128], index: 0, kind: input, shape index: {}]
  %s1 = inlined_call_operand.vmem [shape: bf16[2,64,128], index: 1, kind: input, shape index: {}]
  %s2 = inlined_call_operand.vmem [shape: bf16[2,64,128], index: 2, kind: input, shape index: {}]
  %s3 = inlined_call_operand.vmem [shape: bf16[2,64,128], index: 3, kind: input, shape index: {}]
  %s4 = inlined_call_operand.vmem [shape: f32[2,64,128], index: 4, kind: input, shape index: {}, may-alias: {4,11}]
  %s5 = inlined_call_operand.vmem [shape: f32[1,128], index: 5, kind: input, shape index: {}]
  %s6 = inlined_call_operand.vmem [shape: f32[1,128], index: 6, kind: input, shape index: {}]
  %s7 = inlined_call_operand.vmem [shape: bf16[128,512], index: 7, kind: input, shape index: {}]
  %s8 = inlined_call_operand.vmem [shape: f32[1,512], index: 8, kind: input, shape index: {}]
  %s9 = inlined_call_operand.vmem [shape: bf16[512,128], index: 9, kind: input, shape index: {}]
  %s10 = inlined_call_operand.vmem [shape: f32[1,128], index: 10, kind: input, shape index: {}]
  %s11 = inlined_call_operand.vmem [shape: f32[2,64,128], index: 11, kind: output, shape index: {}, may-alias: {4,11}]
  %s12 = sld [smem:[#allocation0]]
  $region77: #{_lambda_.3} parent=0
    _
  %s14 = ssub.s32 1, %s12
  %s15 = scalar_select 0, %s14, %s12
  loop: start=0, step=1, limit=4
  $region2: #{_lambda_.3} parent=0 // loop_pre_header
    _
  $region3: #{_lambda_.3} parent=0 // loop_header
    %s17 = sphi 0, %s21
    %p18 = scmp.ge.s32.totalorder %s17, 4
    %s24 = sphi 0, %s36
    %s25 = sphi 0, %s32
    %s26 = sphi 0, %s24
    %s27 = sphi 0, %s25
    %s28 = sphi 0, %s26
    %s29 = sphi 0, %s27
    %s39 = sphi 0, %s41
    %s42 = sphi 0, %s39
    %s43 = sphi 0, %s42
    %s59 = sphi 0, %s43
    %s67 = sphi 0, %s69
    %s70 = sphi 0, %s67
    %s71 = sphi 0, %s70
    %s87 = sphi 0, %s71
    %s95 = sphi 0, %s97
    %s98 = sphi 0, %s95
    %s99 = sphi 0, %s98
    %s115 = sphi 0, %s99
    %s123 = sphi 0, %s125
    %s126 = sphi 0, %s123
    %s127 = sphi 0, %s126
    %s143 = sphi 0, %s127
    %s151 = sphi 0, %s153
    %s154 = sphi 0, %s151
    %s155 = sphi 0, %s154
    %s171 = sphi 0, %s155
    %s175 = sphi 0, %s175
    %s177 = sphi 0, %s175
    %s178 = sphi 0, %s177
    %s192 = sphi 0, %s178
    %s196 = sphi 0, %s196
    %s198 = sphi 0, %s196
    %s199 = sphi 0, %s198
    %s213 = sphi 0, %s199
    %s217 = sphi 0, %s217
    %s219 = sphi 0, %s217
    %s220 = sphi 0, %s219
    %s234 = sphi 0, %s220
    %s238 = sphi 0, %s238
    %s240 = sphi 0, %s238
    %s241 = sphi 0, %s240
    %s255 = sphi 0, %s241
    %s259 = sphi 0, %s259
    %s261 = sphi 0, %s259
    %s262 = sphi 0, %s261
    %s276 = sphi 0, %s262
    %s280 = sphi 0, %s280
    %s282 = sphi 0, %s280
    %s283 = sphi 0, %s282
    %s297 = sphi 0, %s283
    %s305 = sphi 0, %s307
    %s308 = sphi 0, %s305
    %s309 = sphi 0, %s308
    %s325 = sphi 0, %s309
  $region4: #{_lambda_.3} parent=0 // loop_header_branch
    %20 = sbr.rel (%p18) target = $region8
  $region5: #{_lambda_.3} parent=0 // loop_body
    %s22 = ssub.s32 %s17, 1
    %s23 = ssub.s32 %s17, 2
    %s30 = sadd.s32 1, %s25
    %p31 = scmp.ge.s32.totalorder %s30, 1
    %s32 = scalar_select %p31, 0, %s30
    %s33 = sadd.s32 1, %s24
    %s34 = scalar_select %p31, %s33, %s24
    %p35 = scmp.ge.s32.totalorder %s34, 2
    %s36 = scalar_select %p35, 0, %s34
    %s37 = ssub.s32 %s24, %s36
    %p38 = scmp.eq.s32.totalorder %s37, 0
    %s40 = sadd.s32 %s39, 1
    %s41 = scalar_select %p38, %s39, %s40
    %p44 = pneg %p38
    %p45 = scmp.eq.s32.totalorder %s17, 1
    %p46 = por %p44, %p45
    %p47 = scmp.ne.s32.totalorder %s39, %s42
    %p48 = scmp.eq.s32.totalorder %s17, 0
    %p49 = por %p47, %p48
    %p50 = scmp.ne.s32.totalorder %s39, %s42
    %p51 = scmp.eq.s32.totalorder %s22, 1
    %p52 = por %p50, %p51
    %p53 = scmp.ne.s32.totalorder %s42, %s43
    %p54 = scmp.eq.s32.totalorder %s22, 0
    %p55 = por %p53, %p54
    %p56 = scmp.ne.s32.totalorder %s42, %s43
    %p57 = scmp.eq.s32.totalorder %s23, 1
    %p58 = por %p56, %p57
    %p60 = scmp.ne.s32.totalorder %s43, %s59
    %p61 = scmp.eq.s32.totalorder %s23, 0
    %p62 = por %p60, %p61
    %s63 = ssub.s32 %s24, %s36
    %s64 = ssub.s32 %s25, %s32
    %s65 = sor.u32 %s63, %s64
    %p66 = scmp.eq.s32.totalorder %s65, 0
    %s68 = sadd.s32 %s67, 1
    %s69 = scalar_select %p66, %s67, %s68
    %p72 = pneg %p66
    %p73 = scmp.eq.s32.totalorder %s17, 1
    %p74 = por %p72, %p73
    %p75 = scmp.ne.s32.totalorder %s67, %s70
    %p76 = scmp.eq.s32.totalorder %s17, 0
    %p77 = por %p75, %p76
    %p78 = scmp.ne.s32.totalorder %s67, %s70
    %p79 = scmp.eq.s32.totalorder %s22, 1
    %p80 = por %p78, %p79
    %p81 = scmp.ne.s32.totalorder %s70, %s71
    %p82 = scmp.eq.s32.totalorder %s22, 0
    %p83 = por %p81, %p82
    %p84 = scmp.ne.s32.totalorder %s70, %s71
    %p85 = scmp.eq.s32.totalorder %s23, 1
    %p86 = por %p84, %p85
    %p88 = scmp.ne.s32.totalorder %s71, %s87
    %p89 = scmp.eq.s32.totalorder %s23, 0
    %p90 = por %p88, %p89
    %s91 = ssub.s32 %s24, %s36
    %s92 = ssub.s32 %s25, %s32
    %s93 = sor.u32 %s91, %s92
    %p94 = scmp.eq.s32.totalorder %s93, 0
    %s96 = sadd.s32 %s95, 1
    %s97 = scalar_select %p94, %s95, %s96
    %p100 = pneg %p94
    %p101 = scmp.eq.s32.totalorder %s17, 1
    %p102 = por %p100, %p101
    %p103 = scmp.ne.s32.totalorder %s95, %s98
    %p104 = scmp.eq.s32.totalorder %s17, 0
    %p105 = por %p103, %p104
    %p106 = scmp.ne.s32.totalorder %s95, %s98
    %p107 = scmp.eq.s32.totalorder %s22, 1
    %p108 = por %p106, %p107
    %p109 = scmp.ne.s32.totalorder %s98, %s99
    %p110 = scmp.eq.s32.totalorder %s22, 0
    %p111 = por %p109, %p110
    %p112 = scmp.ne.s32.totalorder %s98, %s99
    %p113 = scmp.eq.s32.totalorder %s23, 1
    %p114 = por %p112, %p113
    %p116 = scmp.ne.s32.totalorder %s99, %s115
    %p117 = scmp.eq.s32.totalorder %s23, 0
    %p118 = por %p116, %p117
    %s119 = ssub.s32 %s24, %s36
    %s120 = ssub.s32 %s25, %s32
    %s121 = sor.u32 %s119, %s120
    %p122 = scmp.eq.s32.totalorder %s121, 0
    %s124 = sadd.s32 %s123, 1
    %s125 = scalar_select %p122, %s123, %s124
    %p128 = pneg %p122
    %p129 = scmp.eq.s32.totalorder %s17, 1
    %p130 = por %p128, %p129
    %p131 = scmp.ne.s32.totalorder %s123, %s126
    %p132 = scmp.eq.s32.totalorder %s17, 0
    %p133 = por %p131, %p132
    %p134 = scmp.ne.s32.totalorder %s123, %s126
    %p135 = scmp.eq.s32.totalorder %s22, 1
    %p136 = por %p134, %p135
    %p137 = scmp.ne.s32.totalorder %s126, %s127
    %p138 = scmp.eq.s32.totalorder %s22, 0
    %p139 = por %p137, %p138
    %p140 = scmp.ne.s32.totalorder %s126, %s127
    %p141 = scmp.eq.s32.totalorder %s23, 1
    %p142 = por %p140, %p141
    %p144 = scmp.ne.s32.totalorder %s127, %s143
    %p145 = scmp.eq.s32.totalorder %s23, 0
    %p146 = por %p144, %p145
    %s147 = ssub.s32 %s24, %s36
    %s148 = ssub.s32 %s25, %s32
    %s149 = sor.u32 %s147, %s148
    %p150 = scmp.eq.s32.totalorder %s149, 0
    %s152 = sadd.s32 %s151, 1
    %s153 = scalar_select %p150, %s151, %s152
    %p156 = pneg %p150
    %p157 = scmp.eq.s32.totalorder %s17, 1
    %p158 = por %p156, %p157
    %p159 = scmp.ne.s32.totalorder %s151, %s154
    %p160 = scmp.eq.s32.totalorder %s17, 0
    %p161 = por %p159, %p160
    %p162 = scmp.ne.s32.totalorder %s151, %s154
    %p163 = scmp.eq.s32.totalorder %s22, 1
    %p164 = por %p162, %p163
    %p165 = scmp.ne.s32.totalorder %s154, %s155
    %p166 = scmp.eq.s32.totalorder %s22, 0
    %p167 = por %p165, %p166
    %p168 = scmp.ne.s32.totalorder %s154, %s155
    %p169 = scmp.eq.s32.totalorder %s23, 1
    %p170 = por %p168, %p169
    %p172 = scmp.ne.s32.totalorder %s155, %s171
    %p173 = scmp.eq.s32.totalorder %s23, 0
    %p174 = por %p172, %p173
    %s176 = sadd.s32 %s175, 1
    %p179 = scmp.eq.s32.totalorder %s17, 1
    %p180 = scmp.ne.s32.totalorder %s175, %s177
    %p181 = scmp.eq.s32.totalorder %s17, 0
    %p182 = por %p180, %p181
    %p183 = scmp.ne.s32.totalorder %s175, %s177
    %p184 = scmp.eq.s32.totalorder %s22, 1
    %p185 = por %p183, %p184
    %p186 = scmp.ne.s32.totalorder %s177, %s178
    %p187 = scmp.eq.s32.totalorder %s22, 0
    %p188 = por %p186, %p187
    %p189 = scmp.ne.s32.totalorder %s177, %s178
    %p190 = scmp.eq.s32.totalorder %s23, 1
    %p191 = por %p189, %p190
    %p193 = scmp.ne.s32.totalorder %s178, %s192
    %p194 = scmp.eq.s32.totalorder %s23, 0
    %p195 = por %p193, %p194
    %s197 = sadd.s32 %s196, 1
    %p200 = scmp.eq.s32.totalorder %s17, 1
    %p201 = scmp.ne.s32.totalorder %s196, %s198
    %p202 = scmp.eq.s32.totalorder %s17, 0
    %p203 = por %p201, %p202
    %p204 = scmp.ne.s32.totalorder %s196, %s198
    %p205 = scmp.eq.s32.totalorder %s22, 1
    %p206 = por %p204, %p205
    %p207 = scmp.ne.s32.totalorder %s198, %s199
    %p208 = scmp.eq.s32.totalorder %s22, 0
    %p209 = por %p207, %p208
    %p210 = scmp.ne.s32.totalorder %s198, %s199
    %p211 = scmp.eq.s32.totalorder %s23, 1
    %p212 = por %p210, %p211
    %p214 = scmp.ne.s32.totalorder %s199, %s213
    %p215 = scmp.eq.s32.totalorder %s23, 0
    %p216 = por %p214, %p215
    %s218 = sadd.s32 %s217, 1
    %p221 = scmp.eq.s32.totalorder %s17, 1
    %p222 = scmp.ne.s32.totalorder %s217, %s219
    %p223 = scmp.eq.s32.totalorder %s17, 0
    %p224 = por %p222, %p223
    %p225 = scmp.ne.s32.totalorder %s217, %s219
    %p226 = scmp.eq.s32.totalorder %s22, 1
    %p227 = por %p225, %p226
    %p228 = scmp.ne.s32.totalorder %s219, %s220
    %p229 = scmp.eq.s32.totalorder %s22, 0
    %p230 = por %p228, %p229
    %p231 = scmp.ne.s32.totalorder %s219, %s220
    %p232 = scmp.eq.s32.totalorder %s23, 1
    %p233 = por %p231, %p232
    %p235 = scmp.ne.s32.totalorder %s220, %s234
    %p236 = scmp.eq.s32.totalorder %s23, 0
    %p237 = por %p235, %p236
    %s239 = sadd.s32 %s238, 1
    %p242 = scmp.eq.s32.totalorder %s17, 1
    %p243 = scmp.ne.s32.totalorder %s238, %s240
    %p244 = scmp.eq.s32.totalorder %s17, 0
    %p245 = por %p243, %p244
    %p246 = scmp.ne.s32.totalorder %s238, %s240
    %p247 = scmp.eq.s32.totalorder %s22, 1
    %p248 = por %p246, %p247
    %p249 = scmp.ne.s32.totalorder %s240, %s241
    %p250 = scmp.eq.s32.totalorder %s22, 0
    %p251 = por %p249, %p250
    %p252 = scmp.ne.s32.totalorder %s240, %s241
    %p253 = scmp.eq.s32.totalorder %s23, 1
    %p254 = por %p252, %p253
    %p256 = scmp.ne.s32.totalorder %s241, %s255
    %p257 = scmp.eq.s32.totalorder %s23, 0
    %p258 = por %p256, %p257
    %s260 = sadd.s32 %s259, 1
    %p263 = scmp.eq.s32.totalorder %s17, 1
    %p264 = scmp.ne.s32.totalorder %s259, %s261
    %p265 = scmp.eq.s32.totalorder %s17, 0
    %p266 = por %p264, %p265
    %p267 = scmp.ne.s32.totalorder %s259, %s261
    %p268 = scmp.eq.s32.totalorder %s22, 1
    %p269 = por %p267, %p268
    %p270 = scmp.ne.s32.totalorder %s261, %s262
    %p271 = scmp.eq.s32.totalorder %s22, 0
    %p272 = por %p270, %p271
    %p273 = scmp.ne.s32.totalorder %s261, %s262
    %p274 = scmp.eq.s32.totalorder %s23, 1
    %p275 = por %p273, %p274
    %p277 = scmp.ne.s32.totalorder %s262, %s276
    %p278 = scmp.eq.s32.totalorder %s23, 0
    %p279 = por %p277, %p278
    %s281 = sadd.s32 %s280, 1
    %p284 = scmp.eq.s32.totalorder %s17, 1
    %p285 = scmp.ne.s32.totalorder %s280, %s282
    %p286 = scmp.eq.s32.totalorder %s17, 0
    %p287 = por %p285, %p286
    %p288 = scmp.ne.s32.totalorder %s280, %s282
    %p289 = scmp.eq.s32.totalorder %s22, 1
    %p290 = por %p288, %p289
    %p291 = scmp.ne.s32.totalorder %s282, %s283
    %p292 = scmp.eq.s32.totalorder %s22, 0
    %p293 = por %p291, %p292
    %p294 = scmp.ne.s32.totalorder %s282, %s283
    %p295 = scmp.eq.s32.totalorder %s23, 1
    %p296 = por %p294, %p295
    %p298 = scmp.ne.s32.totalorder %s283, %s297
    %p299 = scmp.eq.s32.totalorder %s23, 0
    %p300 = por %p298, %p299
    %s301 = ssub.s32 %s24, %s36
    %s302 = ssub.s32 %s25, %s32
    %s303 = sor.u32 %s301, %s302
    %p304 = scmp.eq.s32.totalorder %s303, 0
    %s306 = sadd.s32 %s305, 1
    %s307 = scalar_select %p304, %s305, %s306
    %p310 = pneg %p304
    %p311 = scmp.eq.s32.totalorder %s17, 1
    %p312 = por %p310, %p311
    %p313 = scmp.ne.s32.totalorder %s305, %s308
    %p314 = scmp.eq.s32.totalorder %s17, 0
    %p315 = por %p313, %p314
    %p316 = scmp.ne.s32.totalorder %s305, %s308
    %p317 = scmp.eq.s32.totalorder %s22, 1
    %p318 = por %p316, %p317
    %p319 = scmp.ne.s32.totalorder %s308, %s309
    %p320 = scmp.eq.s32.totalorder %s22, 0
    %p321 = por %p319, %p320
    %p322 = scmp.ne.s32.totalorder %s308, %s309
    %p323 = scmp.eq.s32.totalorder %s23, 1
    %p324 = por %p322, %p323
    %p326 = scmp.ne.s32.totalorder %s309, %s325
    %p327 = scmp.eq.s32.totalorder %s23, 0
    %p328 = por %p326, %p327
    %p329 = scmp.le.s32.totalorder 1, %s17
    %p330 = scmp.lt.s32.totalorder %s17, 3
    %p331 = pnand %p329, %p330
    %p332 = pneg %p331
    // Predicated region
    $region9: #{_lambda_.3} parent=5 // pred_check
      _
    $region10: #{_lambda_.3} parent=5 // pred_check_branch
      %334 = sbr.rel (%p331) target = $region12
    $region11: #{_lambda_.3} parent=5 // pred_region
      %s335 = ssub.s32 %s17, 1
      // Predicated region
      $region13: #{_lambda_.3} parent=11 // pred_check
        %p336 = pneg %p188
      $region14: #{_lambda_.3} parent=11 // pred_check_branch
        %338 = sbr.rel (%p336) target = $region16
      $region15: #{_lambda_.3} parent=11 // pred_region
        _
      $region16: #{_lambda_.3} parent=11 // pred_fallthru
        _
      // Predicated region
      $region17: #{_lambda_.3} parent=11 // pred_check
        %p339 = pneg %p209
      $region18: #{_lambda_.3} parent=11 // pred_check_branch
        %341 = sbr.rel (%p339) target = $region20
      $region19: #{_lambda_.3} parent=11 // pred_region
        _
      $region20: #{_lambda_.3} parent=11 // pred_fallthru
        _
      // Predicated region
      $region21: #{_lambda_.3} parent=11 // pred_check
        %p342 = pneg %p230
      $region22: #{_lambda_.3} parent=11 // pred_check_branch
        %344 = sbr.rel (%p342) target = $region24
      $region23: #{_lambda_.3} parent=11 // pred_region
        _
      $region24: #{_lambda_.3} parent=11 // pred_fallthru
        _
      // Predicated region
      $region25: #{_lambda_.3} parent=11 // pred_check
        %p345 = pneg %p251
      $region26: #{_lambda_.3} parent=11 // pred_check_branch
        %347 = sbr.rel (%p345) target = $region28
      $region27: #{_lambda_.3} parent=11 // pred_region
        _
      $region28: #{_lambda_.3} parent=11 // pred_fallthru
        _
      // Predicated region
      $region29: #{_lambda_.3} parent=11 // pred_check
        %p348 = pneg %p272
      $region30: #{_lambda_.3} parent=11 // pred_check_branch
        %350 = sbr.rel (%p348) target = $region32
      $region31: #{_lambda_.3} parent=11 // pred_region
        _
      $region32: #{_lambda_.3} parent=11 // pred_fallthru
        _
      // Predicated region
      $region33: #{_lambda_.3} parent=11 // pred_check
        %p351 = pneg %p293
      $region34: #{_lambda_.3} parent=11 // pred_check_branch
        %353 = sbr.rel (%p351) target = $region36
      $region35: #{_lambda_.3} parent=11 // pred_region
        _
      $region36: #{_lambda_.3} parent=11 // pred_fallthru
        _
    $region12: #{_lambda_.3} parent=5 // pred_fallthru
      _
    %p354 = scmp.lt.s32.totalorder %s17, 2
    // Predicated region
    $region37: #{_lambda_.3} parent=5 // pred_check
      %p355 = pneg %p354
    $region38: #{_lambda_.3} parent=5 // pred_check_branch
      %357 = sbr.rel (%p355) target = $region40
    $region39: #{_lambda_.3} parent=5 // pred_region
      // Predicated region
      $region41: #{_lambda_.3} parent=39 // pred_check
        %p358 = pneg %p49
      $region42: #{_lambda_.3} parent=39 // pred_check_branch
        %360 = sbr.rel (%p358) target = $region44
      $region43: #{_lambda_.3} parent=39 // pred_region
        %p361 = scmp.lt.s32.totalorder %s24, 1
        %s362 = scalar_select %p361, %s24, 1
        %s363 = smul.addr %s362, 4
        %s364 = scalar_lea.vmem %s0, %s363
      $region44: #{_lambda_.3} parent=39 // pred_fallthru
        _
      // Predicated region
      $region45: #{_lambda_.3} parent=39 // pred_check
        %p365 = pneg %p77
      $region46: #{_lambda_.3} parent=39 // pred_check_branch
        %367 = sbr.rel (%p365) target = $region48
      $region47: #{_lambda_.3} parent=39 // pred_region
        %s368 = smul.u32 8, %s25
        %p369 = scmp.lt.s32.totalorder %s24, 1
        %s370 = scalar_select %p369, %s24, 1
        %p371 = scmp.lt.s32.totalorder %s368, 7
        %s372 = scalar_select %p371, %s368, 7
        %s373 = smul.addr %s370, 8
        %s374 = sadd.s32 %s372, %s373
        %s375 = smul.addr %s374, 4
        %s376 = scalar_lea.vmem %s1, %s375
        %s377 = smul.u32 8, %s25
      $region48: #{_lambda_.3} parent=39 // pred_fallthru
        _
      // Predicated region
      $region49: #{_lambda_.3} parent=39 // pred_check
        %p378 = pneg %p105
      $region50: #{_lambda_.3} parent=39 // pred_check_branch
        %380 = sbr.rel (%p378) target = $region52
      $region51: #{_lambda_.3} parent=39 // pred_region
        %s381 = smul.u32 8, %s25
        %p382 = scmp.lt.s32.totalorder %s24, 1
        %s383 = scalar_select %p382, %s24, 1
        %p384 = scmp.lt.s32.totalorder %s381, 7
        %s385 = scalar_select %p384, %s381, 7
        %s386 = smul.addr %s383, 8
        %s387 = sadd.s32 %s385, %s386
        %s388 = smul.addr %s387, 4
        %s389 = scalar_lea.vmem %s2, %s388
        %s390 = smul.u32 8, %s25
      $region52: #{_lambda_.3} parent=39 // pred_fallthru
        _
      // Predicated region
      $region53: #{_lambda_.3} parent=39 // pred_check
        %p391 = pneg %p133
      $region54: #{_lambda_.3} parent=39 // pred_check_branch
        %393 = sbr.rel (%p391) target = $region56
      $region55: #{_lambda_.3} parent=39 // pred_region
        %s394 = smul.u32 8, %s25
        %p395 = scmp.lt.s32.totalorder %s24, 1
        %s396 = scalar_select %p395, %s24, 1
        %p397 = scmp.lt.s32.totalorder %s394, 7
        %s398 = scalar_select %p397, %s394, 7
        %s399 = smul.addr %s396, 8
        %s400 = sadd.s32 %s398, %s399
        %s401 = smul.addr %s400, 4
        %s402 = scalar_lea.vmem %s3, %s401
        %s403 = smul.u32 8, %s25
      $region56: #{_lambda_.3} parent=39 // pred_fallthru
        _
      // Predicated region
      $region57: #{_lambda_.3} parent=39 // pred_check
        %p404 = pneg %p161
      $region58: #{_lambda_.3} parent=39 // pred_check_branch
        %406 = sbr.rel (%p404) target = $region60
      $region59: #{_lambda_.3} parent=39 // pred_region
        %s407 = smul.u32 8, %s25
        %p408 = scmp.lt.s32.totalorder %s24, 1
        %s409 = scalar_select %p408, %s24, 1
        %p410 = scmp.lt.s32.totalorder %s407, 7
        %s411 = scalar_select %p410, %s407, 7
        %s412 = smul.addr %s409, 8
        %s413 = sadd.s32 %s411, %s412
        %s414 = smul.addr %s413, 8
        %s415 = scalar_lea.vmem %s4, %s414
        %s416 = smul.u32 8, %s25
      $region60: #{_lambda_.3} parent=39 // pred_fallthru
        _
    $region40: #{_lambda_.3} parent=5 // pred_fallthru
      _
    %p417 = scmp.le.s32.totalorder 1, %s17
    %p418 = scmp.lt.s32.totalorder %s17, 3
    %p419 = pnand %p417, %p418
    %p420 = pneg %p419
    // Predicated region
    $region61: #{_lambda_.3} parent=5 // pred_check
      _
    $region62: #{_lambda_.3} parent=5 // pred_check_branch
      %422 = sbr.rel (%p419) target = $region64
    $region63: #{_lambda_.3} parent=5 // pred_region
      %s423 = ssub.s32 %s17, 1
      %p424 = scmp.lt.s32.totalorder %s26, 1
      %s425 = scalar_select %p424, %s26, 1
      %s426 = smul.addr %s425, 4
      %s427 = scalar_lea.vmem %s0, %s426
      %p428 = pneg %p55
      %p429 = pneg %p52
      %s430 = smul.u32 8, %s27
      %p431 = scmp.lt.s32.totalorder %s26, 1
      %s432 = scalar_select %p431, %s26, 1
      %p433 = scmp.lt.s32.totalorder %s430, 7
      %s434 = scalar_select %p433, %s430, 7
      %s435 = smul.addr %s432, 8
      %s436 = sadd.s32 %s434, %s435
      %s437 = smul.addr %s436, 4
      %s438 = scalar_lea.vmem %s1, %s437
      %p439 = pneg %p83
      %p440 = pneg %p80
      %s441 = smul.u32 8, %s27
      %p442 = scmp.lt.s32.totalorder %s26, 1
      %s443 = scalar_select %p442, %s26, 1
      %p444 = scmp.lt.s32.totalorder %s441, 7
      %s445 = scalar_select %p444, %s441, 7
      %s446 = smul.addr %s443, 8
      %s447 = sadd.s32 %s445, %s446
      %s448 = smul.addr %s447, 4
      %s449 = scalar_lea.vmem %s2, %s448
      %p450 = pneg %p111
      %p451 = pneg %p108
      %s452 = smul.u32 8, %s27
      %p453 = scmp.lt.s32.totalorder %s26, 1
      %s454 = scalar_select %p453, %s26, 1
      %p455 = scmp.lt.s32.totalorder %s452, 7
      %s456 = scalar_select %p455, %s452, 7
      %s457 = smul.addr %s454, 8
      %s458 = sadd.s32 %s456, %s457
      %s459 = smul.addr %s458, 4
      %s460 = scalar_lea.vmem %s3, %s459
      %p461 = pneg %p139
      %p462 = pneg %p136
      %s463 = smul.u32 8, %s27
      %p464 = scmp.lt.s32.totalorder %s26, 1
      %s465 = scalar_select %p464, %s26, 1
      %p466 = scmp.lt.s32.totalorder %s463, 7
      %s467 = scalar_select %p466, %s463, 7
      %s468 = smul.addr %s465, 8
      %s469 = sadd.s32 %s467, %s468
      %s470 = smul.addr %s469, 8
      %s471 = scalar_lea.vmem %s4, %s470
      %p472 = pneg %p167
      %p473 = pneg %p164
      %p474 = pneg %p188
      %p475 = pneg %p185
      %p476 = pneg %p209
      %p477 = pneg %p206
      %p478 = pneg %p230
      %p479 = pneg %p227
      %p480 = pneg %p251
      %p481 = pneg %p248
      %p482 = pneg %p272
      %p483 = pneg %p269
      %p484 = pneg %p293
      %p485 = pneg %p290
      %p486 = pneg %p321
      %p487 = pneg %p318
      %s488 = smul.u32 8, %s27
      %p489 = scmp.lt.s32.totalorder %s26, 1
      %s490 = scalar_select %p489, %s26, 1
      %p491 = scmp.lt.s32.totalorder %s488, 7
      %s492 = scalar_select %p491, %s488, 7
      %s493 = smul.addr %s490, 8
      %s494 = sadd.s32 %s492, %s493
      %s495 = smul.addr %s494, 8
      %s496 = scalar_lea.vmem %s11, %s495
      %p497 = scmp.lt.s32.totalorder %s26, 1
      %s498 = scalar_select %p497, %s26, 1
      %s499 = smul.addr %s498, 4
      %s500 = scalar_lea.vmem %s0, %s499
      %s501 = smul.u32 8, %s27
      %p502 = scmp.lt.s32.totalorder %s26, 1
      %s503 = scalar_select %p502, %s26, 1
      %p504 = scmp.lt.s32.totalorder %s501, 7
      %s505 = scalar_select %p504, %s501, 7
      %s506 = smul.addr %s503, 8
      %s507 = sadd.s32 %s505, %s506
      %s508 = smul.addr %s507, 4
      %s509 = scalar_lea.vmem %s1, %s508
      %s510 = smul.u32 8, %s27
      %s511 = smul.u32 8, %s27
      %p512 = scmp.lt.s32.totalorder %s26, 1
      %s513 = scalar_select %p512, %s26, 1
      %p514 = scmp.lt.s32.totalorder %s511, 7
      %s515 = scalar_select %p514, %s511, 7
      %s516 = smul.addr %s513, 8
      %s517 = sadd.s32 %s515, %s516
      %s518 = smul.addr %s517, 4
      %s519 = scalar_lea.vmem %s2, %s518
      %s520 = smul.u32 8, %s27
      %s521 = smul.u32 8, %s27
      %p522 = scmp.lt.s32.totalorder %s26, 1
      %s523 = scalar_select %p522, %s26, 1
      %p524 = scmp.lt.s32.totalorder %s521, 7
      %s525 = scalar_select %p524, %s521, 7
      %s526 = smul.addr %s523, 8
      %s527 = sadd.s32 %s525, %s526
      %s528 = smul.addr %s527, 4
      %s529 = scalar_lea.vmem %s3, %s528
      %s530 = smul.u32 8, %s27
      %s531 = smul.u32 8, %s27
      %p532 = scmp.lt.s32.totalorder %s26, 1
      %s533 = scalar_select %p532, %s26, 1
      %p534 = scmp.lt.s32.totalorder %s531, 7
      %s535 = scalar_select %p534, %s531, 7
      %s536 = smul.addr %s533, 8
      %s537 = sadd.s32 %s535, %s536
      %s538 = smul.addr %s537, 8
      %s539 = scalar_lea.vmem %s4, %s538
      %s540 = smul.u32 8, %s27
      %s541 = smul.u32 8, %s27
      %p542 = scmp.lt.s32.totalorder %s26, 1
      %s543 = scalar_select %p542, %s26, 1
      %p544 = scmp.lt.s32.totalorder %s541, 7
      %s545 = scalar_select %p544, %s541, 7
      %s546 = smul.addr %s543, 8
      %s547 = sadd.s32 %s545, %s546
      %s548 = smul.addr %s547, 8
      %s549 = scalar_lea.vmem %s11, %s548
      %s550 = smul.u32 8, %s27
      %v552 = vld [vmem:[%s500] sm:$0x7]
      %v553 = vld [vmem:[%s509] sm:$0xf]
      %v554 = vld [vmem:[%s509 + $0x4] sm:$0xf]
      %v555 = vld [vmem:[%s509 + $0x8] sm:$0xf]
      %v556 = vld [vmem:[%s509 + $0xc] sm:$0xf]
      %v557 = vld [vmem:[%s509 + $0x10] sm:$0xf]
      %v558 = vld [vmem:[%s509 + $0x14] sm:$0xf]
      %v559 = vld [vmem:[%s509 + $0x18] sm:$0xf]
      %v560 = vld [vmem:[%s509 + $0x1c] sm:$0xf]
      %v561 = vunpack.c.l.bf16 %v553
      %v562 = vunpack.c.l.bf16 %v554
      %v563 = vunpack.c.l.bf16 %v555
      %v564 = vunpack.c.l.bf16 %v556
      %v565 = vunpack.c.l.bf16 %v557
      %v566 = vunpack.c.l.bf16 %v558
      %v567 = vunpack.c.l.bf16 %v559
      %v568 = vunpack.c.l.bf16 %v560
      %v569 = vlaneseq
      %v570 = vshrl.u32 %v569, 7
      %v571 = vsub.s32 0, %v570
      %v572 = vrot.slane %v552, %v571
      %v573 = vmul.f32 %v572, %v561
      %v574 = vmul.f32 %v572, %v562
      %v575 = vmul.f32 %v572, %v563
      %v576 = vmul.f32 %v572, %v564
      %v577 = vmul.f32 %v572, %v565
      %v578 = vmul.f32 %v572, %v566
      %v579 = vmul.f32 %v572, %v567
      %v580 = vmul.f32 %v572, %v568
      %v581 = vld [vmem:[%s519] sm:$0xf]
      %v582 = vld [vmem:[%s519 + $0x4] sm:$0xf]
      %v583 = vld [vmem:[%s519 + $0x8] sm:$0xf]
      %v584 = vld [vmem:[%s519 + $0xc] sm:$0xf]
      %v585 = vld [vmem:[%s519 + $0x10] sm:$0xf]
      %v586 = vld [vmem:[%s519 + $0x14] sm:$0xf]
      %v587 = vld [vmem:[%s519 + $0x18] sm:$0xf]
      %v588 = vld [vmem:[%s519 + $0x1c] sm:$0xf]
      %v589 = vunpack.c.l.bf16 %v581
      %v590 = vunpack.c.l.bf16 %v582
      %v591 = vunpack.c.l.bf16 %v583
      %v592 = vunpack.c.l.bf16 %v584
      %v593 = vunpack.c.l.bf16 %v585
      %v594 = vunpack.c.l.bf16 %v586
      %v595 = vunpack.c.l.bf16 %v587
      %v596 = vunpack.c.l.bf16 %v588
      %v597 = vlaneseq
      %v598 = vshrl.u32 %v597, 7
      %v599 = vsub.s32 1, %v598
      %v600 = vrot.slane %v552, %v599
      %v601 = vmul.f32 %v600, %v589
      %v602 = vmul.f32 %v600, %v590
      %v603 = vmul.f32 %v600, %v591
      %v604 = vmul.f32 %v600, %v592
      %v605 = vmul.f32 %v600, %v593
      %v606 = vmul.f32 %v600, %v594
      %v607 = vmul.f32 %v600, %v595
      %v608 = vmul.f32 %v600, %v596
      %v609 = vadd.f32 %v573, %v601
      %v610 = vadd.f32 %v574, %v602
      %v611 = vadd.f32 %v575, %v603
      %v612 = vadd.f32 %v576, %v604
      %v613 = vadd.f32 %v577, %v605
      %v614 = vadd.f32 %v578, %v606
      %v615 = vadd.f32 %v579, %v607
      %v616 = vadd.f32 %v580, %v608
      %v617 = vld [vmem:[%s529] sm:$0xf]
      %v618 = vld [vmem:[%s529 + $0x4] sm:$0xf]
      %v619 = vld [vmem:[%s529 + $0x8] sm:$0xf]
      %v620 = vld [vmem:[%s529 + $0xc] sm:$0xf]
      %v621 = vld [vmem:[%s529 + $0x10] sm:$0xf]
      %v622 = vld [vmem:[%s529 + $0x14] sm:$0xf]
      %v623 = vld [vmem:[%s529 + $0x18] sm:$0xf]
      %v624 = vld [vmem:[%s529 + $0x1c] sm:$0xf]
      %v625 = vunpack.c.l.bf16 %v617
      %v626 = vunpack.c.l.bf16 %v618
      %v627 = vunpack.c.l.bf16 %v619
      %v628 = vunpack.c.l.bf16 %v620
      %v629 = vunpack.c.l.bf16 %v621
      %v630 = vunpack.c.l.bf16 %v622
      %v631 = vunpack.c.l.bf16 %v623
      %v632 = vunpack.c.l.bf16 %v624
      %v633 = vlaneseq
      %v634 = vshrl.u32 %v633, 7
      %v635 = vsub.s32 2, %v634
      %v636 = vrot.slane %v552, %v635
      %v637 = vmul.f32 %v636, %v625
      %v638 = vmul.f32 %v636, %v626
      %v639 = vmul.f32 %v636, %v627
      %v640 = vmul.f32 %v636, %v628
      %v641 = vmul.f32 %v636, %v629
      %v642 = vmul.f32 %v636, %v630
      %v643 = vmul.f32 %v636, %v631
      %v644 = vmul.f32 %v636, %v632
      %v645 = vadd.f32 %v609, %v637
      %v646 = vadd.f32 %v610, %v638
      %v647 = vadd.f32 %v611, %v639
      %v648 = vadd.f32 %v612, %v640
      %v649 = vadd.f32 %v613, %v641
      %v650 = vadd.f32 %v614, %v642
      %v651 = vadd.f32 %v615, %v643
      %v652 = vadd.f32 %v616, %v644
      %v653 = vld [vmem:[%s539] sm:$0xff]
      %v654 = vld [vmem:[%s539 + $0x8] sm:$0xff]
      %v655 = vld [vmem:[%s539 + $0x10] sm:$0xff]
      %v656 = vld [vmem:[%s539 + $0x18] sm:$0xff]
      %v657 = vld [vmem:[%s539 + $0x20] sm:$0xff]
      %v658 = vld [vmem:[%s539 + $0x28] sm:$0xff]
      %v659 = vld [vmem:[%s539 + $0x30] sm:$0xff]
      %v660 = vld [vmem:[%s539 + $0x38] sm:$0xff]
      %v661 = vadd.f32 %v645, %v653
      %v662 = vadd.f32 %v646, %v654
      %v663 = vadd.f32 %v647, %v655
      %v664 = vadd.f32 %v648, %v656
      %v665 = vadd.f32 %v649, %v657
      %v666 = vadd.f32 %v650, %v658
      %v667 = vadd.f32 %v651, %v659
      %v668 = vadd.f32 %v652, %v660
      %669 = vadd.xlane.f32.xlu0 %v661
      %v670 = vpop.xlane.xlu0 %669
      %671 = vadd.xlane.f32.xlu0 %v662
      %v672 = vpop.xlane.xlu0 %671
      %673 = vadd.xlane.f32.xlu0 %v663
      %v674 = vpop.xlane.xlu0 %673
      %675 = vadd.xlane.f32.xlu0 %v664
      %v676 = vpop.xlane.xlu0 %675
      %677 = vadd.xlane.f32.xlu0 %v665
      %v678 = vpop.xlane.xlu0 %677
      %679 = vadd.xlane.f32.xlu0 %v666
      %v680 = vpop.xlane.xlu0 %679
      %681 = vadd.xlane.f32.xlu0 %v667
      %v682 = vpop.xlane.xlu0 %681
      %683 = vadd.xlane.f32.xlu0 %v668
      %v684 = vpop.xlane.xlu0 %683
      %v685 = vrcp.pop 128.0
      %v686 = vmul.f32 %v670, %v685
      %v687 = vmul.f32 %v672, %v685
      %v688 = vmul.f32 %v674, %v685
      %v689 = vmul.f32 %v676, %v685
      %v690 = vmul.f32 %v678, %v685
      %v691 = vmul.f32 %v680, %v685
      %v692 = vmul.f32 %v682, %v685
      %v693 = vmul.f32 %v684, %v685
      %v694 = vsub.f32 %v661, %v686
      %v695 = vsub.f32 %v662, %v687
      %v696 = vsub.f32 %v663, %v688
      %v697 = vsub.f32 %v664, %v689
      %v698 = vsub.f32 %v665, %v690
      %v699 = vsub.f32 %v666, %v691
      %v700 = vsub.f32 %v667, %v692
      %v701 = vsub.f32 %v668, %v693
      %v702 = vmul.f32 %v694, %v694
      %v703 = vmul.f32 %v695, %v695
      %v704 = vmul.f32 %v696, %v696
      %v705 = vmul.f32 %v697, %v697
      %v706 = vmul.f32 %v698, %v698
      %v707 = vmul.f32 %v699, %v699
      %v708 = vmul.f32 %v700, %v700
      %v709 = vmul.f32 %v701, %v701
      %710 = vadd.xlane.f32.xlu0 %v702
      %v711 = vpop.xlane.xlu0 %710
      %712 = vadd.xlane.f32.xlu0 %v703
      %v713 = vpop.xlane.xlu0 %712
      %714 = vadd.xlane.f32.xlu0 %v704
      %v715 = vpop.xlane.xlu0 %714
      %716 = vadd.xlane.f32.xlu0 %v705
      %v717 = vpop.xlane.xlu0 %716
      %718 = vadd.xlane.f32.xlu0 %v706
      %v719 = vpop.xlane.xlu0 %718
      %720 = vadd.xlane.f32.xlu0 %v707
      %v721 = vpop.xlane.xlu0 %720
      %722 = vadd.xlane.f32.xlu0 %v708
      %v723 = vpop.xlane.xlu0 %722
      %724 = vadd.xlane.f32.xlu0 %v709
      %v725 = vpop.xlane.xlu0 %724
      %v726 = vmul.f32 %v711, %v685
      %v727 = vmul.f32 %v713, %v685
      %v728 = vmul.f32 %v715, %v685
      %v729 = vmul.f32 %v717, %v685
      %v730 = vmul.f32 %v719, %v685
      %v731 = vmul.f32 %v721, %v685
      %v732 = vmul.f32 %v723, %v685
      %v733 = vmul.f32 %v725, %v685
      %v734 = vadd.f32 %v726, 1e-05
      %v735 = vadd.f32 %v727, 1e-05
      %v736 = vadd.f32 %v728, 1e-05
      %v737 = vadd.f32 %v729, 1e-05
      %v738 = vadd.f32 %v730, 1e-05
      %v739 = vadd.f32 %v731, 1e-05
      %v740 = vadd.f32 %v732, 1e-05
      %v741 = vadd.f32 %v733, 1e-05
      %v742 = vrsqrt.pop %v734
      %v743 = vrsqrt.pop %v735
      %v744 = vrsqrt.pop %v736
      %v745 = vrsqrt.pop %v737
      %v746 = vrsqrt.pop %v738
      %v747 = vrsqrt.pop %v739
      %v748 = vrsqrt.pop %v740
      %v749 = vrsqrt.pop %v741
      %v750 = vmul.f32 %v694, %v742
      %v751 = vmul.f32 %v695, %v743
      %v752 = vmul.f32 %v696, %v744
      %v753 = vmul.f32 %v697, %v745
      %v754 = vmul.f32 %v698, %v746
      %v755 = vmul.f32 %v699, %v747
      %v756 = vmul.f32 %v700, %v748
      %v757 = vmul.f32 %v701, %v749
      %v758 = vld [vmem:[%s5] sm:$0x1]
      %v760 = vlaneseq
      %v761 = vshrl.u32 %v760, 7
      %v762 = vsub.s32 0, %v761
      %v763 = vrot.slane %v758, %v762
      %v765 = vmul.f32 %v750, %v763
      %v766 = vmul.f32 %v751, %v763
      %v767 = vmul.f32 %v752, %v763
      %v768 = vmul.f32 %v753, %v763
      %v769 = vmul.f32 %v754, %v763
      %v770 = vmul.f32 %v755, %v763
      %v771 = vmul.f32 %v756, %v763
      %v772 = vmul.f32 %v757, %v763
      %v773 = vld [vmem:[%s6] sm:$0x1]
      %v775 = vlaneseq
      %v776 = vshrl.u32 %v775, 7
      %v777 = vsub.s32 0, %v776
      %v778 = vrot.slane %v773, %v777
      %v780 = vadd.f32 %v765, %v778
      %v781 = vadd.f32 %v766, %v778
      %v782 = vadd.f32 %v767, %v778
      %v783 = vadd.f32 %v768, %v778
      %v784 = vadd.f32 %v769, %v778
      %v785 = vadd.f32 %v770, %v778
      %v786 = vadd.f32 %v771, %v778
      %v787 = vadd.f32 %v772, %v778
      %v788 = vpack.c.bf16 %v781, %v780
      %v789 = vpack.c.bf16 %v783, %v782
      %v790 = vpack.c.bf16 %v785, %v784
      %v791 = vpack.c.bf16 %v787, %v786
      %v792 = vld [vmem:[%s7] sm:$0xff]
      %v793 = vld [vmem:[%s7 + $0x8] sm:$0xff]
      %v794 = vld [vmem:[%s7 + $0x10] sm:$0xff]
      %v795 = vld [vmem:[%s7 + $0x18] sm:$0xff]
      %v796 = vld [vmem:[%s7 + $0x20] sm:$0xff]
      %v797 = vld [vmem:[%s7 + $0x28] sm:$0xff]
      %v798 = vld [vmem:[%s7 + $0x30] sm:$0xff]
      %v799 = vld [vmem:[%s7 + $0x38] sm:$0xff]
      %v800 = vld [vmem:[%s7 + $0x40] sm:$0xff]
      %v801 = vld [vmem:[%s7 + $0x48] sm:$0xff]
      %v802 = vld [vmem:[%s7 + $0x50] sm:$0xff]
      %v803 = vld [vmem:[%s7 + $0x58] sm:$0xff]
      %v804 = vld [vmem:[%s7 + $0x60] sm:$0xff]
      %v805 = vld [vmem:[%s7 + $0x68] sm:$0xff]
      %v806 = vld [vmem:[%s7 + $0x70] sm:$0xff]
      %v807 = vld [vmem:[%s7 + $0x78] sm:$0xff]
      %v808 = vld [vmem:[%s7 + $0x80] sm:$0xff]
      %v809 = vld [vmem:[%s7 + $0x88] sm:$0xff]
      %v810 = vld [vmem:[%s7 + $0x90] sm:$0xff]
      %v811 = vld [vmem:[%s7 + $0x98] sm:$0xff]
      %v812 = vld [vmem:[%s7 + $0xa0] sm:$0xff]
      %v813 = vld [vmem:[%s7 + $0xa8] sm:$0xff]
      %v814 = vld [vmem:[%s7 + $0xb0] sm:$0xff]
      %v815 = vld [vmem:[%s7 + $0xb8] sm:$0xff]
      %v816 = vld [vmem:[%s7 + $0xc0] sm:$0xff]
      %v817 = vld [vmem:[%s7 + $0xc8] sm:$0xff]
      %v818 = vld [vmem:[%s7 + $0xd0] sm:$0xff]
      %v819 = vld [vmem:[%s7 + $0xd8] sm:$0xff]
      %v820 = vld [vmem:[%s7 + $0xe0] sm:$0xff]
      %v821 = vld [vmem:[%s7 + $0xe8] sm:$0xff]
      %v822 = vld [vmem:[%s7 + $0xf0] sm:$0xff]
      %v823 = vld [vmem:[%s7 + $0xf8] sm:$0xff]
      %v824 = vld [vmem:[%s8] sm:$0xf]
      %v826 = vlaneseq
      %v827 = vshrl.u32 %v826, 7
      %v828 = vsub.s32 0, %v827
      %v829 = vrot.slane %v824, %v828
      %v830 = vlaneseq
      %v831 = vshrl.u32 %v830, 7
      %v832 = vsub.s32 1, %v831
      %v833 = vrot.slane %v824, %v832
      %v834 = vlaneseq
      %v835 = vshrl.u32 %v834, 7
      %v836 = vsub.s32 2, %v835
      %v837 = vrot.slane %v824, %v836
      %v838 = vlaneseq
      %v839 = vshrl.u32 %v838, 7
      %v840 = vsub.s32 3, %v839
      %v841 = vrot.slane %v824, %v840
      %v878 = vunpack.c.l.b16 %v792
      %v879 = vunpack.c.h.b16 %v792
      %v880 = vunpack.c.l.b16 %v793
      %v881 = vunpack.c.h.b16 %v793
      %v882 = vunpack.c.l.b16 %v794
      %v883 = vunpack.c.h.b16 %v794
      %v884 = vunpack.c.l.b16 %v795
      %v885 = vunpack.c.h.b16 %v795
      %v886 = vunpack.c.l.b16 %v796
      %v887 = vunpack.c.h.b16 %v796
      %v888 = vunpack.c.l.b16 %v797
      %v889 = vunpack.c.h.b16 %v797
      %v890 = vunpack.c.l.b16 %v798
      %v891 = vunpack.c.h.b16 %v798
      %v892 = vunpack.c.l.b16 %v799
      %v893 = vunpack.c.h.b16 %v799
      %v894 = vunpack.c.l.b16 %v800
      %v895 = vunpack.c.h.b16 %v800
      %v896 = vunpack.c.l.b16 %v801
      %v897 = vunpack.c.h.b16 %v801
      %v898 = vunpack.c.l.b16 %v802
      %v899 = vunpack.c.h.b16 %v802
      %v900 = vunpack.c.l.b16 %v803
      %v901 = vunpack.c.h.b16 %v803
      %v902 = vunpack.c.l.b16 %v804
      %v903 = vunpack.c.h.b16 %v804
      %v904 = vunpack.c.l.b16 %v805
      %v905 = vunpack.c.h.b16 %v805
      %v906 = vunpack.c.l.b16 %v806
      %v907 = vunpack.c.h.b16 %v806
      %v908 = vunpack.c.l.b16 %v807
      %v909 = vunpack.c.h.b16 %v807
      %v910 = vunpack.c.l.b16 %v808
      %v911 = vunpack.c.h.b16 %v808
      %v912 = vunpack.c.l.b16 %v809
      %v913 = vunpack.c.h.b16 %v809
      %v914 = vunpack.c.l.b16 %v810
      %v915 = vunpack.c.h.b16 %v810
      %v916 = vunpack.c.l.b16 %v811
      %v917 = vunpack.c.h.b16 %v811
      %v918 = vunpack.c.l.b16 %v812
      %v919 = vunpack.c.h.b16 %v812
      %v920 = vunpack.c.l.b16 %v813
      %v921 = vunpack.c.h.b16 %v813
      %v922 = vunpack.c.l.b16 %v814
      %v923 = vunpack.c.h.b16 %v814
      %v924 = vunpack.c.l.b16 %v815
      %v925 = vunpack.c.h.b16 %v815
      %v926 = vunpack.c.l.b16 %v816
      %v927 = vunpack.c.h.b16 %v816
      %v928 = vunpack.c.l.b16 %v817
      %v929 = vunpack.c.h.b16 %v817
      %v930 = vunpack.c.l.b16 %v818
      %v931 = vunpack.c.h.b16 %v818
      %v932 = vunpack.c.l.b16 %v819
      %v933 = vunpack.c.h.b16 %v819
      %v934 = vunpack.c.l.b16 %v820
      %v935 = vunpack.c.h.b16 %v820
      %v936 = vunpack.c.l.b16 %v821
      %v937 = vunpack.c.h.b16 %v821
      %v938 = vunpack.c.l.b16 %v822
      %v939 = vunpack.c.h.b16 %v822
      %v940 = vunpack.c.l.b16 %v823
      %v941 = vunpack.c.h.b16 %v823
      %v942 = vpack.c.b16 %v882, %v878
      %v943 = vpack.c.b16 %v883, %v879
      %v944 = vpack.c.b16 %v884, %v880
      %v945 = vpack.c.b16 %v885, %v881
      %v946 = vpack.c.b16 %v890, %v886
      %v947 = vpack.c.b16 %v891, %v887
      %v948 = vpack.c.b16 %v892, %v888
      %v949 = vpack.c.b16 %v893, %v889
      %v950 = vpack.c.b16 %v898, %v894
      %v951 = vpack.c.b16 %v899, %v895
      %v952 = vpack.c.b16 %v900, %v896
      %v953 = vpack.c.b16 %v901, %v897
      %v954 = vpack.c.b16 %v906, %v902
      %v955 = vpack.c.b16 %v907, %v903
      %v956 = vpack.c.b16 %v908, %v904
      %v957 = vpack.c.b16 %v909, %v905
      %v958 = vpack.c.b16 %v914, %v910
      %v959 = vpack.c.b16 %v915, %v911
      %v960 = vpack.c.b16 %v916, %v912
      %v961 = vpack.c.b16 %v917, %v913
      %v962 = vpack.c.b16 %v922, %v918
      %v963 = vpack.c.b16 %v923, %v919
      %v964 = vpack.c.b16 %v924, %v920
      %v965 = vpack.c.b16 %v925, %v921
      %v966 = vpack.c.b16 %v930, %v926
      %v967 = vpack.c.b16 %v931, %v927
      %v968 = vpack.c.b16 %v932, %v928
      %v969 = vpack.c.b16 %v933, %v929
      %v970 = vpack.c.b16 %v938, %v934
      %v971 = vpack.c.b16 %v939, %v935
      %v972 = vpack.c.b16 %v940, %v936
      %v973 = vpack.c.b16 %v941, %v937
      %1006 = vmatprep.subr.bf16.mxu0 %v943
      %1007 = vmatpush1.bf16.msra.mxu0 %v942
      %1008 = vmatprep.subr.bf16.mxu0 %v947
      %1009 = vmatpush1.bf16.msra.mxu0 %v946
      %1010 = vmatprep.subr.bf16.mxu0 %v951
      %1011 = vmatpush1.bf16.msra.mxu0 %v950
      %1012 = vmatprep.subr.bf16.mxu0 %v955
      %1013 = vmatpush1.bf16.msra.mxu0 %v954
      %1014 = vmatprep.subr.bf16.mxu0 %v959
      %1015 = vmatpush1.bf16.msra.mxu0 %v958
      %1016 = vmatprep.subr.bf16.mxu0 %v963
      %1017 = vmatpush1.bf16.msra.mxu0 %v962
      %1018 = vmatprep.subr.bf16.mxu0 %v967
      %1019 = vmatpush1.bf16.msra.mxu0 %v966
      %1020 = vmatprep.subr.bf16.mxu0 %v971
      %1021 = vmatpush1.bf16.msra.mxu0 %v970
      %1022 = vmatprep.subr.bf16.mxu0 0
      %1023 = vmatpush1.bf16.msra.mxu0 0
      %1024 = vmatprep.subr.bf16.mxu0 0
      %1025 = vmatpush1.bf16.msra.mxu0 0
      %1026 = vmatprep.subr.bf16.mxu0 0
      %1027 = vmatpush1.bf16.msra.mxu0 0
      %1028 = vmatprep.subr.bf16.mxu0 0
      %1029 = vmatpush1.bf16.msra.mxu0 0
      %1030 = vmatprep.subr.bf16.mxu0 0
      %1031 = vmatpush1.bf16.msra.mxu0 0
      %1032 = vmatprep.subr.bf16.mxu0 0
      %1033 = vmatpush1.bf16.msra.mxu0 0
      %1034 = vmatprep.subr.bf16.mxu0 0
      %1035 = vmatpush1.bf16.msra.mxu0 0
      %1036 = vmatprep.subr.bf16.mxu0 0
      %1037 = vmatpush1.bf16.msra.mxu0 0
      %1038 = vmatprep.mubr.bf16.mxu0 0
      %1039 = vmatmul.mubr.bf16.gmra.mrb[0].mxu0 %v788
      %v1040 = vpop.f32.mrb[0].mxu0
      %v1041 = vadd.f32 %v829, %v1040
      %v1042 = vpop.f32.mrb[0].mxu0
      %v1043 = vadd.f32 %v833, %v1042
      %v1044 = vpop.f32.mrb[0].mxu0
      %v1045 = vadd.f32 %v829, %v1044
      %v1046 = vpop.f32.mrb[0].mxu0
      %v1047 = vadd.f32 %v833, %v1046
      %1048 = vmatprep.mubr.bf16.mxu0 0
      %1049 = vmatmul.mubr.bf16.gmra.mrb[0].mxu0 %v789
      %v1050 = vpop.f32.mrb[0].mxu0
      %v1051 = vadd.f32 %v829, %v1050
      %v1052 = vpop.f32.mrb[0].mxu0
      %v1053 = vadd.f32 %v833, %v1052
      %v1054 = vpop.f32.mrb[0].mxu0
      %v1055 = vadd.f32 %v829, %v1054
      %v1056 = vpop.f32.mrb[0].mxu0
      %v1057 = vadd.f32 %v833, %v1056
      %1058 = vmatprep.mubr.bf16.mxu0 0
      %1059 = vmatmul.mubr.bf16.gmra.mrb[0].mxu0 %v790
      %v1060 = vpop.f32.mrb[0].mxu0
      %v1061 = vadd.f32 %v829, %v1060
      %v1062 = vpop.f32.mrb[0].mxu0
      %v1063 = vadd.f32 %v833, %v1062
      %v1064 = vpop.f32.mrb[0].mxu0
      %v1065 = vadd.f32 %v829, %v1064
      %v1066 = vpop.f32.mrb[0].mxu0
      %v1067 = vadd.f32 %v833, %v1066
      %1068 = vmatprep.mubr.bf16.mxu0 0
      %1069 = vmatmul.mubr.bf16.gmra.mrb[0].mxu0 %v791
      %v1070 = vpop.f32.mrb[0].mxu0
      %v1071 = vadd.f32 %v829, %v1070
      %v1072 = vpop.f32.mrb[0].mxu0
      %v1073 = vadd.f32 %v833, %v1072
      %v1074 = vpop.f32.mrb[0].mxu0
      %v1075 = vadd.f32 %v829, %v1074
      %v1076 = vpop.f32.mrb[0].mxu0
      %v1077 = vadd.f32 %v833, %v1076
      %1078 = vdwg.mxu0
      %1079 = vmatprep.subr.bf16.mxu0 %v945
      %1080 = vmatpush1.bf16.msra.mxu0 %v944
      %1081 = vmatprep.subr.bf16.mxu0 %v949
      %1082 = vmatpush1.bf16.msra.mxu0 %v948
      %1083 = vmatprep.subr.bf16.mxu0 %v953
      %1084 = vmatpush1.bf16.msra.mxu0 %v952
      %1085 = vmatprep.subr.bf16.mxu0 %v957
      %1086 = vmatpush1.bf16.msra.mxu0 %v956
      %1087 = vmatprep.subr.bf16.mxu0 %v961
      %1088 = vmatpush1.bf16.msra.mxu0 %v960
      %1089 = vmatprep.subr.bf16.mxu0 %v965
      %1090 = vmatpush1.bf16.msra.mxu0 %v964
      %1091 = vmatprep.subr.bf16.mxu0 %v969
      %1092 = vmatpush1.bf16.msra.mxu0 %v968
      %1093 = vmatprep.subr.bf16.mxu0 %v973
      %1094 = vmatpush1.bf16.msra.mxu0 %v972
      %1095 = vmatprep.subr.bf16.mxu0 0
      %1096 = vmatpush1.bf16.msra.mxu0 0
      %1097 = vmatprep.subr.bf16.mxu0 0
      %1098 = vmatpush1.bf16.msra.mxu0 0
      %1099 = vmatprep.subr.bf16.mxu0 0
      %1100 = vmatpush1.bf16.msra.mxu0 0
      %1101 = vmatprep.subr.bf16.mxu0 0
      %1102 = vmatpush1.bf16.msra.mxu0 0
      %1103 = vmatprep.subr.bf16.mxu0 0
      %1104 = vmatpush1.bf16.msra.mxu0 0
      %1105 = vmatprep.subr.bf16.mxu0 0
      %1106 = vmatpush1.bf16.msra.mxu0 0
      %1107 = vmatprep.subr.bf16.mxu0 0
      %1108 = vmatpush1.bf16.msra.mxu0 0
      %1109 = vmatprep.subr.bf16.mxu0 0
      %1110 = vmatpush1.bf16.msra.mxu0 0
      %1111 = vmatprep.mubr.bf16.mxu0 0
      %1112 = vmatmul.mubr.bf16.gmra.mrb[0].mxu0 %v788
      %v1113 = vpop.f32.mrb[0].mxu0
      %v1114 = vadd.f32 %v837, %v1113
      %v1115 = vpop.f32.mrb[0].mxu0
      %v1116 = vadd.f32 %v841, %v1115
      %v1117 = vpop.f32.mrb[0].mxu0
      %v1118 = vadd.f32 %v837, %v1117
      %v1119 = vpop.f32.mrb[0].mxu0
      %v1120 = vadd.f32 %v841, %v1119
      %1121 = vmatprep.mubr.bf16.mxu0 0
      %1122 = vmatmul.mubr.bf16.gmra.mrb[0].mxu0 %v789
      %v1123 = vpop.f32.mrb[0].mxu0
      %v1124 = vadd.f32 %v837, %v1123
      %v1125 = vpop.f32.mrb[0].mxu0
      %v1126 = vadd.f32 %v841, %v1125
      %v1127 = vpop.f32.mrb[0].mxu0
      %v1128 = vadd.f32 %v837, %v1127
      %v1129 = vpop.f32.mrb[0].mxu0
      %v1130 = vadd.f32 %v841, %v1129
      %1131 = vmatprep.mubr.bf16.mxu0 0
      %1132 = vmatmul.mubr.bf16.gmra.mrb[0].mxu0 %v790
      %v1133 = vpop.f32.mrb[0].mxu0
      %v1134 = vadd.f32 %v837, %v1133
      %v1135 = vpop.f32.mrb[0].mxu0
      %v1136 = vadd.f32 %v841, %v1135
      %v1137 = vpop.f32.mrb[0].mxu0
      %v1138 = vadd.f32 %v837, %v1137
      %v1139 = vpop.f32.mrb[0].mxu0
      %v1140 = vadd.f32 %v841, %v1139
      %1141 = vmatprep.mubr.bf16.mxu0 0
      %1142 = vmatmul.mubr.bf16.gmra.mrb[0].mxu0 %v791
      %v1143 = vpop.f32.mrb[0].mxu0
      %v1144 = vadd.f32 %v837, %v1143
      %v1145 = vpop.f32.mrb[0].mxu0
      %v1146 = vadd.f32 %v841, %v1145
      %v1147 = vpop.f32.mrb[0].mxu0
      %v1148 = vadd.f32 %v837, %v1147
      %v1149 = vpop.f32.mrb[0].mxu0
      %v1150 = vadd.f32 %v841, %v1149
      %1151 = vdwg.mxu0
      %v1152 = vmul.f32 %v1041, 0.5
      %v1153 = vmul.f32 %v1043, 0.5
      %v1154 = vmul.f32 %v1114, 0.5
      %v1155 = vmul.f32 %v1116, 0.5
      %v1156 = vmul.f32 %v1045, 0.5
      %v1157 = vmul.f32 %v1047, 0.5
      %v1158 = vmul.f32 %v1118, 0.5
      %v1159 = vmul.f32 %v1120, 0.5
      %v1160 = vmul.f32 %v1051, 0.5
      %v1161 = vmul.f32 %v1053, 0.5
      %v1162 = vmul.f32 %v1124, 0.5
      %v1163 = vmul.f32 %v1126, 0.5
      %v1164 = vmul.f32 %v1055, 0.5
      %v1165 = vmul.f32 %v1057, 0.5
      %v1166 = vmul.f32 %v1128, 0.5
      %v1167 = vmul.f32 %v1130, 0.5
      %v1168 = vmul.f32 %v1061, 0.5
      %v1169 = vmul.f32 %v1063, 0.5
      %v1170 = vmul.f32 %v1134, 0.5
      %v1171 = vmul.f32 %v1136, 0.5
      %v1172 = vmul.f32 %v1065, 0.5
      %v1173 = vmul.f32 %v1067, 0.5
      %v1174 = vmul.f32 %v1138, 0.5
      %v1175 = vmul.f32 %v1140, 0.5
      %v1176 = vmul.f32 %v1071, 0.5
      %v1177 = vmul.f32 %v1073, 0.5
      %v1178 = vmul.f32 %v1144, 0.5
      %v1179 = vmul.f32 %v1146, 0.5
      %v1180 = vmul.f32 %v1075, 0.5
      %v1181 = vmul.f32 %v1077, 0.5
      %v1182 = vmul.f32 %v1148, 0.5
      %v1183 = vmul.f32 %v1150, 0.5
      %v1184 = vmul.f32 %v1041, 0.70710677
      %v1185 = vmul.f32 %v1043, 0.70710677
      %v1186 = vmul.f32 %v1114, 0.70710677
      %v1187 = vmul.f32 %v1116, 0.70710677
      %v1188 = vmul.f32 %v1045, 0.70710677
      %v1189 = vmul.f32 %v1047, 0.70710677
      %v1190 = vmul.f32 %v1118, 0.70710677
      %v1191 = vmul.f32 %v1120, 0.70710677
      %v1192 = vmul.f32 %v1051, 0.70710677
      %v1193 = vmul.f32 %v1053, 0.70710677
      %v1194 = vmul.f32 %v1124, 0.70710677
      %v1195 = vmul.f32 %v1126, 0.70710677
      %v1196 = vmul.f32 %v1055, 0.70710677
      %v1197 = vmul.f32 %v1057, 0.70710677
      %v1198 = vmul.f32 %v1128, 0.70710677
      %v1199 = vmul.f32 %v1130, 0.70710677
      %v1200 = vmul.f32 %v1061, 0.70710677
      %v1201 = vmul.f32 %v1063, 0.70710677
      %v1202 = vmul.f32 %v1134, 0.70710677
      %v1203 = vmul.f32 %v1136, 0.70710677
      %v1204 = vmul.f32 %v1065, 0.70710677
      %v1205 = vmul.f32 %v1067, 0.70710677
      %v1206 = vmul.f32 %v1138, 0.70710677
      %v1207 = vmul.f32 %v1140, 0.70710677
      %v1208 = vmul.f32 %v1071, 0.70710677
      %v1209 = vmul.f32 %v1073, 0.70710677
      %v1210 = vmul.f32 %v1144, 0.70710677
      %v1211 = vmul.f32 %v1146, 0.70710677
      %v1212 = vmul.f32 %v1075, 0.70710677
      %v1213 = vmul.f32 %v1077, 0.70710677
      %v1214 = vmul.f32 %v1148, 0.70710677
      %v1215 = vmul.f32 %v1150, 0.70710677
      %v1216 = verf.f32.pop %v1184
      %v1217 = verf.f32.pop %v1185
      %v1218 = verf.f32.pop %v1186
      %v1219 = verf.f32.pop %v1187
      %v1220 = verf.f32.pop %v1188
      %v1221 = verf.f32.pop %v1189
      %v1222 = verf.f32.pop %v1190
      %v1223 = verf.f32.pop %v1191
      %v1224 = verf.f32.pop %v1192
      %v1225 = verf.f32.pop %v1193
      %v1226 = verf.f32.pop %v1194
      %v1227 = verf.f32.pop %v1195
      %v1228 = verf.f32.pop %v1196
      %v1229 = verf.f32.pop %v1197
      %v1230 = verf.f32.pop %v1198
      %v1231 = verf.f32.pop %v1199
      %v1232 = verf.f32.pop %v1200
      %v1233 = verf.f32.pop %v1201
      %v1234 = verf.f32.pop %v1202
      %v1235 = verf.f32.pop %v1203
      %v1236 = verf.f32.pop %v1204
      %v1237 = verf.f32.pop %v1205
      %v1238 = verf.f32.pop %v1206
      %v1239 = verf.f32.pop %v1207
      %v1240 = verf.f32.pop %v1208
      %v1241 = verf.f32.pop %v1209
      %v1242 = verf.f32.pop %v1210
      %v1243 = verf.f32.pop %v1211
      %v1244 = verf.f32.pop %v1212
      %v1245 = verf.f32.pop %v1213
      %v1246 = verf.f32.pop %v1214
      %v1247 = verf.f32.pop %v1215
      %v1248 = vadd.f32 %v1216, 1.0
      %v1249 = vadd.f32 %v1217, 1.0
      %v1250 = vadd.f32 %v1218, 1.0
      %v1251 = vadd.f32 %v1219, 1.0
      %v1252 = vadd.f32 %v1220, 1.0
      %v1253 = vadd.f32 %v1221, 1.0
      %v1254 = vadd.f32 %v1222, 1.0
      %v1255 = vadd.f32 %v1223, 1.0
      %v1256 = vadd.f32 %v1224, 1.0
      %v1257 = vadd.f32 %v1225, 1.0
      %v1258 = vadd.f32 %v1226, 1.0
      %v1259 = vadd.f32 %v1227, 1.0
      %v1260 = vadd.f32 %v1228, 1.0
      %v1261 = vadd.f32 %v1229, 1.0
      %v1262 = vadd.f32 %v1230, 1.0
      %v1263 = vadd.f32 %v1231, 1.0
      %v1264 = vadd.f32 %v1232, 1.0
      %v1265 = vadd.f32 %v1233, 1.0
      %v1266 = vadd.f32 %v1234, 1.0
      %v1267 = vadd.f32 %v1235, 1.0
      %v1268 = vadd.f32 %v1236, 1.0
      %v1269 = vadd.f32 %v1237, 1.0
      %v1270 = vadd.f32 %v1238, 1.0
      %v1271 = vadd.f32 %v1239, 1.0
      %v1272 = vadd.f32 %v1240, 1.0
      %v1273 = vadd.f32 %v1241, 1.0
      %v1274 = vadd.f32 %v1242, 1.0
      %v1275 = vadd.f32 %v1243, 1.0
      %v1276 = vadd.f32 %v1244, 1.0
      %v1277 = vadd.f32 %v1245, 1.0
      %v1278 = vadd.f32 %v1246, 1.0
      %v1279 = vadd.f32 %v1247, 1.0
      %v1280 = vmul.f32 %v1152, %v1248
      %v1281 = vmul.f32 %v1153, %v1249
      %v1282 = vmul.f32 %v1154, %v1250
      %v1283 = vmul.f32 %v1155, %v1251
      %v1284 = vmul.f32 %v1156, %v1252
      %v1285 = vmul.f32 %v1157, %v1253
      %v1286 = vmul.f32 %v1158, %v1254
      %v1287 = vmul.f32 %v1159, %v1255
      %v1288 = vmul.f32 %v1160, %v1256
      %v1289 = vmul.f32 %v1161, %v1257
      %v1290 = vmul.f32 %v1162, %v1258
      %v1291 = vmul.f32 %v1163, %v1259
      %v1292 = vmul.f32 %v1164, %v1260
      %v1293 = vmul.f32 %v1165, %v1261
      %v1294 = vmul.f32 %v1166, %v1262
      %v1295 = vmul.f32 %v1167, %v1263
      %v1296 = vmul.f32 %v1168, %v1264
      %v1297 = vmul.f32 %v1169, %v1265
      %v1298 = vmul.f32 %v1170, %v1266
      %v1299 = vmul.f32 %v1171, %v1267
      %v1300 = vmul.f32 %v1172, %v1268
      %v1301 = vmul.f32 %v1173, %v1269
      %v1302 = vmul.f32 %v1174, %v1270
      %v1303 = vmul.f32 %v1175, %v1271
      %v1304 = vmul.f32 %v1176, %v1272
      %v1305 = vmul.f32 %v1177, %v1273
      %v1306 = vmul.f32 %v1178, %v1274
      %v1307 = vmul.f32 %v1179, %v1275
      %v1308 = vmul.f32 %v1180, %v1276
      %v1309 = vmul.f32 %v1181, %v1277
      %v1310 = vmul.f32 %v1182, %v1278
      %v1311 = vmul.f32 %v1183, %v1279
      %v1312 = vpack.c.bf16 %v1284, %v1280
      %v1313 = vpack.c.bf16 %v1285, %v1281
      %v1314 = vpack.c.bf16 %v1286, %v1282
      %v1315 = vpack.c.bf16 %v1287, %v1283
      %v1316 = vpack.c.bf16 %v1292, %v1288
      %v1317 = vpack.c.bf16 %v1293, %v1289
      %v1318 = vpack.c.bf16 %v1294, %v1290
      %v1319 = vpack.c.bf16 %v1295, %v1291
      %v1320 = vpack.c.bf16 %v1300, %v1296
      %v1321 = vpack.c.bf16 %v1301, %v1297
      %v1322 = vpack.c.bf16 %v1302, %v1298
      %v1323 = vpack.c.bf16 %v1303, %v1299
      %v1324 = vpack.c.bf16 %v1308, %v1304
      %v1325 = vpack.c.bf16 %v1309, %v1305
      %v1326 = vpack.c.bf16 %v1310, %v1306
      %v1327 = vpack.c.bf16 %v1311, %v1307
      %v1328 = vld [vmem:[%s9] sm:$0xf]
      %v1329 = vld [vmem:[%s9 + $0x4] sm:$0xf]
      %v1330 = vld [vmem:[%s9 + $0x8] sm:$0xf]
      %v1331 = vld [vmem:[%s9 + $0xc] sm:$0xf]
      %v1332 = vld [vmem:[%s9 + $0x10] sm:$0xf]
      %v1333 = vld [vmem:[%s9 + $0x14] sm:$0xf]
      %v1334 = vld [vmem:[%s9 + $0x18] sm:$0xf]
      %v1335 = vld [vmem:[%s9 + $0x1c] sm:$0xf]
      %v1336 = vld [vmem:[%s9 + $0x20] sm:$0xf]
      %v1337 = vld [vmem:[%s9 + $0x24] sm:$0xf]
      %v1338 = vld [vmem:[%s9 + $0x28] sm:$0xf]
      %v1339 = vld [vmem:[%s9 + $0x2c] sm:$0xf]
      %v1340 = vld [vmem:[%s9 + $0x30] sm:$0xf]
      %v1341 = vld [vmem:[%s9 + $0x34] sm:$0xf]
      %v1342 = vld [vmem:[%s9 + $0x38] sm:$0xf]
      %v1343 = vld [vmem:[%s9 + $0x3c] sm:$0xf]
      %v1344 = vld [vmem:[%s9 + $0x40] sm:$0xf]
      %v1345 = vld [vmem:[%s9 + $0x44] sm:$0xf]
      %v1346 = vld [vmem:[%s9 + $0x48] sm:$0xf]
      %v1347 = vld [vmem:[%s9 + $0x4c] sm:$0xf]
      %v1348 = vld [vmem:[%s9 + $0x50] sm:$0xf]
      %v1349 = vld [vmem:[%s9 + $0x54] sm:$0xf]
      %v1350 = vld [vmem:[%s9 + $0x58] sm:$0xf]
      %v1351 = vld [vmem:[%s9 + $0x5c] sm:$0xf]
      %v1352 = vld [vmem:[%s9 + $0x60] sm:$0xf]
      %v1353 = vld [vmem:[%s9 + $0x64] sm:$0xf]
      %v1354 = vld [vmem:[%s9 + $0x68] sm:$0xf]
      %v1355 = vld [vmem:[%s9 + $0x6c] sm:$0xf]
      %v1356 = vld [vmem:[%s9 + $0x70] sm:$0xf]
      %v1357 = vld [vmem:[%s9 + $0x74] sm:$0xf]
      %v1358 = vld [vmem:[%s9 + $0x78] sm:$0xf]
      %v1359 = vld [vmem:[%s9 + $0x7c] sm:$0xf]
      %v1360 = vld [vmem:[%s9 + $0x80] sm:$0xf]
      %v1361 = vld [vmem:[%s9 + $0x84] sm:$0xf]
      %v1362 = vld [vmem:[%s9 + $0x88] sm:$0xf]
      %v1363 = vld [vmem:[%s9 + $0x8c] sm:$0xf]
      %v1364 = vld [vmem:[%s9 + $0x90] sm:$0xf]
      %v1365 = vld [vmem:[%s9 + $0x94] sm:$0xf]
      %v1366 = vld [vmem:[%s9 + $0x98] sm:$0xf]
      %v1367 = vld [vmem:[%s9 + $0x9c] sm:$0xf]
      %v1368 = vld [vmem:[%s9 + $0xa0] sm:$0xf]
      %v1369 = vld [vmem:[%s9 + $0xa4] sm:$0xf]
      %v1370 = vld [vmem:[%s9 + $0xa8] sm:$0xf]
      %v1371 = vld [vmem:[%s9 + $0xac] sm:$0xf]
      %v1372 = vld [vmem:[%s9 + $0xb0] sm:$0xf]
      %v1373 = vld [vmem:[%s9 + $0xb4] sm:$0xf]
      %v1374 = vld [vmem:[%s9 + $0xb8] sm:$0xf]
      %v1375 = vld [vmem:[%s9 + $0xbc] sm:$0xf]
      %v1376 = vld [vmem:[%s9 + $0xc0] sm:$0xf]
      %v1377 = vld [vmem:[%s9 + $0xc4] sm:$0xf]
      %v1378 = vld [vmem:[%s9 + $0xc8] sm:$0xf]
      %v1379 = vld [vmem:[%s9 + $0xcc] sm:$0xf]
      %v1380 = vld [vmem:[%s9 + $0xd0] sm:$0xf]
      %v1381 = vld [vmem:[%s9 + $0xd4] sm:$0xf]
      %v1382 = vld [vmem:[%s9 + $0xd8] sm:$0xf]
      %v1383 = vld [vmem:[%s9 + $0xdc] sm:$0xf]
      %v1384 = vld [vmem:[%s9 + $0xe0] sm:$0xf]
      %v1385 = vld [vmem:[%s9 + $0xe4] sm:$0xf]
      %v1386 = vld [vmem:[%s9 + $0xe8] sm:$0xf]
      %v1387 = vld [vmem:[%s9 + $0xec] sm:$0xf]
      %v1388 = vld [vmem:[%s9 + $0xf0] sm:$0xf]
      %v1389 = vld [vmem:[%s9 + $0xf4] sm:$0xf]
      %v1390 = vld [vmem:[%s9 + $0xf8] sm:$0xf]
      %v1391 = vld [vmem:[%s9 + $0xfc] sm:$0xf]
      %v1392 = vld [vmem:[%s10] sm:$0x1]
      %v1394 = vlaneseq
      %v1395 = vshrl.u32 %v1394, 7
      %v1396 = vsub.s32 0, %v1395
      %v1397 = vrot.slane %v1392, %v1396
      %v1463 = vunpack.c.l.b16 %v1328
      %v1464 = vunpack.c.l.b16 %v1329
      %v1465 = vunpack.c.l.b16 %v1330
      %v1466 = vunpack.c.l.b16 %v1331
      %v1467 = vunpack.c.l.b16 %v1332
      %v1468 = vunpack.c.l.b16 %v1333
      %v1469 = vunpack.c.l.b16 %v1334
      %v1470 = vunpack.c.l.b16 %v1335
      %v1471 = vunpack.c.l.b16 %v1336
      %v1472 = vunpack.c.l.b16 %v1337
      %v1473 = vunpack.c.l.b16 %v1338
      %v1474 = vunpack.c.l.b16 %v1339
      %v1475 = vunpack.c.l.b16 %v1340
      %v1476 = vunpack.c.l.b16 %v1341
      %v1477 = vunpack.c.l.b16 %v1342
      %v1478 = vunpack.c.l.b16 %v1343
      %v1479 = vunpack.c.l.b16 %v1344
      %v1480 = vunpack.c.l.b16 %v1345
      %v1481 = vunpack.c.l.b16 %v1346
      %v1482 = vunpack.c.l.b16 %v1347
      %v1483 = vunpack.c.l.b16 %v1348
      %v1484 = vunpack.c.l.b16 %v1349
      %v1485 = vunpack.c.l.b16 %v1350
      %v1486 = vunpack.c.l.b16 %v1351
      %v1487 = vunpack.c.l.b16 %v1352
      %v1488 = vunpack.c.l.b16 %v1353
      %v1489 = vunpack.c.l.b16 %v1354
      %v1490 = vunpack.c.l.b16 %v1355
      %v1491 = vunpack.c.l.b16 %v1356
      %v1492 = vunpack.c.l.b16 %v1357
      %v1493 = vunpack.c.l.b16 %v1358
      %v1494 = vunpack.c.l.b16 %v1359
      %v1495 = vunpack.c.l.b16 %v1360
      %v1496 = vunpack.c.l.b16 %v1361
      %v1497 = vunpack.c.l.b16 %v1362
      %v1498 = vunpack.c.l.b16 %v1363
      %v1499 = vunpack.c.l.b16 %v1364
      %v1500 = vunpack.c.l.b16 %v1365
      %v1501 = vunpack.c.l.b16 %v1366
      %v1502 = vunpack.c.l.b16 %v1367
      %v1503 = vunpack.c.l.b16 %v1368
      %v1504 = vunpack.c.l.b16 %v1369
      %v1505 = vunpack.c.l.b16 %v1370
      %v1506 = vunpack.c.l.b16 %v1371
      %v1507 = vunpack.c.l.b16 %v1372
      %v1508 = vunpack.c.l.b16 %v1373
      %v1509 = vunpack.c.l.b16 %v1374
      %v1510 = vunpack.c.l.b16 %v1375
      %v1511 = vunpack.c.l.b16 %v1376
      %v1512 = vunpack.c.l.b16 %v1377
      %v1513 = vunpack.c.l.b16 %v1378
      %v1514 = vunpack.c.l.b16 %v1379
      %v1515 = vunpack.c.l.b16 %v1380
      %v1516 = vunpack.c.l.b16 %v1381
      %v1517 = vunpack.c.l.b16 %v1382
      %v1518 = vunpack.c.l.b16 %v1383
      %v1519 = vunpack.c.l.b16 %v1384
      %v1520 = vunpack.c.l.b16 %v1385
      %v1521 = vunpack.c.l.b16 %v1386
      %v1522 = vunpack.c.l.b16 %v1387
      %v1523 = vunpack.c.l.b16 %v1388
      %v1524 = vunpack.c.l.b16 %v1389
      %v1525 = vunpack.c.l.b16 %v1390
      %v1526 = vunpack.c.l.b16 %v1391
      %v1527 = vpack.c.b16 %v1464, %v1463
      %v1528 = vpack.c.b16 %v1466, %v1465
      %v1529 = vpack.c.b16 %v1468, %v1467
      %v1530 = vpack.c.b16 %v1470, %v1469
      %v1531 = vpack.c.b16 %v1472, %v1471
      %v1532 = vpack.c.b16 %v1474, %v1473
      %v1533 = vpack.c.b16 %v1476, %v1475
      %v1534 = vpack.c.b16 %v1478, %v1477
      %v1535 = vpack.c.b16 %v1480, %v1479
      %v1536 = vpack.c.b16 %v1482, %v1481
      %v1537 = vpack.c.b16 %v1484, %v1483
      %v1538 = vpack.c.b16 %v1486, %v1485
      %v1539 = vpack.c.b16 %v1488, %v1487
      %v1540 = vpack.c.b16 %v1490, %v1489
      %v1541 = vpack.c.b16 %v1492, %v1491
      %v1542 = vpack.c.b16 %v1494, %v1493
      %v1543 = vpack.c.b16 %v1496, %v1495
      %v1544 = vpack.c.b16 %v1498, %v1497
      %v1545 = vpack.c.b16 %v1500, %v1499
      %v1546 = vpack.c.b16 %v1502, %v1501
      %v1547 = vpack.c.b16 %v1504, %v1503
      %v1548 = vpack.c.b16 %v1506, %v1505
      %v1549 = vpack.c.b16 %v1508, %v1507
      %v1550 = vpack.c.b16 %v1510, %v1509
      %v1551 = vpack.c.b16 %v1512, %v1511
      %v1552 = vpack.c.b16 %v1514, %v1513
      %v1553 = vpack.c.b16 %v1516, %v1515
      %v1554 = vpack.c.b16 %v1518, %v1517
      %v1555 = vpack.c.b16 %v1520, %v1519
      %v1556 = vpack.c.b16 %v1522, %v1521
      %v1557 = vpack.c.b16 %v1524, %v1523
      %v1558 = vpack.c.b16 %v1526, %v1525
      %1591 = vmatprep.subr.bf16.mxu0 0
      %1592 = vmatpush1.bf16.msra.mxu0 %v1527
      %1593 = vmatprep.subr.bf16.mxu0 0
      %1594 = vmatpush1.bf16.msra.mxu0 %v1528
      %1595 = vmatprep.subr.bf16.mxu0 0
      %1596 = vmatpush1.bf16.msra.mxu0 %v1529
      %1597 = vmatprep.subr.bf16.mxu0 0
      %1598 = vmatpush1.bf16.msra.mxu0 %v1530
      %1599 = vmatprep.subr.bf16.mxu0 0
      %1600 = vmatpush1.bf16.msra.mxu0 %v1531
      %1601 = vmatprep.subr.bf16.mxu0 0
      %1602 = vmatpush1.bf16.msra.mxu0 %v1532
      %1603 = vmatprep.subr.bf16.mxu0 0
      %1604 = vmatpush1.bf16.msra.mxu0 %v1533
      %1605 = vmatprep.subr.bf16.mxu0 0
      %1606 = vmatpush1.bf16.msra.mxu0 %v1534
      %1607 = vmatprep.subr.bf16.mxu0 0
      %1608 = vmatpush1.bf16.msra.mxu0 %v1535
      %1609 = vmatprep.subr.bf16.mxu0 0
      %1610 = vmatpush1.bf16.msra.mxu0 %v1536
      %1611 = vmatprep.subr.bf16.mxu0 0
      %1612 = vmatpush1.bf16.msra.mxu0 %v1537
      %1613 = vmatprep.subr.bf16.mxu0 0
      %1614 = vmatpush1.bf16.msra.mxu0 %v1538
      %1615 = vmatprep.subr.bf16.mxu0 0
      %1616 = vmatpush1.bf16.msra.mxu0 %v1539
      %1617 = vmatprep.subr.bf16.mxu0 0
      %1618 = vmatpush1.bf16.msra.mxu0 %v1540
      %1619 = vmatprep.subr.bf16.mxu0 0
      %1620 = vmatpush1.bf16.msra.mxu0 %v1541
      %1621 = vmatprep.subr.bf16.mxu0 0
      %1622 = vmatpush1.bf16.msra.mxu0 %v1542
      %1623 = vmatprep.mubr.bf16.mxu0 %v1313
      %1624 = vmatmul.mubr.bf16.gmra.mrb[0].mxu0 %v1312
      %v1625 = vpop.f32.mrb[0].mxu0
      %v1626 = vadd.f32 %v1397, %v1625
      %v1627 = vpop.f32.mrb[0].mxu0
      %v1628 = vpop.f32.mrb[0].mxu0
      %v1629 = vadd.f32 %v1397, %v1628
      %v1630 = vpop.f32.mrb[0].mxu0
      %1631 = vmatprep.mubr.bf16.mxu0 %v1317
      %1632 = vmatmul.mubr.bf16.gmra.mrb[0].mxu0 %v1316
      %v1633 = vpop.f32.mrb[0].mxu0
      %v1634 = vadd.f32 %v1397, %v1633
      %v1635 = vpop.f32.mrb[0].mxu0
      %v1636 = vpop.f32.mrb[0].mxu0
      %v1637 = vadd.f32 %v1397, %v1636
      %v1638 = vpop.f32.mrb[0].mxu0
      %1639 = vmatprep.mubr.bf16.mxu0 %v1321
      %1640 = vmatmul.mubr.bf16.gmra.mrb[0].mxu0 %v1320
      %v1641 = vpop.f32.mrb[0].mxu0
      %v1642 = vadd.f32 %v1397, %v1641
      %v1643 = vpop.f32.mrb[0].mxu0
      %v1644 = vpop.f32.mrb[0].mxu0
      %v1645 = vadd.f32 %v1397, %v1644
      %v1646 = vpop.f32.mrb[0].mxu0
      %1647 = vmatprep.mubr.bf16.mxu0 %v1325
      %1648 = vmatmul.mubr.bf16.gmra.mrb[0].mxu0 %v1324
      %v1649 = vpop.f32.mrb[0].mxu0
      %v1650 = vadd.f32 %v1397, %v1649
      %v1651 = vpop.f32.mrb[0].mxu0
      %v1652 = vpop.f32.mrb[0].mxu0
      %v1653 = vadd.f32 %v1397, %v1652
      %v1654 = vpop.f32.mrb[0].mxu0
      %1655 = vdwg.mxu0
      %1656 = vmatprep.subr.bf16.mxu0 0
      %1657 = vmatpush1.bf16.msra.mxu0 %v1543
      %1658 = vmatprep.subr.bf16.mxu0 0
      %1659 = vmatpush1.bf16.msra.mxu0 %v1544
      %1660 = vmatprep.subr.bf16.mxu0 0
      %1661 = vmatpush1.bf16.msra.mxu0 %v1545
      %1662 = vmatprep.subr.bf16.mxu0 0
      %1663 = vmatpush1.bf16.msra.mxu0 %v1546
      %1664 = vmatprep.subr.bf16.mxu0 0
      %1665 = vmatpush1.bf16.msra.mxu0 %v1547
      %1666 = vmatprep.subr.bf16.mxu0 0
      %1667 = vmatpush1.bf16.msra.mxu0 %v1548
      %1668 = vmatprep.subr.bf16.mxu0 0
      %1669 = vmatpush1.bf16.msra.mxu0 %v1549
      %1670 = vmatprep.subr.bf16.mxu0 0
      %1671 = vmatpush1.bf16.msra.mxu0 %v1550
      %1672 = vmatprep.subr.bf16.mxu0 0
      %1673 = vmatpush1.bf16.msra.mxu0 %v1551
      %1674 = vmatprep.subr.bf16.mxu0 0
      %1675 = vmatpush1.bf16.msra.mxu0 %v1552
      %1676 = vmatprep.subr.bf16.mxu0 0
      %1677 = vmatpush1.bf16.msra.mxu0 %v1553
      %1678 = vmatprep.subr.bf16.mxu0 0
      %1679 = vmatpush1.bf16.msra.mxu0 %v1554
      %1680 = vmatprep.subr.bf16.mxu0 0
      %1681 = vmatpush1.bf16.msra.mxu0 %v1555
      %1682 = vmatprep.subr.bf16.mxu0 0
      %1683 = vmatpush1.bf16.msra.mxu0 %v1556
      %1684 = vmatprep.subr.bf16.mxu0 0
      %1685 = vmatpush1.bf16.msra.mxu0 %v1557
      %1686 = vmatprep.subr.bf16.mxu0 0
      %1687 = vmatpush1.bf16.msra.mxu0 %v1558
      %1688 = vmatprep.mubr.bf16.mxu0 %v1315
      %1689 = vmatmul.mubr.bf16.gmra.mrb[0].mxu0 %v1314
      %v1690 = vpop.f32.mrb[0].mxu0
      %v1691 = vadd.f32 %v1626, %v1690
      %v1692 = vpop.f32.mrb[0].mxu0
      %v1693 = vpop.f32.mrb[0].mxu0
      %v1694 = vadd.f32 %v1629, %v1693
      %v1695 = vpop.f32.mrb[0].mxu0
      %1696 = vmatprep.mubr.bf16.mxu0 %v1319
      %1697 = vmatmul.mubr.bf16.gmra.mrb[0].mxu0 %v1318
      %v1698 = vpop.f32.mrb[0].mxu0
      %v1699 = vadd.f32 %v1634, %v1698
      %v1700 = vpop.f32.mrb[0].mxu0
      %v1701 = vpop.f32.mrb[0].mxu0
      %v1702 = vadd.f32 %v1637, %v1701
      %v1703 = vpop.f32.mrb[0].mxu0
      %1704 = vmatprep.mubr.bf16.mxu0 %v1323
      %1705 = vmatmul.mubr.bf16.gmra.mrb[0].mxu0 %v1322
      %v1706 = vpop.f32.mrb[0].mxu0
      %v1707 = vadd.f32 %v1642, %v1706
      %v1708 = vpop.f32.mrb[0].mxu0
      %v1709 = vpop.f32.mrb[0].mxu0
      %v1710 = vadd.f32 %v1645, %v1709
      %v1711 = vpop.f32.mrb[0].mxu0
      %1712 = vmatprep.mubr.bf16.mxu0 %v1327
      %1713 = vmatmul.mubr.bf16.gmra.mrb[0].mxu0 %v1326
      %v1714 = vpop.f32.mrb[0].mxu0
      %v1715 = vadd.f32 %v1650, %v1714
      %v1716 = vpop.f32.mrb[0].mxu0
      %v1717 = vpop.f32.mrb[0].mxu0
      %v1718 = vadd.f32 %v1653, %v1717
      %v1719 = vpop.f32.mrb[0].mxu0
      %1720 = vdwg.mxu0
      %v1721 = vadd.f32 %v1691, %v661
      %v1722 = vadd.f32 %v1694, %v662
      %v1723 = vadd.f32 %v1699, %v663
      %v1724 = vadd.f32 %v1702, %v664
      %v1725 = vadd.f32 %v1707, %v665
      %v1726 = vadd.f32 %v1710, %v666
      %v1727 = vadd.f32 %v1715, %v667
      %v1728 = vadd.f32 %v1718, %v668
      %1729 = vst [vmem:[%s549] sm:$0xff] %v1721
      %1730 = vst [vmem:[%s549 + $0x8] sm:$0xff] %v1722
      %1731 = vst [vmem:[%s549 + $0x10] sm:$0xff] %v1723
      %1732 = vst [vmem:[%s549 + $0x18] sm:$0xff] %v1724
      %1733 = vst [vmem:[%s549 + $0x20] sm:$0xff] %v1725
      %1734 = vst [vmem:[%s549 + $0x28] sm:$0xff] %v1726
      %1735 = vst [vmem:[%s549 + $0x30] sm:$0xff] %v1727
      %1736 = vst [vmem:[%s549 + $0x38] sm:$0xff] %v1728
      %s1737 = smul.u32 8, %s27
      %p1738 = scmp.lt.s32.totalorder %s26, 1
      %s1739 = scalar_select %p1738, %s26, 1
      %p1740 = scmp.lt.s32.totalorder %s1737, 7
      %s1741 = scalar_select %p1740, %s1737, 7
      %s1742 = smul.addr %s1739, 8
      %s1743 = sadd.s32 %s1741, %s1742
      %s1744 = smul.addr %s1743, 8
      %s1745 = scalar_lea.vmem %s11, %s1744
      // Predicated region
      $region65: #{_lambda_.3} parent=63 // pred_check
        %p1746 = pneg %p318
      $region66: #{_lambda_.3} parent=63 // pred_check_branch
        %1748 = sbr.rel (%p1746) target = $region68
      $region67: #{_lambda_.3} parent=63 // pred_region
        %s1749 = smul.u32 8, %s27
      $region68: #{_lambda_.3} parent=63 // pred_fallthru
        _
    $region64: #{_lambda_.3} parent=5 // pred_fallthru
      _
    %p1750 = scmp.le.s32.totalorder 2, %s17
    // Predicated region
    $region69: #{_lambda_.3} parent=5 // pred_check
      %p1751 = pneg %p1750
    $region70: #{_lambda_.3} parent=5 // pred_check_branch
      %1753 = sbr.rel (%p1751) target = $region72
    $region71: #{_lambda_.3} parent=5 // pred_region
      %s1754 = ssub.s32 %s17, 2
      // Predicated region
      $region73: #{_lambda_.3} parent=71 // pred_check
        %p1755 = pneg %p324
      $region74: #{_lambda_.3} parent=71 // pred_check_branch
        %1757 = sbr.rel (%p1755) target = $region76
      $region75: #{_lambda_.3} parent=71 // pred_region
        %s1758 = smul.u32 8, %s29
        %p1759 = scmp.lt.s32.totalorder %s28, 1
        %s1760 = scalar_select %p1759, %s28, 1
        %p1761 = scmp.lt.s32.totalorder %s1758, 7
        %s1762 = scalar_select %p1761, %s1758, 7
        %s1763 = smul.addr %s1760, 8
        %s1764 = sadd.s32 %s1762, %s1763
        %s1765 = smul.addr %s1764, 8
        %s1766 = scalar_lea.vmem %s11, %s1765
      $region76: #{_lambda_.3} parent=71 // pred_fallthru
        _
    $region72: #{_lambda_.3} parent=5 // pred_fallthru
      _
  $region6: #{_lambda_.3} parent=0 // loop_footer
    %s21 = sadd.s32 1, %s17
  $region7: #{_lambda_.3} parent=0 // loop_footer_branch
    %16 = sbr.rel target = $region3
  $region8: #{_lambda_.3} parent=0 // loop_exit
    _

// kernel: _lambda_.2
$region0: #{_lambda_.2}
  #allocation0 [shape = 'u32[]', space=smem, size = 0x4, offset = 0x4, fixed_abs, tag = 'smem constant byte address 0x4 - core index']
  #allocation1 [shape = 'u32[144,128]{1,0:T(1,128)}', space=vmem, size = 0x12000, scoped, tag = 'internal scratch']
  %s0 = inlined_call_operand.vmem [shape: f32[2,64,128], index: 0, kind: input, shape index: {}]
  %s1 = inlined_call_operand.vmem [shape: f32[1,128], index: 1, kind: input, shape index: {}]
  %s2 = inlined_call_operand.vmem [shape: f32[1,128], index: 2, kind: input, shape index: {}]
  %s3 = inlined_call_operand.vmem [shape: bf16[128,384], index: 3, kind: input, shape index: {}]
  %s4 = inlined_call_operand.vmem [shape: f32[1,384], index: 4, kind: input, shape index: {}]
  %s5 = inlined_call_operand.vmem [shape: bf16[2,64,128], index: 5, kind: output, shape index: {0}]
  %s6 = inlined_call_operand.vmem [shape: bf16[2,64,128], index: 6, kind: output, shape index: {1}]
  %s7 = inlined_call_operand.vmem [shape: bf16[2,64,128], index: 7, kind: output, shape index: {2}]
  %s8 = inlined_call_operand.vmem [shape: f32[2,1,1,128], index: 8, kind: output, shape index: {3}]
  %9 = xla_tuple %s5, %s6, %s7, %s8
  %s10 = sld [smem:[#allocation0]]
  $region77: #{_lambda_.2} parent=0
    _
  %s12 = ssub.s32 1, %s10
  %s13 = scalar_select 0, %s12, %s10
  loop: start=0, step=1, limit=4
  $region2: #{_lambda_.2} parent=0 // loop_pre_header
    _
  $region3: #{_lambda_.2} parent=0 // loop_header
    %s15 = sphi 0, %s19
    %p16 = scmp.ge.s32.totalorder %s15, 4
    %s22 = sphi 0, %s34
    %s23 = sphi 0, %s30
    %s24 = sphi 0, %s22
    %s25 = sphi 0, %s23
    %s26 = sphi 0, %s24
    %s27 = sphi 0, %s25
    %s39 = sphi 0, %s41
    %s42 = sphi 0, %s39
    %s43 = sphi 0, %s42
    %s59 = sphi 0, %s43
    %s63 = sphi 0, %s63
    %s65 = sphi 0, %s63
    %s66 = sphi 0, %s65
    %s80 = sphi 0, %s66
    %s84 = sphi 0, %s84
    %s86 = sphi 0, %s84
    %s87 = sphi 0, %s86
    %s101 = sphi 0, %s87
    %s105 = sphi 0, %s105
    %s107 = sphi 0, %s105
    %s108 = sphi 0, %s107
    %s122 = sphi 0, %s108
    %s126 = sphi 0, %s126
    %s128 = sphi 0, %s126
    %s129 = sphi 0, %s128
    %s143 = sphi 0, %s129
    %s151 = sphi 0, %s153
    %s154 = sphi 0, %s151
    %s155 = sphi 0, %s154
    %s171 = sphi 0, %s155
    %s179 = sphi 0, %s181
    %s182 = sphi 0, %s179
    %s183 = sphi 0, %s182
    %s199 = sphi 0, %s183
    %s207 = sphi 0, %s209
    %s210 = sphi 0, %s207
    %s211 = sphi 0, %s210
    %s227 = sphi 0, %s211
    %s235 = sphi 0, %s237
    %s238 = sphi 0, %s235
    %s239 = sphi 0, %s238
    %s255 = sphi 0, %s239
  $region4: #{_lambda_.2} parent=0 // loop_header_branch
    %18 = sbr.rel (%p16) target = $region8
  $region5: #{_lambda_.2} parent=0 // loop_body
    %s20 = ssub.s32 %s15, 1
    %s21 = ssub.s32 %s15, 2
    %s28 = sadd.s32 1, %s23
    %p29 = scmp.ge.s32.totalorder %s28, 1
    %s30 = scalar_select %p29, 0, %s28
    %s31 = sadd.s32 1, %s22
    %s32 = scalar_select %p29, %s31, %s22
    %p33 = scmp.ge.s32.totalorder %s32, 2
    %s34 = scalar_select %p33, 0, %s32
    %s35 = ssub.s32 %s22, %s34
    %s36 = ssub.s32 %s23, %s30
    %s37 = sor.u32 %s35, %s36
    %p38 = scmp.eq.s32.totalorder %s37, 0
    %s40 = sadd.s32 %s39, 1
    %s41 = scalar_select %p38, %s39, %s40
    %p44 = pneg %p38
    %p45 = scmp.eq.s32.totalorder %s15, 1
    %p46 = por %p44, %p45
    %p47 = scmp.ne.s32.totalorder %s39, %s42
    %p48 = scmp.eq.s32.totalorder %s15, 0
    %p49 = por %p47, %p48
    %p50 = scmp.ne.s32.totalorder %s39, %s42
    %p51 = scmp.eq.s32.totalorder %s20, 1
    %p52 = por %p50, %p51
    %p53 = scmp.ne.s32.totalorder %s42, %s43
    %p54 = scmp.eq.s32.totalorder %s20, 0
    %p55 = por %p53, %p54
    %p56 = scmp.ne.s32.totalorder %s42, %s43
    %p57 = scmp.eq.s32.totalorder %s21, 1
    %p58 = por %p56, %p57
    %p60 = scmp.ne.s32.totalorder %s43, %s59
    %p61 = scmp.eq.s32.totalorder %s21, 0
    %p62 = por %p60, %p61
    %s64 = sadd.s32 %s63, 1
    %p67 = scmp.eq.s32.totalorder %s15, 1
    %p68 = scmp.ne.s32.totalorder %s63, %s65
    %p69 = scmp.eq.s32.totalorder %s15, 0
    %p70 = por %p68, %p69
    %p71 = scmp.ne.s32.totalorder %s63, %s65
    %p72 = scmp.eq.s32.totalorder %s20, 1
    %p73 = por %p71, %p72
    %p74 = scmp.ne.s32.totalorder %s65, %s66
    %p75 = scmp.eq.s32.totalorder %s20, 0
    %p76 = por %p74, %p75
    %p77 = scmp.ne.s32.totalorder %s65, %s66
    %p78 = scmp.eq.s32.totalorder %s21, 1
    %p79 = por %p77, %p78
    %p81 = scmp.ne.s32.totalorder %s66, %s80
    %p82 = scmp.eq.s32.totalorder %s21, 0
    %p83 = por %p81, %p82
    %s85 = sadd.s32 %s84, 1
    %p88 = scmp.eq.s32.totalorder %s15, 1
    %p89 = scmp.ne.s32.totalorder %s84, %s86
    %p90 = scmp.eq.s32.totalorder %s15, 0
    %p91 = por %p89, %p90
    %p92 = scmp.ne.s32.totalorder %s84, %s86
    %p93 = scmp.eq.s32.totalorder %s20, 1
    %p94 = por %p92, %p93
    %p95 = scmp.ne.s32.totalorder %s86, %s87
    %p96 = scmp.eq.s32.totalorder %s20, 0
    %p97 = por %p95, %p96
    %p98 = scmp.ne.s32.totalorder %s86, %s87
    %p99 = scmp.eq.s32.totalorder %s21, 1
    %p100 = por %p98, %p99
    %p102 = scmp.ne.s32.totalorder %s87, %s101
    %p103 = scmp.eq.s32.totalorder %s21, 0
    %p104 = por %p102, %p103
    %s106 = sadd.s32 %s105, 1
    %p109 = scmp.eq.s32.totalorder %s15, 1
    %p110 = scmp.ne.s32.totalorder %s105, %s107
    %p111 = scmp.eq.s32.totalorder %s15, 0
    %p112 = por %p110, %p111
    %p113 = scmp.ne.s32.totalorder %s105, %s107
    %p114 = scmp.eq.s32.totalorder %s20, 1
    %p115 = por %p113, %p114
    %p116 = scmp.ne.s32.totalorder %s107, %s108
    %p117 = scmp.eq.s32.totalorder %s20, 0
    %p118 = por %p116, %p117
    %p119 = scmp.ne.s32.totalorder %s107, %s108
    %p120 = scmp.eq.s32.totalorder %s21, 1
    %p121 = por %p119, %p120
    %p123 = scmp.ne.s32.totalorder %s108, %s122
    %p124 = scmp.eq.s32.totalorder %s21, 0
    %p125 = por %p123, %p124
    %s127 = sadd.s32 %s126, 1
    %p130 = scmp.eq.s32.totalorder %s15, 1
    %p131 = scmp.ne.s32.totalorder %s126, %s128
    %p132 = scmp.eq.s32.totalorder %s15, 0
    %p133 = por %p131, %p132
    %p134 = scmp.ne.s32.totalorder %s126, %s128
    %p135 = scmp.eq.s32.totalorder %s20, 1
    %p136 = por %p134, %p135
    %p137 = scmp.ne.s32.totalorder %s128, %s129
    %p138 = scmp.eq.s32.totalorder %s20, 0
    %p139 = por %p137, %p138
    %p140 = scmp.ne.s32.totalorder %s128, %s129
    %p141 = scmp.eq.s32.totalorder %s21, 1
    %p142 = por %p140, %p141
    %p144 = scmp.ne.s32.totalorder %s129, %s143
    %p145 = scmp.eq.s32.totalorder %s21, 0
    %p146 = por %p144, %p145
    %s147 = ssub.s32 %s22, %s34
    %s148 = ssub.s32 %s23, %s30
    %s149 = sor.u32 %s147, %s148
    %p150 = scmp.eq.s32.totalorder %s149, 0
    %s152 = sadd.s32 %s151, 1
    %s153 = scalar_select %p150, %s151, %s152
    %p156 = pneg %p150
    %p157 = scmp.eq.s32.totalorder %s15, 1
    %p158 = por %p156, %p157
    %p159 = scmp.ne.s32.totalorder %s151, %s154
    %p160 = scmp.eq.s32.totalorder %s15, 0
    %p161 = por %p159, %p160
    %p162 = scmp.ne.s32.totalorder %s151, %s154
    %p163 = scmp.eq.s32.totalorder %s20, 1
    %p164 = por %p162, %p163
    %p165 = scmp.ne.s32.totalorder %s154, %s155
    %p166 = scmp.eq.s32.totalorder %s20, 0
    %p167 = por %p165, %p166
    %p168 = scmp.ne.s32.totalorder %s154, %s155
    %p169 = scmp.eq.s32.totalorder %s21, 1
    %p170 = por %p168, %p169
    %p172 = scmp.ne.s32.totalorder %s155, %s171
    %p173 = scmp.eq.s32.totalorder %s21, 0
    %p174 = por %p172, %p173
    %s175 = ssub.s32 %s22, %s34
    %s176 = ssub.s32 %s23, %s30
    %s177 = sor.u32 %s175, %s176
    %p178 = scmp.eq.s32.totalorder %s177, 0
    %s180 = sadd.s32 %s179, 1
    %s181 = scalar_select %p178, %s179, %s180
    %p184 = pneg %p178
    %p185 = scmp.eq.s32.totalorder %s15, 1
    %p186 = por %p184, %p185
    %p187 = scmp.ne.s32.totalorder %s179, %s182
    %p188 = scmp.eq.s32.totalorder %s15, 0
    %p189 = por %p187, %p188
    %p190 = scmp.ne.s32.totalorder %s179, %s182
    %p191 = scmp.eq.s32.totalorder %s20, 1
    %p192 = por %p190, %p191
    %p193 = scmp.ne.s32.totalorder %s182, %s183
    %p194 = scmp.eq.s32.totalorder %s20, 0
    %p195 = por %p193, %p194
    %p196 = scmp.ne.s32.totalorder %s182, %s183
    %p197 = scmp.eq.s32.totalorder %s21, 1
    %p198 = por %p196, %p197
    %p200 = scmp.ne.s32.totalorder %s183, %s199
    %p201 = scmp.eq.s32.totalorder %s21, 0
    %p202 = por %p200, %p201
    %s203 = ssub.s32 %s22, %s34
    %s204 = ssub.s32 %s23, %s30
    %s205 = sor.u32 %s203, %s204
    %p206 = scmp.eq.s32.totalorder %s205, 0
    %s208 = sadd.s32 %s207, 1
    %s209 = scalar_select %p206, %s207, %s208
    %p212 = pneg %p206
    %p213 = scmp.eq.s32.totalorder %s15, 1
    %p214 = por %p212, %p213
    %p215 = scmp.ne.s32.totalorder %s207, %s210
    %p216 = scmp.eq.s32.totalorder %s15, 0
    %p217 = por %p215, %p216
    %p218 = scmp.ne.s32.totalorder %s207, %s210
    %p219 = scmp.eq.s32.totalorder %s20, 1
    %p220 = por %p218, %p219
    %p221 = scmp.ne.s32.totalorder %s210, %s211
    %p222 = scmp.eq.s32.totalorder %s20, 0
    %p223 = por %p221, %p222
    %p224 = scmp.ne.s32.totalorder %s210, %s211
    %p225 = scmp.eq.s32.totalorder %s21, 1
    %p226 = por %p224, %p225
    %p228 = scmp.ne.s32.totalorder %s211, %s227
    %p229 = scmp.eq.s32.totalorder %s21, 0
    %p230 = por %p228, %p229
    %s231 = ssub.s32 %s22, %s34
    %s232 = ssub.s32 %s23, %s30
    %s233 = sor.u32 %s231, %s232
    %p234 = scmp.eq.s32.totalorder %s233, 0
    %s236 = sadd.s32 %s235, 1
    %s237 = scalar_select %p234, %s235, %s236
    %p240 = pneg %p234
    %p241 = scmp.eq.s32.totalorder %s15, 1
    %p242 = por %p240, %p241
    %p243 = scmp.ne.s32.totalorder %s235, %s238
    %p244 = scmp.eq.s32.totalorder %s15, 0
    %p245 = por %p243, %p244
    %p246 = scmp.ne.s32.totalorder %s235, %s238
    %p247 = scmp.eq.s32.totalorder %s20, 1
    %p248 = por %p246, %p247
    %p249 = scmp.ne.s32.totalorder %s238, %s239
    %p250 = scmp.eq.s32.totalorder %s20, 0
    %p251 = por %p249, %p250
    %p252 = scmp.ne.s32.totalorder %s238, %s239
    %p253 = scmp.eq.s32.totalorder %s21, 1
    %p254 = por %p252, %p253
    %p256 = scmp.ne.s32.totalorder %s239, %s255
    %p257 = scmp.eq.s32.totalorder %s21, 0
    %p258 = por %p256, %p257
    %p259 = scmp.le.s32.totalorder 1, %s15
    %p260 = scmp.lt.s32.totalorder %s15, 3
    %p261 = pnand %p259, %p260
    %p262 = pneg %p261
    // Predicated region
    $region9: #{_lambda_.2} parent=5 // pred_check
      _
    $region10: #{_lambda_.2} parent=5 // pred_check_branch
      %264 = sbr.rel (%p261) target = $region12
    $region11: #{_lambda_.2} parent=5 // pred_region
      %s265 = ssub.s32 %s15, 1
      // Predicated region
      $region13: #{_lambda_.2} parent=11 // pred_check
        %p266 = pneg %p76
      $region14: #{_lambda_.2} parent=11 // pred_check_branch
        %268 = sbr.rel (%p266) target = $region16
      $region15: #{_lambda_.2} parent=11 // pred_region
        _
      $region16: #{_lambda_.2} parent=11 // pred_fallthru
        _
      // Predicated region
      $region17: #{_lambda_.2} parent=11 // pred_check
        %p269 = pneg %p97
      $region18: #{_lambda_.2} parent=11 // pred_check_branch
        %271 = sbr.rel (%p269) target = $region20
      $region19: #{_lambda_.2} parent=11 // pred_region
        _
      $region20: #{_lambda_.2} parent=11 // pred_fallthru
        _
      // Predicated region
      $region21: #{_lambda_.2} parent=11 // pred_check
        %p272 = pneg %p118
      $region22: #{_lambda_.2} parent=11 // pred_check_branch
        %274 = sbr.rel (%p272) target = $region24
      $region23: #{_lambda_.2} parent=11 // pred_region
        _
      $region24: #{_lambda_.2} parent=11 // pred_fallthru
        _
      // Predicated region
      $region25: #{_lambda_.2} parent=11 // pred_check
        %p275 = pneg %p139
      $region26: #{_lambda_.2} parent=11 // pred_check_branch
        %277 = sbr.rel (%p275) target = $region28
      $region27: #{_lambda_.2} parent=11 // pred_region
        _
      $region28: #{_lambda_.2} parent=11 // pred_fallthru
        _
    $region12: #{_lambda_.2} parent=5 // pred_fallthru
      _
    %p278 = scmp.lt.s32.totalorder %s15, 2
    // Predicated region
    $region29: #{_lambda_.2} parent=5 // pred_check
      %p279 = pneg %p278
    $region30: #{_lambda_.2} parent=5 // pred_check_branch
      %281 = sbr.rel (%p279) target = $region32
    $region31: #{_lambda_.2} parent=5 // pred_region
      // Predicated region
      $region33: #{_lambda_.2} parent=31 // pred_check
        %p282 = pneg %p49
      $region34: #{_lambda_.2} parent=31 // pred_check_branch
        %284 = sbr.rel (%p282) target = $region36
      $region35: #{_lambda_.2} parent=31 // pred_region
        %s285 = smul.u32 8, %s23
        %p286 = scmp.lt.s32.totalorder %s22, 1
        %s287 = scalar_select %p286, %s22, 1
        %p288 = scmp.lt.s32.totalorder %s285, 7
        %s289 = scalar_select %p288, %s285, 7
        %s290 = smul.addr %s287, 8
        %s291 = sadd.s32 %s289, %s290
        %s292 = smul.addr %s291, 8
        %s293 = scalar_lea.vmem %s0, %s292
        %s294 = smul.u32 8, %s23
      $region36: #{_lambda_.2} parent=31 // pred_fallthru
        _
    $region32: #{_lambda_.2} parent=5 // pred_fallthru
      _
    %p295 = scmp.le.s32.totalorder 1, %s15
    %p296 = scmp.lt.s32.totalorder %s15, 3
    %p297 = pnand %p295, %p296
    %p298 = pneg %p297
    // Predicated region
    $region37: #{_lambda_.2} parent=5 // pred_check
      _
    $region38: #{_lambda_.2} parent=5 // pred_check_branch
      %300 = sbr.rel (%p297) target = $region40
    $region39: #{_lambda_.2} parent=5 // pred_region
      %s301 = ssub.s32 %s15, 1
      %s302 = smul.u32 8, %s25
      %p303 = scmp.lt.s32.totalorder %s24, 1
      %s304 = scalar_select %p303, %s24, 1
      %p305 = scmp.lt.s32.totalorder %s302, 7
      %s306 = scalar_select %p305, %s302, 7
      %s307 = smul.addr %s304, 8
      %s308 = sadd.s32 %s306, %s307
      %s309 = smul.addr %s308, 8
      %s310 = scalar_lea.vmem %s0, %s309
      %p311 = pneg %p55
      %p312 = pneg %p52
      %p313 = pneg %p76
      %p314 = pneg %p73
      %p315 = pneg %p97
      %p316 = pneg %p94
      %p317 = pneg %p118
      %p318 = pneg %p115
      %p319 = pneg %p139
      %p320 = pneg %p136
      %p321 = pneg %p167
      %p322 = pneg %p164
      %s323 = smul.u32 8, %s25
      %p324 = scmp.lt.s32.totalorder %s24, 1
      %s325 = scalar_select %p324, %s24, 1
      %p326 = scmp.lt.s32.totalorder %s323, 7
      %s327 = scalar_select %p326, %s323, 7
      %s328 = smul.addr %s325, 8
      %s329 = sadd.s32 %s327, %s328
      %s330 = smul.addr %s329, 4
      %s331 = scalar_lea.vmem %s5, %s330
      %p332 = pneg %p195
      %p333 = pneg %p192
      %s334 = smul.u32 8, %s25
      %p335 = scmp.lt.s32.totalorder %s24, 1
      %s336 = scalar_select %p335, %s24, 1
      %p337 = scmp.lt.s32.totalorder %s334, 7
      %s338 = scalar_select %p337, %s334, 7
      %s339 = smul.addr %s336, 8
      %s340 = sadd.s32 %s338, %s339
      %s341 = smul.addr %s340, 4
      %s342 = scalar_lea.vmem %s6, %s341
      %p343 = pneg %p223
      %p344 = pneg %p220
      %s345 = smul.u32 8, %s25
      %p346 = scmp.lt.s32.totalorder %s24, 1
      %s347 = scalar_select %p346, %s24, 1
      %p348 = scmp.lt.s32.totalorder %s345, 7
      %s349 = scalar_select %p348, %s345, 7
      %s350 = smul.addr %s347, 8
      %s351 = sadd.s32 %s349, %s350
      %s352 = smul.addr %s351, 4
      %s353 = scalar_lea.vmem %s7, %s352
      %p354 = pneg %p251
      %p355 = pneg %p248
      %p356 = scmp.lt.s32.totalorder %s24, 1
      %s357 = scalar_select %p356, %s24, 1
      %p358 = scmp.lt.s32.totalorder %s25, 0
      %s359 = scalar_select %p358, %s25, 0
      %s360 = sadd.s32 %s359, %s357
      %s361 = scalar_lea.vmem %s8, %s360
      %s362 = smul.u32 8, %s25
      %p363 = scmp.lt.s32.totalorder %s24, 1
      %s364 = scalar_select %p363, %s24, 1
      %p365 = scmp.lt.s32.totalorder %s362, 7
      %s366 = scalar_select %p365, %s362, 7
      %s367 = smul.addr %s364, 8
      %s368 = sadd.s32 %s366, %s367
      %s369 = smul.addr %s368, 8
      %s370 = scalar_lea.vmem %s0, %s369
      %s371 = smul.u32 8, %s25
      %s372 = smul.u32 8, %s25
      %p373 = scmp.lt.s32.totalorder %s24, 1
      %s374 = scalar_select %p373, %s24, 1
      %p375 = scmp.lt.s32.totalorder %s372, 7
      %s376 = scalar_select %p375, %s372, 7
      %s377 = smul.addr %s374, 8
      %s378 = sadd.s32 %s376, %s377
      %s379 = smul.addr %s378, 4
      %s380 = scalar_lea.vmem %s5, %s379
      %s381 = smul.u32 8, %s25
      %s382 = smul.u32 8, %s25
      %p383 = scmp.lt.s32.totalorder %s24, 1
      %s384 = scalar_select %p383, %s24, 1
      %p385 = scmp.lt.s32.totalorder %s382, 7
      %s386 = scalar_select %p385, %s382, 7
      %s387 = smul.addr %s384, 8
      %s388 = sadd.s32 %s386, %s387
      %s389 = smul.addr %s388, 4
      %s390 = scalar_lea.vmem %s6, %s389
      %s391 = smul.u32 8, %s25
      %s392 = smul.u32 8, %s25
      %p393 = scmp.lt.s32.totalorder %s24, 1
      %s394 = scalar_select %p393, %s24, 1
      %p395 = scmp.lt.s32.totalorder %s392, 7
      %s396 = scalar_select %p395, %s392, 7
      %s397 = smul.addr %s394, 8
      %s398 = sadd.s32 %s396, %s397
      %s399 = smul.addr %s398, 4
      %s400 = scalar_lea.vmem %s7, %s399
      %s401 = smul.u32 8, %s25
      %p402 = scmp.lt.s32.totalorder %s24, 1
      %s403 = scalar_select %p402, %s24, 1
      %p404 = scmp.lt.s32.totalorder %s25, 0
      %s405 = scalar_select %p404, %s25, 0
      %s406 = sadd.s32 %s405, %s403
      %s407 = scalar_lea.vmem %s8, %s406
      %v409 = vld [vmem:[%s370] sm:$0xff]
      %v410 = vld [vmem:[%s370 + $0x8] sm:$0xff]
      %v411 = vld [vmem:[%s370 + $0x10] sm:$0xff]
      %v412 = vld [vmem:[%s370 + $0x18] sm:$0xff]
      %v413 = vld [vmem:[%s370 + $0x20] sm:$0xff]
      %v414 = vld [vmem:[%s370 + $0x28] sm:$0xff]
      %v415 = vld [vmem:[%s370 + $0x30] sm:$0xff]
      %v416 = vld [vmem:[%s370 + $0x38] sm:$0xff]
      %417 = vadd.xlane.f32.xlu0 %v409
      %v418 = vpop.xlane.xlu0 %417
      %419 = vadd.xlane.f32.xlu0 %v410
      %v420 = vpop.xlane.xlu0 %419
      %421 = vadd.xlane.f32.xlu0 %v411
      %v422 = vpop.xlane.xlu0 %421
      %423 = vadd.xlane.f32.xlu0 %v412
      %v424 = vpop.xlane.xlu0 %423
      %425 = vadd.xlane.f32.xlu0 %v413
      %v426 = vpop.xlane.xlu0 %425
      %427 = vadd.xlane.f32.xlu0 %v414
      %v428 = vpop.xlane.xlu0 %427
      %429 = vadd.xlane.f32.xlu0 %v415
      %v430 = vpop.xlane.xlu0 %429
      %431 = vadd.xlane.f32.xlu0 %v416
      %v432 = vpop.xlane.xlu0 %431
      %v433 = vrcp.pop 128.0
      %v434 = vmul.f32 %v418, %v433
      %v435 = vmul.f32 %v420, %v433
      %v436 = vmul.f32 %v422, %v433
      %v437 = vmul.f32 %v424, %v433
      %v438 = vmul.f32 %v426, %v433
      %v439 = vmul.f32 %v428, %v433
      %v440 = vmul.f32 %v430, %v433
      %v441 = vmul.f32 %v432, %v433
      %v442 = vsub.f32 %v409, %v434
      %v443 = vsub.f32 %v410, %v435
      %v444 = vsub.f32 %v411, %v436
      %v445 = vsub.f32 %v412, %v437
      %v446 = vsub.f32 %v413, %v438
      %v447 = vsub.f32 %v414, %v439
      %v448 = vsub.f32 %v415, %v440
      %v449 = vsub.f32 %v416, %v441
      %v450 = vmul.f32 %v442, %v442
      %v451 = vmul.f32 %v443, %v443
      %v452 = vmul.f32 %v444, %v444
      %v453 = vmul.f32 %v445, %v445
      %v454 = vmul.f32 %v446, %v446
      %v455 = vmul.f32 %v447, %v447
      %v456 = vmul.f32 %v448, %v448
      %v457 = vmul.f32 %v449, %v449
      %458 = vadd.xlane.f32.xlu0 %v450
      %v459 = vpop.xlane.xlu0 %458
      %460 = vadd.xlane.f32.xlu0 %v451
      %v461 = vpop.xlane.xlu0 %460
      %462 = vadd.xlane.f32.xlu0 %v452
      %v463 = vpop.xlane.xlu0 %462
      %464 = vadd.xlane.f32.xlu0 %v453
      %v465 = vpop.xlane.xlu0 %464
      %466 = vadd.xlane.f32.xlu0 %v454
      %v467 = vpop.xlane.xlu0 %466
      %468 = vadd.xlane.f32.xlu0 %v455
      %v469 = vpop.xlane.xlu0 %468
      %470 = vadd.xlane.f32.xlu0 %v456
      %v471 = vpop.xlane.xlu0 %470
      %472 = vadd.xlane.f32.xlu0 %v457
      %v473 = vpop.xlane.xlu0 %472
      %v474 = vmul.f32 %v459, %v433
      %v475 = vmul.f32 %v461, %v433
      %v476 = vmul.f32 %v463, %v433
      %v477 = vmul.f32 %v465, %v433
      %v478 = vmul.f32 %v467, %v433
      %v479 = vmul.f32 %v469, %v433
      %v480 = vmul.f32 %v471, %v433
      %v481 = vmul.f32 %v473, %v433
      %v482 = vadd.f32 %v474, 1e-05
      %v483 = vadd.f32 %v475, 1e-05
      %v484 = vadd.f32 %v476, 1e-05
      %v485 = vadd.f32 %v477, 1e-05
      %v486 = vadd.f32 %v478, 1e-05
      %v487 = vadd.f32 %v479, 1e-05
      %v488 = vadd.f32 %v480, 1e-05
      %v489 = vadd.f32 %v481, 1e-05
      %v490 = vrsqrt.pop %v482
      %v491 = vrsqrt.pop %v483
      %v492 = vrsqrt.pop %v484
      %v493 = vrsqrt.pop %v485
      %v494 = vrsqrt.pop %v486
      %v495 = vrsqrt.pop %v487
      %v496 = vrsqrt.pop %v488
      %v497 = vrsqrt.pop %v489
      %v498 = vmul.f32 %v442, %v490
      %v499 = vmul.f32 %v443, %v491
      %v500 = vmul.f32 %v444, %v492
      %v501 = vmul.f32 %v445, %v493
      %v502 = vmul.f32 %v446, %v494
      %v503 = vmul.f32 %v447, %v495
      %v504 = vmul.f32 %v448, %v496
      %v505 = vmul.f32 %v449, %v497
      %v506 = vld [vmem:[%s1] sm:$0x1]
      %v508 = vlaneseq
      %v509 = vshrl.u32 %v508, 7
      %v510 = vsub.s32 0, %v509
      %v511 = vrot.slane %v506, %v510
      %v513 = vmul.f32 %v498, %v511
      %v514 = vmul.f32 %v499, %v511
      %v515 = vmul.f32 %v500, %v511
      %v516 = vmul.f32 %v501, %v511
      %v517 = vmul.f32 %v502, %v511
      %v518 = vmul.f32 %v503, %v511
      %v519 = vmul.f32 %v504, %v511
      %v520 = vmul.f32 %v505, %v511
      %v521 = vld [vmem:[%s2] sm:$0x1]
      %v523 = vlaneseq
      %v524 = vshrl.u32 %v523, 7
      %v525 = vsub.s32 0, %v524
      %v526 = vrot.slane %v521, %v525
      %v528 = vadd.f32 %v513, %v526
      %v529 = vadd.f32 %v514, %v526
      %v530 = vadd.f32 %v515, %v526
      %v531 = vadd.f32 %v516, %v526
      %v532 = vadd.f32 %v517, %v526
      %v533 = vadd.f32 %v518, %v526
      %v534 = vadd.f32 %v519, %v526
      %v535 = vadd.f32 %v520, %v526
      %v536 = vpack.c.bf16 %v529, %v528
      %v537 = vpack.c.bf16 %v531, %v530
      %v538 = vpack.c.bf16 %v533, %v532
      %v539 = vpack.c.bf16 %v535, %v534
      %v540 = vld [vmem:[%s3] sm:$0xff]
      %v541 = vld [vmem:[%s3 + $0x8] sm:$0xf]
      %v542 = vld [vmem:[%s3 + $0xc] sm:$0xff]
      %v543 = vld [vmem:[%s3 + $0x14] sm:$0xf]
      %v544 = vld [vmem:[%s3 + $0x18] sm:$0xff]
      %v545 = vld [vmem:[%s3 + $0x20] sm:$0xf]
      %v546 = vld [vmem:[%s3 + $0x24] sm:$0xff]
      %v547 = vld [vmem:[%s3 + $0x2c] sm:$0xf]
      %v548 = vld [vmem:[%s3 + $0x30] sm:$0xff]
      %v549 = vld [vmem:[%s3 + $0x38] sm:$0xf]
      %v550 = vld [vmem:[%s3 + $0x3c] sm:$0xff]
      %v551 = vld [vmem:[%s3 + $0x44] sm:$0xf]
      %v552 = vld [vmem:[%s3 + $0x48] sm:$0xff]
      %v553 = vld [vmem:[%s3 + $0x50] sm:$0xf]
      %v554 = vld [vmem:[%s3 + $0x54] sm:$0xff]
      %v555 = vld [vmem:[%s3 + $0x5c] sm:$0xf]
      %v556 = vld [vmem:[%s3 + $0x60] sm:$0xff]
      %v557 = vld [vmem:[%s3 + $0x68] sm:$0xf]
      %v558 = vld [vmem:[%s3 + $0x6c] sm:$0xff]
      %v559 = vld [vmem:[%s3 + $0x74] sm:$0xf]
      %v560 = vld [vmem:[%s3 + $0x78] sm:$0xff]
      %v561 = vld [vmem:[%s3 + $0x80] sm:$0xf]
      %v562 = vld [vmem:[%s3 + $0x84] sm:$0xff]
      %v563 = vld [vmem:[%s3 + $0x8c] sm:$0xf]
      %v564 = vld [vmem:[%s3 + $0x90] sm:$0xff]
      %v565 = vld [vmem:[%s3 + $0x98] sm:$0xf]
      %v566 = vld [vmem:[%s3 + $0x9c] sm:$0xff]
      %v567 = vld [vmem:[%s3 + $0xa4] sm:$0xf]
      %v568 = vld [vmem:[%s3 + $0xa8] sm:$0xff]
      %v569 = vld [vmem:[%s3 + $0xb0] sm:$0xf]
      %v570 = vld [vmem:[%s3 + $0xb4] sm:$0xff]
      %v571 = vld [vmem:[%s3 + $0xbc] sm:$0xf]
      %v572 = vld [vmem:[%s4] sm:$0x7]
      %v574 = vlaneseq
      %v575 = vshrl.u32 %v574, 7
      %v576 = vsub.s32 0, %v575
      %v577 = vrot.slane %v572, %v576
      %v578 = vlaneseq
      %v579 = vshrl.u32 %v578, 7
      %v580 = vsub.s32 1, %v579
      %v581 = vrot.slane %v572, %v580
      %v582 = vlaneseq
      %v583 = vshrl.u32 %v582, 7
      %v584 = vsub.s32 2, %v583
      %v585 = vrot.slane %v572, %v584
      %v621 = vunpack.c.l.b16 %v540
      %v622 = vunpack.c.h.b16 %v540
      %v623 = vunpack.c.l.b16 %v541
      %v624 = vunpack.c.l.b16 %v542
      %v625 = vunpack.c.h.b16 %v542
      %v626 = vunpack.c.l.b16 %v543
      %v627 = vunpack.c.l.b16 %v544
      %v628 = vunpack.c.h.b16 %v544
      %v629 = vunpack.c.l.b16 %v545
      %v630 = vunpack.c.l.b16 %v546
      %v631 = vunpack.c.h.b16 %v546
      %v632 = vunpack.c.l.b16 %v547
      %v633 = vunpack.c.l.b16 %v548
      %v634 = vunpack.c.h.b16 %v548
      %v635 = vunpack.c.l.b16 %v549
      %v636 = vunpack.c.l.b16 %v550
      %v637 = vunpack.c.h.b16 %v550
      %v638 = vunpack.c.l.b16 %v551
      %v639 = vunpack.c.l.b16 %v552
      %v640 = vunpack.c.h.b16 %v552
      %v641 = vunpack.c.l.b16 %v553
      %v642 = vunpack.c.l.b16 %v554
      %v643 = vunpack.c.h.b16 %v554
      %v644 = vunpack.c.l.b16 %v555
      %v645 = vunpack.c.l.b16 %v556
      %v646 = vunpack.c.h.b16 %v556
      %v647 = vunpack.c.l.b16 %v557
      %v648 = vunpack.c.l.b16 %v558
      %v649 = vunpack.c.h.b16 %v558
      %v650 = vunpack.c.l.b16 %v559
      %v651 = vunpack.c.l.b16 %v560
      %v652 = vunpack.c.h.b16 %v560
      %v653 = vunpack.c.l.b16 %v561
      %v654 = vunpack.c.l.b16 %v562
      %v655 = vunpack.c.h.b16 %v562
      %v656 = vunpack.c.l.b16 %v563
      %v657 = vunpack.c.l.b16 %v564
      %v658 = vunpack.c.h.b16 %v564
      %v659 = vunpack.c.l.b16 %v565
      %v660 = vunpack.c.l.b16 %v566
      %v661 = vunpack.c.h.b16 %v566
      %v662 = vunpack.c.l.b16 %v567
      %v663 = vunpack.c.l.b16 %v568
      %v664 = vunpack.c.h.b16 %v568
      %v665 = vunpack.c.l.b16 %v569
      %v666 = vunpack.c.l.b16 %v570
      %v667 = vunpack.c.h.b16 %v570
      %v668 = vunpack.c.l.b16 %v571
      %v669 = vpack.c.b16 %v624, %v621
      %v670 = vpack.c.b16 %v625, %v622
      %v671 = vpack.c.b16 %v626, %v623
      %v672 = vpack.c.b16 %v630, %v627
      %v673 = vpack.c.b16 %v631, %v628
      %v674 = vpack.c.b16 %v632, %v629
      %v675 = vpack.c.b16 %v636, %v633
      %v676 = vpack.c.b16 %v637, %v634
      %v677 = vpack.c.b16 %v638, %v635
      %v678 = vpack.c.b16 %v642, %v639
      %v679 = vpack.c.b16 %v643, %v640
      %v680 = vpack.c.b16 %v644, %v641
      %v681 = vpack.c.b16 %v648, %v645
      %v682 = vpack.c.b16 %v649, %v646
      %v683 = vpack.c.b16 %v650, %v647
      %v684 = vpack.c.b16 %v654, %v651
      %v685 = vpack.c.b16 %v655, %v652
      %v686 = vpack.c.b16 %v656, %v653
      %v687 = vpack.c.b16 %v660, %v657
      %v688 = vpack.c.b16 %v661, %v658
      %v689 = vpack.c.b16 %v662, %v659
      %v690 = vpack.c.b16 %v666, %v663
      %v691 = vpack.c.b16 %v667, %v664
      %v692 = vpack.c.b16 %v668, %v665
      %717 = vmatprep.subr.bf16.mxu0 %v670
      %718 = vmatpush1.bf16.msra.mxu0 %v669
      %719 = vmatprep.subr.bf16.mxu0 %v673
      %720 = vmatpush1.bf16.msra.mxu0 %v672
      %721 = vmatprep.subr.bf16.mxu0 %v676
      %722 = vmatpush1.bf16.msra.mxu0 %v675
      %723 = vmatprep.subr.bf16.mxu0 %v679
      %724 = vmatpush1.bf16.msra.mxu0 %v678
      %725 = vmatprep.subr.bf16.mxu0 %v682
      %726 = vmatpush1.bf16.msra.mxu0 %v681
      %727 = vmatprep.subr.bf16.mxu0 %v685
      %728 = vmatpush1.bf16.msra.mxu0 %v684
      %729 = vmatprep.subr.bf16.mxu0 %v688
      %730 = vmatpush1.bf16.msra.mxu0 %v687
      %731 = vmatprep.subr.bf16.mxu0 %v691
      %732 = vmatpush1.bf16.msra.mxu0 %v690
      %733 = vmatprep.subr.bf16.mxu0 0
      %734 = vmatpush1.bf16.msra.mxu0 0
      %735 = vmatprep.subr.bf16.mxu0 0
      %736 = vmatpush1.bf16.msra.mxu0 0
      %737 = vmatprep.subr.bf16.mxu0 0
      %738 = vmatpush1.bf16.msra.mxu0 0
      %739 = vmatprep.subr.bf16.mxu0 0
      %740 = vmatpush1.bf16.msra.mxu0 0
      %741 = vmatprep.subr.bf16.mxu0 0
      %742 = vmatpush1.bf16.msra.mxu0 0
      %743 = vmatprep.subr.bf16.mxu0 0
      %744 = vmatpush1.bf16.msra.mxu0 0
      %745 = vmatprep.subr.bf16.mxu0 0
      %746 = vmatpush1.bf16.msra.mxu0 0
      %747 = vmatprep.subr.bf16.mxu0 0
      %748 = vmatpush1.bf16.msra.mxu0 0
      %749 = vmatprep.mubr.bf16.mxu0 0
      %750 = vmatmul.mubr.bf16.gmra.mrb[0].mxu0 %v536
      %v751 = vpop.f32.mrb[0].mxu0
      %v752 = vadd.f32 %v577, %v751
      %v753 = vpop.f32.mrb[0].mxu0
      %v754 = vadd.f32 %v581, %v753
      %v755 = vpop.f32.mrb[0].mxu0
      %v756 = vadd.f32 %v577, %v755
      %v757 = vpop.f32.mrb[0].mxu0
      %v758 = vadd.f32 %v581, %v757
      %759 = vmatprep.mubr.bf16.mxu0 0
      %760 = vmatmul.mubr.bf16.gmra.mrb[0].mxu0 %v537
      %v761 = vpop.f32.mrb[0].mxu0
      %v762 = vadd.f32 %v577, %v761
      %v763 = vpop.f32.mrb[0].mxu0
      %v764 = vadd.f32 %v581, %v763
      %v765 = vpop.f32.mrb[0].mxu0
      %v766 = vadd.f32 %v577, %v765
      %v767 = vpop.f32.mrb[0].mxu0
      %v768 = vadd.f32 %v581, %v767
      %769 = vmatprep.mubr.bf16.mxu0 0
      %770 = vmatmul.mubr.bf16.gmra.mrb[0].mxu0 %v538
      %v771 = vpop.f32.mrb[0].mxu0
      %v772 = vadd.f32 %v577, %v771
      %v773 = vpop.f32.mrb[0].mxu0
      %v774 = vadd.f32 %v581, %v773
      %v775 = vpop.f32.mrb[0].mxu0
      %v776 = vadd.f32 %v577, %v775
      %v777 = vpop.f32.mrb[0].mxu0
      %v778 = vadd.f32 %v581, %v777
      %779 = vmatprep.mubr.bf16.mxu0 0
      %780 = vmatmul.mubr.bf16.gmra.mrb[0].mxu0 %v539
      %v781 = vpop.f32.mrb[0].mxu0
      %v782 = vadd.f32 %v577, %v781
      %v783 = vpop.f32.mrb[0].mxu0
      %v784 = vadd.f32 %v581, %v783
      %v785 = vpop.f32.mrb[0].mxu0
      %v786 = vadd.f32 %v577, %v785
      %v787 = vpop.f32.mrb[0].mxu0
      %v788 = vadd.f32 %v581, %v787
      %789 = vdwg.mxu0
      %790 = vmatprep.subr.bf16.mxu0 0
      %791 = vmatpush1.bf16.msra.mxu0 %v671
      %792 = vmatprep.subr.bf16.mxu0 0
      %793 = vmatpush1.bf16.msra.mxu0 %v674
      %794 = vmatprep.subr.bf16.mxu0 0
      %795 = vmatpush1.bf16.msra.mxu0 %v677
      %796 = vmatprep.subr.bf16.mxu0 0
      %797 = vmatpush1.bf16.msra.mxu0 %v680
      %798 = vmatprep.subr.bf16.mxu0 0
      %799 = vmatpush1.bf16.msra.mxu0 %v683
      %800 = vmatprep.subr.bf16.mxu0 0
      %801 = vmatpush1.bf16.msra.mxu0 %v686
      %802 = vmatprep.subr.bf16.mxu0 0
      %803 = vmatpush1.bf16.msra.mxu0 %v689
      %804 = vmatprep.subr.bf16.mxu0 0
      %805 = vmatpush1.bf16.msra.mxu0 %v692
      %806 = vmatprep.subr.bf16.mxu0 0
      %807 = vmatpush1.bf16.msra.mxu0 0
      %808 = vmatprep.subr.bf16.mxu0 0
      %809 = vmatpush1.bf16.msra.mxu0 0
      %810 = vmatprep.subr.bf16.mxu0 0
      %811 = vmatpush1.bf16.msra.mxu0 0
      %812 = vmatprep.subr.bf16.mxu0 0
      %813 = vmatpush1.bf16.msra.mxu0 0
      %814 = vmatprep.subr.bf16.mxu0 0
      %815 = vmatpush1.bf16.msra.mxu0 0
      %816 = vmatprep.subr.bf16.mxu0 0
      %817 = vmatpush1.bf16.msra.mxu0 0
      %818 = vmatprep.subr.bf16.mxu0 0
      %819 = vmatpush1.bf16.msra.mxu0 0
      %820 = vmatprep.subr.bf16.mxu0 0
      %821 = vmatpush1.bf16.msra.mxu0 0
      %822 = vmatprep.mubr.bf16.mxu0 0
      %823 = vmatmul.mubr.bf16.gmra.mrb[0].mxu0 %v536
      %v824 = vpop.f32.mrb[0].mxu0
      %v825 = vadd.f32 %v585, %v824
      %v826 = vpop.f32.mrb[0].mxu0
      %v827 = vpop.f32.mrb[0].mxu0
      %v828 = vadd.f32 %v585, %v827
      %v829 = vpop.f32.mrb[0].mxu0
      %830 = vmatprep.mubr.bf16.mxu0 0
      %831 = vmatmul.mubr.bf16.gmra.mrb[0].mxu0 %v537
      %v832 = vpop.f32.mrb[0].mxu0
      %v833 = vadd.f32 %v585, %v832
      %v834 = vpop.f32.mrb[0].mxu0
      %v835 = vpop.f32.mrb[0].mxu0
      %v836 = vadd.f32 %v585, %v835
      %v837 = vpop.f32.mrb[0].mxu0
      %838 = vmatprep.mubr.bf16.mxu0 0
      %839 = vmatmul.mubr.bf16.gmra.mrb[0].mxu0 %v538
      %v840 = vpop.f32.mrb[0].mxu0
      %v841 = vadd.f32 %v585, %v840
      %v842 = vpop.f32.mrb[0].mxu0
      %v843 = vpop.f32.mrb[0].mxu0
      %v844 = vadd.f32 %v585, %v843
      %v845 = vpop.f32.mrb[0].mxu0
      %846 = vmatprep.mubr.bf16.mxu0 0
      %847 = vmatmul.mubr.bf16.gmra.mrb[0].mxu0 %v539
      %v848 = vpop.f32.mrb[0].mxu0
      %v849 = vadd.f32 %v585, %v848
      %v850 = vpop.f32.mrb[0].mxu0
      %v851 = vpop.f32.mrb[0].mxu0
      %v852 = vadd.f32 %v585, %v851
      %v853 = vpop.f32.mrb[0].mxu0
      %854 = vdwg.mxu0
      %v855 = vpack.c.bf16 %v756, %v752
      %v856 = vpack.c.bf16 %v766, %v762
      %v857 = vpack.c.bf16 %v776, %v772
      %v858 = vpack.c.bf16 %v786, %v782
      %v863 = vunpack.c.l.b16 %v855
      %v864 = vunpack.c.h.b16 %v855
      %v865 = vunpack.c.l.b16 %v856
      %v866 = vunpack.c.h.b16 %v856
      %v867 = vunpack.c.l.b16 %v857
      %v868 = vunpack.c.h.b16 %v857
      %v869 = vunpack.c.l.b16 %v858
      %v870 = vunpack.c.h.b16 %v858
      %v871 = vpack.c.b16 %v863, %v863
      %v872 = vpack.c.b16 %v864, %v864
      %v873 = vpack.c.b16 %v865, %v865
      %v874 = vpack.c.b16 %v866, %v866
      %v875 = vpack.c.b16 %v867, %v867
      %v876 = vpack.c.b16 %v868, %v868
      %v877 = vpack.c.b16 %v869, %v869
      %v878 = vpack.c.b16 %v870, %v870
      %887 = vst [vmem:[%s380] sm:$0xf] %v871
      %888 = vst [vmem:[%s380 + $0x4] sm:$0xf] %v872
      %889 = vst [vmem:[%s380 + $0x8] sm:$0xf] %v873
      %890 = vst [vmem:[%s380 + $0xc] sm:$0xf] %v874
      %891 = vst [vmem:[%s380 + $0x10] sm:$0xf] %v875
      %892 = vst [vmem:[%s380 + $0x14] sm:$0xf] %v876
      %893 = vst [vmem:[%s380 + $0x18] sm:$0xf] %v877
      %894 = vst [vmem:[%s380 + $0x1c] sm:$0xf] %v878
      %v895 = vpack.c.bf16 %v758, %v754
      %v896 = vpack.c.bf16 %v768, %v764
      %v897 = vpack.c.bf16 %v778, %v774
      %v898 = vpack.c.bf16 %v788, %v784
      %v903 = vunpack.c.l.b16 %v895
      %v904 = vunpack.c.h.b16 %v895
      %v905 = vunpack.c.l.b16 %v896
      %v906 = vunpack.c.h.b16 %v896
      %v907 = vunpack.c.l.b16 %v897
      %v908 = vunpack.c.h.b16 %v897
      %v909 = vunpack.c.l.b16 %v898
      %v910 = vunpack.c.h.b16 %v898
      %v911 = vpack.c.b16 %v903, %v903
      %v912 = vpack.c.b16 %v904, %v904
      %v913 = vpack.c.b16 %v905, %v905
      %v914 = vpack.c.b16 %v906, %v906
      %v915 = vpack.c.b16 %v907, %v907
      %v916 = vpack.c.b16 %v908, %v908
      %v917 = vpack.c.b16 %v909, %v909
      %v918 = vpack.c.b16 %v910, %v910
      %927 = vst [vmem:[%s390] sm:$0xf] %v911
      %928 = vst [vmem:[%s390 + $0x4] sm:$0xf] %v912
      %929 = vst [vmem:[%s390 + $0x8] sm:$0xf] %v913
      %930 = vst [vmem:[%s390 + $0xc] sm:$0xf] %v914
      %931 = vst [vmem:[%s390 + $0x10] sm:$0xf] %v915
      %932 = vst [vmem:[%s390 + $0x14] sm:$0xf] %v916
      %933 = vst [vmem:[%s390 + $0x18] sm:$0xf] %v917
      %934 = vst [vmem:[%s390 + $0x1c] sm:$0xf] %v918
      %v935 = vpack.c.bf16 %v828, %v825
      %v936 = vpack.c.bf16 %v836, %v833
      %v937 = vpack.c.bf16 %v844, %v841
      %v938 = vpack.c.bf16 %v852, %v849
      %v943 = vunpack.c.l.b16 %v935
      %v944 = vunpack.c.h.b16 %v935
      %v945 = vunpack.c.l.b16 %v936
      %v946 = vunpack.c.h.b16 %v936
      %v947 = vunpack.c.l.b16 %v937
      %v948 = vunpack.c.h.b16 %v937
      %v949 = vunpack.c.l.b16 %v938
      %v950 = vunpack.c.h.b16 %v938
      %v951 = vpack.c.b16 %v943, %v943
      %v952 = vpack.c.b16 %v944, %v944
      %v953 = vpack.c.b16 %v945, %v945
      %v954 = vpack.c.b16 %v946, %v946
      %v955 = vpack.c.b16 %v947, %v947
      %v956 = vpack.c.b16 %v948, %v948
      %v957 = vpack.c.b16 %v949, %v949
      %v958 = vpack.c.b16 %v950, %v950
      %967 = vst [vmem:[%s400] sm:$0xf] %v951
      %968 = vst [vmem:[%s400 + $0x4] sm:$0xf] %v952
      %969 = vst [vmem:[%s400 + $0x8] sm:$0xf] %v953
      %970 = vst [vmem:[%s400 + $0xc] sm:$0xf] %v954
      %971 = vst [vmem:[%s400 + $0x10] sm:$0xf] %v955
      %972 = vst [vmem:[%s400 + $0x14] sm:$0xf] %v956
      %973 = vst [vmem:[%s400 + $0x18] sm:$0xf] %v957
      %974 = vst [vmem:[%s400 + $0x1c] sm:$0xf] %v958
      %v975 = vadd.f32 %v528, %v529
      %v976 = vadd.f32 %v975, %v530
      %v977 = vadd.f32 %v976, %v531
      %v978 = vadd.f32 %v977, %v532
      %v979 = vadd.f32 %v978, %v533
      %v980 = vadd.f32 %v979, %v534
      %v981 = vadd.f32 %v980, %v535
      %v982 = vrot.slane %v981, 4
      %v983 = vadd.f32 %v981, %v982
      %v984 = vrot.slane %v983, 2
      %v985 = vadd.f32 %v983, %v984
      %v986 = vrot.slane %v985, 1
      %v987 = vadd.f32 %v985, %v986
      %988 = vst [vmem:[%s407] sm:$0x1] %v987
      %s989 = smul.u32 8, %s25
      %p990 = scmp.lt.s32.totalorder %s24, 1
      %s991 = scalar_select %p990, %s24, 1
      %p992 = scmp.lt.s32.totalorder %s989, 7
      %s993 = scalar_select %p992, %s989, 7
      %s994 = smul.addr %s991, 8
      %s995 = sadd.s32 %s993, %s994
      %s996 = smul.addr %s995, 4
      %s997 = scalar_lea.vmem %s5, %s996
      %s998 = smul.u32 8, %s25
      %p999 = scmp.lt.s32.totalorder %s24, 1
      %s1000 = scalar_select %p999, %s24, 1
      %p1001 = scmp.lt.s32.totalorder %s998, 7
      %s1002 = scalar_select %p1001, %s998, 7
      %s1003 = smul.addr %s1000, 8
      %s1004 = sadd.s32 %s1002, %s1003
      %s1005 = smul.addr %s1004, 4
      %s1006 = scalar_lea.vmem %s6, %s1005
      %s1007 = smul.u32 8, %s25
      %p1008 = scmp.lt.s32.totalorder %s24, 1
      %s1009 = scalar_select %p1008, %s24, 1
      %p1010 = scmp.lt.s32.totalorder %s1007, 7
      %s1011 = scalar_select %p1010, %s1007, 7
      %s1012 = smul.addr %s1009, 8
      %s1013 = sadd.s32 %s1011, %s1012
      %s1014 = smul.addr %s1013, 4
      %s1015 = scalar_lea.vmem %s7, %s1014
      %p1016 = scmp.lt.s32.totalorder %s24, 1
      %s1017 = scalar_select %p1016, %s24, 1
      %p1018 = scmp.lt.s32.totalorder %s25, 0
      %s1019 = scalar_select %p1018, %s25, 0
      %s1020 = sadd.s32 %s1019, %s1017
      %s1021 = scalar_lea.vmem %s8, %s1020
      // Predicated region
      $region41: #{_lambda_.2} parent=39 // pred_check
        %p1022 = pneg %p164
      $region42: #{_lambda_.2} parent=39 // pred_check_branch
        %1024 = sbr.rel (%p1022) target = $region44
      $region43: #{_lambda_.2} parent=39 // pred_region
        %s1025 = smul.u32 8, %s25
      $region44: #{_lambda_.2} parent=39 // pred_fallthru
        _
      // Predicated region
      $region45: #{_lambda_.2} parent=39 // pred_check
        %p1026 = pneg %p192
      $region46: #{_lambda_.2} parent=39 // pred_check_branch
        %1028 = sbr.rel (%p1026) target = $region48
      $region47: #{_lambda_.2} parent=39 // pred_region
        %s1029 = smul.u32 8, %s25
      $region48: #{_lambda_.2} parent=39 // pred_fallthru
        _
      // Predicated region
      $region49: #{_lambda_.2} parent=39 // pred_check
        %p1030 = pneg %p220
      $region50: #{_lambda_.2} parent=39 // pred_check_branch
        %1032 = sbr.rel (%p1030) target = $region52
      $region51: #{_lambda_.2} parent=39 // pred_region
        %s1033 = smul.u32 8, %s25
      $region52: #{_lambda_.2} parent=39 // pred_fallthru
        _
      // Predicated region
      $region53: #{_lambda_.2} parent=39 // pred_check
        %p1034 = pneg %p248
      $region54: #{_lambda_.2} parent=39 // pred_check_branch
        %1036 = sbr.rel (%p1034) target = $region56
      $region55: #{_lambda_.2} parent=39 // pred_region
        _
      $region56: #{_lambda_.2} parent=39 // pred_fallthru
        _
    $region40: #{_lambda_.2} parent=5 // pred_fallthru
      _
    %p1037 = scmp.le.s32.totalorder 2, %s15
    // Predicated region
    $region57: #{_lambda_.2} parent=5 // pred_check
      %p1038 = pneg %p1037
    $region58: #{_lambda_.2} parent=5 // pred_check_branch
      %1040 = sbr.rel (%p1038) target = $region60
    $region59: #{_lambda_.2} parent=5 // pred_region
      %s1041 = ssub.s32 %s15, 2
      // Predicated region
      $region61: #{_lambda_.2} parent=59 // pred_check
        %p1042 = pneg %p170
      $region62: #{_lambda_.2} parent=59 // pred_check_branch
        %1044 = sbr.rel (%p1042) target = $region64
      $region63: #{_lambda_.2} parent=59 // pred_region
        %s1045 = smul.u32 8, %s27
        %p1046 = scmp.lt.s32.totalorder %s26, 1
        %s1047 = scalar_select %p1046, %s26, 1
        %p1048 = scmp.lt.s32.totalorder %s1045, 7
        %s1049 = scalar_select %p1048, %s1045, 7
        %s1050 = smul.addr %s1047, 8
        %s1051 = sadd.s32 %s1049, %s1050
        %s1052 = smul.addr %s1051, 4
        %s1053 = scalar_lea.vmem %s5, %s1052
      $region64: #{_lambda_.2} parent=59 // pred_fallthru
        _
      // Predicated region
      $region65: #{_lambda_.2} parent=59 // pred_check
        %p1054 = pneg %p198
      $region66: #{_lambda_.2} parent=59 // pred_check_branch
        %1056 = sbr.rel (%p1054) target = $region68
      $region67: #{_lambda_.2} parent=59 // pred_region
        %s1057 = smul.u32 8, %s27
        %p1058 = scmp.lt.s32.totalorder %s26, 1
        %s1059 = scalar_select %p1058, %s26, 1
        %p1060 = scmp.lt.s32.totalorder %s1057, 7
        %s1061 = scalar_select %p1060, %s1057, 7
        %s1062 = smul.addr %s1059, 8
        %s1063 = sadd.s32 %s1061, %s1062
        %s1064 = smul.addr %s1063, 4
        %s1065 = scalar_lea.vmem %s6, %s1064
      $region68: #{_lambda_.2} parent=59 // pred_fallthru
        _
      // Predicated region
      $region69: #{_lambda_.2} parent=59 // pred_check
        %p1066 = pneg %p226
      $region70: #{_lambda_.2} parent=59 // pred_check_branch
        %1068 = sbr.rel (%p1066) target = $region72
      $region71: #{_lambda_.2} parent=59 // pred_region
        %s1069 = smul.u32 8, %s27
        %p1070 = scmp.lt.s32.totalorder %s26, 1
        %s1071 = scalar_select %p1070, %s26, 1
        %p1072 = scmp.lt.s32.totalorder %s1069, 7
        %s1073 = scalar_select %p1072, %s1069, 7
        %s1074 = smul.addr %s1071, 8
        %s1075 = sadd.s32 %s1073, %s1074
        %s1076 = smul.addr %s1075, 4
        %s1077 = scalar_lea.vmem %s7, %s1076
      $region72: #{_lambda_.2} parent=59 // pred_fallthru
        _
      // Predicated region
      $region73: #{_lambda_.2} parent=59 // pred_check
        %p1078 = pneg %p254
      $region74: #{_lambda_.2} parent=59 // pred_check_branch
        %1080 = sbr.rel (%p1078) target = $region76
      $region75: #{_lambda_.2} parent=59 // pred_region
        %p1081 = scmp.lt.s32.totalorder %s26, 1
        %s1082 = scalar_select %p1081, %s26, 1
        %p1083 = scmp.lt.s32.totalorder %s27, 0
        %s1084 = scalar_select %p1083, %s27, 0
        %s1085 = sadd.s32 %s1084, %s1082
        %s1086 = scalar_lea.vmem %s8, %s1085
      $region76: #{_lambda_.2} parent=59 // pred_fallthru
        _
    $region60: #{_lambda_.2} parent=5 // pred_fallthru
      _
  $region6: #{_lambda_.2} parent=0 // loop_footer
    %s19 = sadd.s32 1, %s15
  $region7: #{_lambda_.2} parent=0 // loop_footer_branch
    %14 = sbr.rel target = $region3
  $region8: #{_lambda_.2} parent=0 // loop_exit
    _

// kernel: _lambda_.3
$region0: #{_lambda_.3}
  #allocation0 [shape = 'u32[]', space=smem, size = 0x4, offset = 0x4, fixed_abs, tag = 'smem constant byte address 0x4 - core index']
  #allocation1 [shape = 'u32[144,128]{1,0:T(1,128)}', space=vmem, size = 0x12000, scoped, tag = 'internal scratch']
  %s0 = inlined_call_operand.vmem [shape: f32[2,3,128], index: 0, kind: input, shape index: {}]
  %s1 = inlined_call_operand.vmem [shape: bf16[2,64,128], index: 1, kind: input, shape index: {}]
  %s2 = inlined_call_operand.vmem [shape: bf16[2,64,128], index: 2, kind: input, shape index: {}]
  %s3 = inlined_call_operand.vmem [shape: bf16[2,64,128], index: 3, kind: input, shape index: {}]
  %s4 = inlined_call_operand.vmem [shape: f32[2,64,128], index: 4, kind: input, shape index: {}, may-alias: {4,11}]
  %s5 = inlined_call_operand.vmem [shape: f32[1,128], index: 5, kind: input, shape index: {}]
  %s6 = inlined_call_operand.vmem [shape: f32[1,128], index: 6, kind: input, shape index: {}]
  %s7 = inlined_call_operand.vmem [shape: bf16[128,512], index: 7, kind: input, shape index: {}]
  %s8 = inlined_call_operand.vmem [shape: f32[1,512], index: 8, kind: input, shape index: {}]
  %s9 = inlined_call_operand.vmem [shape: bf16[512,128], index: 9, kind: input, shape index: {}]
  %s10 = inlined_call_operand.vmem [shape: f32[1,128], index: 10, kind: input, shape index: {}]
  %s11 = inlined_call_operand.vmem [shape: f32[2,64,128], index: 11, kind: output, shape index: {}, may-alias: {4,11}]
  %s12 = sld [smem:[#allocation0]]
  $region77: #{_lambda_.3} parent=0
    _
  %s14 = ssub.s32 1, %s12
  %s15 = scalar_select 0, %s14, %s12
  loop: start=0, step=1, limit=4
  $region2: #{_lambda_.3} parent=0 // loop_pre_header
    _
  $region3: #{_lambda_.3} parent=0 // loop_header
    %s17 = sphi 0, %s21
    %p18 = scmp.ge.s32.totalorder %s17, 4
    %s24 = sphi 0, %s36
    %s25 = sphi 0, %s32
    %s26 = sphi 0, %s24
    %s27 = sphi 0, %s25
    %s28 = sphi 0, %s26
    %s29 = sphi 0, %s27
    %s39 = sphi 0, %s41
    %s42 = sphi 0, %s39
    %s43 = sphi 0, %s42
    %s59 = sphi 0, %s43
    %s67 = sphi 0, %s69
    %s70 = sphi 0, %s67
    %s71 = sphi 0, %s70
    %s87 = sphi 0, %s71
    %s95 = sphi 0, %s97
    %s98 = sphi 0, %s95
    %s99 = sphi 0, %s98
    %s115 = sphi 0, %s99
    %s123 = sphi 0, %s125
    %s126 = sphi 0, %s123
    %s127 = sphi 0, %s126
    %s143 = sphi 0, %s127
    %s151 = sphi 0, %s153
    %s154 = sphi 0, %s151
    %s155 = sphi 0, %s154
    %s171 = sphi 0, %s155
    %s175 = sphi 0, %s175
    %s177 = sphi 0, %s175
    %s178 = sphi 0, %s177
    %s192 = sphi 0, %s178
    %s196 = sphi 0, %s196
    %s198 = sphi 0, %s196
    %s199 = sphi 0, %s198
    %s213 = sphi 0, %s199
    %s217 = sphi 0, %s217
    %s219 = sphi 0, %s217
    %s220 = sphi 0, %s219
    %s234 = sphi 0, %s220
    %s238 = sphi 0, %s238
    %s240 = sphi 0, %s238
    %s241 = sphi 0, %s240
    %s255 = sphi 0, %s241
    %s259 = sphi 0, %s259
    %s261 = sphi 0, %s259
    %s262 = sphi 0, %s261
    %s276 = sphi 0, %s262
    %s280 = sphi 0, %s280
    %s282 = sphi 0, %s280
    %s283 = sphi 0, %s282
    %s297 = sphi 0, %s283
    %s305 = sphi 0, %s307
    %s308 = sphi 0, %s305
    %s309 = sphi 0, %s308
    %s325 = sphi 0, %s309
  $region4: #{_lambda_.3} parent=0 // loop_header_branch
    %20 = sbr.rel (%p18) target = $region8
  $region5: #{_lambda_.3} parent=0 // loop_body
    %s22 = ssub.s32 %s17, 1
    %s23 = ssub.s32 %s17, 2
    %s30 = sadd.s32 1, %s25
    %p31 = scmp.ge.s32.totalorder %s30, 1
    %s32 = scalar_select %p31, 0, %s30
    %s33 = sadd.s32 1, %s24
    %s34 = scalar_select %p31, %s33, %s24
    %p35 = scmp.ge.s32.totalorder %s34, 2
    %s36 = scalar_select %p35, 0, %s34
    %s37 = ssub.s32 %s24, %s36
    %p38 = scmp.eq.s32.totalorder %s37, 0
    %s40 = sadd.s32 %s39, 1
    %s41 = scalar_select %p38, %s39, %s40
    %p44 = pneg %p38
    %p45 = scmp.eq.s32.totalorder %s17, 1
    %p46 = por %p44, %p45
    %p47 = scmp.ne.s32.totalorder %s39, %s42
    %p48 = scmp.eq.s32.totalorder %s17, 0
    %p49 = por %p47, %p48
    %p50 = scmp.ne.s32.totalorder %s39, %s42
    %p51 = scmp.eq.s32.totalorder %s22, 1
    %p52 = por %p50, %p51
    %p53 = scmp.ne.s32.totalorder %s42, %s43
    %p54 = scmp.eq.s32.totalorder %s22, 0
    %p55 = por %p53, %p54
    %p56 = scmp.ne.s32.totalorder %s42, %s43
    %p57 = scmp.eq.s32.totalorder %s23, 1
    %p58 = por %p56, %p57
    %p60 = scmp.ne.s32.totalorder %s43, %s59
    %p61 = scmp.eq.s32.totalorder %s23, 0
    %p62 = por %p60, %p61
    %s63 = ssub.s32 %s24, %s36
    %s64 = ssub.s32 %s25, %s32
    %s65 = sor.u32 %s63, %s64
    %p66 = scmp.eq.s32.totalorder %s65, 0
    %s68 = sadd.s32 %s67, 1
    %s69 = scalar_select %p66, %s67, %s68
    %p72 = pneg %p66
    %p73 = scmp.eq.s32.totalorder %s17, 1
    %p74 = por %p72, %p73
    %p75 = scmp.ne.s32.totalorder %s67, %s70
    %p76 = scmp.eq.s32.totalorder %s17, 0
    %p77 = por %p75, %p76
    %p78 = scmp.ne.s32.totalorder %s67, %s70
    %p79 = scmp.eq.s32.totalorder %s22, 1
    %p80 = por %p78, %p79
    %p81 = scmp.ne.s32.totalorder %s70, %s71
    %p82 = scmp.eq.s32.totalorder %s22, 0
    %p83 = por %p81, %p82
    %p84 = scmp.ne.s32.totalorder %s70, %s71
    %p85 = scmp.eq.s32.totalorder %s23, 1
    %p86 = por %p84, %p85
    %p88 = scmp.ne.s32.totalorder %s71, %s87
    %p89 = scmp.eq.s32.totalorder %s23, 0
    %p90 = por %p88, %p89
    %s91 = ssub.s32 %s24, %s36
    %s92 = ssub.s32 %s25, %s32
    %s93 = sor.u32 %s91, %s92
    %p94 = scmp.eq.s32.totalorder %s93, 0
    %s96 = sadd.s32 %s95, 1
    %s97 = scalar_select %p94, %s95, %s96
    %p100 = pneg %p94
    %p101 = scmp.eq.s32.totalorder %s17, 1
    %p102 = por %p100, %p101
    %p103 = scmp.ne.s32.totalorder %s95, %s98
    %p104 = scmp.eq.s32.totalorder %s17, 0
    %p105 = por %p103, %p104
    %p106 = scmp.ne.s32.totalorder %s95, %s98
    %p107 = scmp.eq.s32.totalorder %s22, 1
    %p108 = por %p106, %p107
    %p109 = scmp.ne.s32.totalorder %s98, %s99
    %p110 = scmp.eq.s32.totalorder %s22, 0
    %p111 = por %p109, %p110
    %p112 = scmp.ne.s32.totalorder %s98, %s99
    %p113 = scmp.eq.s32.totalorder %s23, 1
    %p114 = por %p112, %p113
    %p116 = scmp.ne.s32.totalorder %s99, %s115
    %p117 = scmp.eq.s32.totalorder %s23, 0
    %p118 = por %p116, %p117
    %s119 = ssub.s32 %s24, %s36
    %s120 = ssub.s32 %s25, %s32
    %s121 = sor.u32 %s119, %s120
    %p122 = scmp.eq.s32.totalorder %s121, 0
    %s124 = sadd.s32 %s123, 1
    %s125 = scalar_select %p122, %s123, %s124
    %p128 = pneg %p122
    %p129 = scmp.eq.s32.totalorder %s17, 1
    %p130 = por %p128, %p129
    %p131 = scmp.ne.s32.totalorder %s123, %s126
    %p132 = scmp.eq.s32.totalorder %s17, 0
    %p133 = por %p131, %p132
    %p134 = scmp.ne.s32.totalorder %s123, %s126
    %p135 = scmp.eq.s32.totalorder %s22, 1
    %p136 = por %p134, %p135
    %p137 = scmp.ne.s32.totalorder %s126, %s127
    %p138 = scmp.eq.s32.totalorder %s22, 0
    %p139 = por %p137, %p138
    %p140 = scmp.ne.s32.totalorder %s126, %s127
    %p141 = scmp.eq.s32.totalorder %s23, 1
    %p142 = por %p140, %p141
    %p144 = scmp.ne.s32.totalorder %s127, %s143
    %p145 = scmp.eq.s32.totalorder %s23, 0
    %p146 = por %p144, %p145
    %s147 = ssub.s32 %s24, %s36
    %s148 = ssub.s32 %s25, %s32
    %s149 = sor.u32 %s147, %s148
    %p150 = scmp.eq.s32.totalorder %s149, 0
    %s152 = sadd.s32 %s151, 1
    %s153 = scalar_select %p150, %s151, %s152
    %p156 = pneg %p150
    %p157 = scmp.eq.s32.totalorder %s17, 1
    %p158 = por %p156, %p157
    %p159 = scmp.ne.s32.totalorder %s151, %s154
    %p160 = scmp.eq.s32.totalorder %s17, 0
    %p161 = por %p159, %p160
    %p162 = scmp.ne.s32.totalorder %s151, %s154
    %p163 = scmp.eq.s32.totalorder %s22, 1
    %p164 = por %p162, %p163
    %p165 = scmp.ne.s32.totalorder %s154, %s155
    %p166 = scmp.eq.s32.totalorder %s22, 0
    %p167 = por %p165, %p166
    %p168 = scmp.ne.s32.totalorder %s154, %s155
    %p169 = scmp.eq.s32.totalorder %s23, 1
    %p170 = por %p168, %p169
    %p172 = scmp.ne.s32.totalorder %s155, %s171
    %p173 = scmp.eq.s32.totalorder %s23, 0
    %p174 = por %p172, %p173
    %s176 = sadd.s32 %s175, 1
    %p179 = scmp.eq.s32.totalorder %s17, 1
    %p180 = scmp.ne.s32.totalorder %s175, %s177
    %p181 = scmp.eq.s32.totalorder %s17, 0
    %p182 = por %p180, %p181
    %p183 = scmp.ne.s32.totalorder %s175, %s177
    %p184 = scmp.eq.s32.totalorder %s22, 1
    %p185 = por %p183, %p184
    %p186 = scmp.ne.s32.totalorder %s177, %s178
    %p187 = scmp.eq.s32.totalorder %s22, 0
    %p188 = por %p186, %p187
    %p189 = scmp.ne.s32.totalorder %s177, %s178
    %p190 = scmp.eq.s32.totalorder %s23, 1
    %p191 = por %p189, %p190
    %p193 = scmp.ne.s32.totalorder %s178, %s192
    %p194 = scmp.eq.s32.totalorder %s23, 0
    %p195 = por %p193, %p194
    %s197 = sadd.s32 %s196, 1
    %p200 = scmp.eq.s32.totalorder %s17, 1
    %p201 = scmp.ne.s32.totalorder %s196, %s198
    %p202 = scmp.eq.s32.totalorder %s17, 0
    %p203 = por %p201, %p202
    %p204 = scmp.ne.s32.totalorder %s196, %s198
    %p205 = scmp.eq.s32.totalorder %s22, 1
    %p206 = por %p204, %p205
    %p207 = scmp.ne.s32.totalorder %s198, %s199
    %p208 = scmp.eq.s32.totalorder %s22, 0
    %p209 = por %p207, %p208
    %p210 = scmp.ne.s32.totalorder %s198, %s199
    %p211 = scmp.eq.s32.totalorder %s23, 1
    %p212 = por %p210, %p211
    %p214 = scmp.ne.s32.totalorder %s199, %s213
    %p215 = scmp.eq.s32.totalorder %s23, 0
    %p216 = por %p214, %p215
    %s218 = sadd.s32 %s217, 1
    %p221 = scmp.eq.s32.totalorder %s17, 1
    %p222 = scmp.ne.s32.totalorder %s217, %s219
    %p223 = scmp.eq.s32.totalorder %s17, 0
    %p224 = por %p222, %p223
    %p225 = scmp.ne.s32.totalorder %s217, %s219
    %p226 = scmp.eq.s32.totalorder %s22, 1
    %p227 = por %p225, %p226
    %p228 = scmp.ne.s32.totalorder %s219, %s220
    %p229 = scmp.eq.s32.totalorder %s22, 0
    %p230 = por %p228, %p229
    %p231 = scmp.ne.s32.totalorder %s219, %s220
    %p232 = scmp.eq.s32.totalorder %s23, 1
    %p233 = por %p231, %p232
    %p235 = scmp.ne.s32.totalorder %s220, %s234
    %p236 = scmp.eq.s32.totalorder %s23, 0
    %p237 = por %p235, %p236
    %s239 = sadd.s32 %s238, 1
    %p242 = scmp.eq.s32.totalorder %s17, 1
    %p243 = scmp.ne.s32.totalorder %s238, %s240
    %p244 = scmp.eq.s32.totalorder %s17, 0
    %p245 = por %p243, %p244
    %p246 = scmp.ne.s32.totalorder %s238, %s240
    %p247 = scmp.eq.s32.totalorder %s22, 1
    %p248 = por %p246, %p247
    %p249 = scmp.ne.s32.totalorder %s240, %s241
    %p250 = scmp.eq.s32.totalorder %s22, 0
    %p251 = por %p249, %p250
    %p252 = scmp.ne.s32.totalorder %s240, %s241
    %p253 = scmp.eq.s32.totalorder %s23, 1
    %p254 = por %p252, %p253
    %p256 = scmp.ne.s32.totalorder %s241, %s255
    %p257 = scmp.eq.s32.totalorder %s23, 0
    %p258 = por %p256, %p257
    %s260 = sadd.s32 %s259, 1
    %p263 = scmp.eq.s32.totalorder %s17, 1
    %p264 = scmp.ne.s32.totalorder %s259, %s261
    %p265 = scmp.eq.s32.totalorder %s17, 0
    %p266 = por %p264, %p265
    %p267 = scmp.ne.s32.totalorder %s259, %s261
    %p268 = scmp.eq.s32.totalorder %s22, 1
    %p269 = por %p267, %p268
    %p270 = scmp.ne.s32.totalorder %s261, %s262
    %p271 = scmp.eq.s32.totalorder %s22, 0
    %p272 = por %p270, %p271
    %p273 = scmp.ne.s32.totalorder %s261, %s262
    %p274 = scmp.eq.s32.totalorder %s23, 1
    %p275 = por %p273, %p274
    %p277 = scmp.ne.s32.totalorder %s262, %s276
    %p278 = scmp.eq.s32.totalorder %s23, 0
    %p279 = por %p277, %p278
    %s281 = sadd.s32 %s280, 1
    %p284 = scmp.eq.s32.totalorder %s17, 1
    %p285 = scmp.ne.s32.totalorder %s280, %s282
    %p286 = scmp.eq.s32.totalorder %s17, 0
    %p287 = por %p285, %p286
    %p288 = scmp.ne.s32.totalorder %s280, %s282
    %p289 = scmp.eq.s32.totalorder %s22, 1
    %p290 = por %p288, %p289
    %p291 = scmp.ne.s32.totalorder %s282, %s283
    %p292 = scmp.eq.s32.totalorder %s22, 0
    %p293 = por %p291, %p292
    %p294 = scmp.ne.s32.totalorder %s282, %s283
    %p295 = scmp.eq.s32.totalorder %s23, 1
    %p296 = por %p294, %p295
    %p298 = scmp.ne.s32.totalorder %s283, %s297
    %p299 = scmp.eq.s32.totalorder %s23, 0
    %p300 = por %p298, %p299
    %s301 = ssub.s32 %s24, %s36
    %s302 = ssub.s32 %s25, %s32
    %s303 = sor.u32 %s301, %s302
    %p304 = scmp.eq.s32.totalorder %s303, 0
    %s306 = sadd.s32 %s305, 1
    %s307 = scalar_select %p304, %s305, %s306
    %p310 = pneg %p304
    %p311 = scmp.eq.s32.totalorder %s17, 1
    %p312 = por %p310, %p311
    %p313 = scmp.ne.s32.totalorder %s305, %s308
    %p314 = scmp.eq.s32.totalorder %s17, 0
    %p315 = por %p313, %p314
    %p316 = scmp.ne.s32.totalorder %s305, %s308
    %p317 = scmp.eq.s32.totalorder %s22, 1
    %p318 = por %p316, %p317
    %p319 = scmp.ne.s32.totalorder %s308, %s309
    %p320 = scmp.eq.s32.totalorder %s22, 0
    %p321 = por %p319, %p320
    %p322 = scmp.ne.s32.totalorder %s308, %s309
    %p323 = scmp.eq.s32.totalorder %s23, 1
    %p324 = por %p322, %p323
    %p326 = scmp.ne.s32.totalorder %s309, %s325
    %p327 = scmp.eq.s32.totalorder %s23, 0
    %p328 = por %p326, %p327
    %p329 = scmp.le.s32.totalorder 1, %s17
    %p330 = scmp.lt.s32.totalorder %s17, 3
    %p331 = pnand %p329, %p330
    %p332 = pneg %p331
    // Predicated region
    $region9: #{_lambda_.3} parent=5 // pred_check
      _
    $region10: #{_lambda_.3} parent=5 // pred_check_branch
      %334 = sbr.rel (%p331) target = $region12
    $region11: #{_lambda_.3} parent=5 // pred_region
      %s335 = ssub.s32 %s17, 1
      // Predicated region
      $region13: #{_lambda_.3} parent=11 // pred_check
        %p336 = pneg %p188
      $region14: #{_lambda_.3} parent=11 // pred_check_branch
        %338 = sbr.rel (%p336) target = $region16
      $region15: #{_lambda_.3} parent=11 // pred_region
        _
      $region16: #{_lambda_.3} parent=11 // pred_fallthru
        _
      // Predicated region
      $region17: #{_lambda_.3} parent=11 // pred_check
        %p339 = pneg %p209
      $region18: #{_lambda_.3} parent=11 // pred_check_branch
        %341 = sbr.rel (%p339) target = $region20
      $region19: #{_lambda_.3} parent=11 // pred_region
        _
      $region20: #{_lambda_.3} parent=11 // pred_fallthru
        _
      // Predicated region
      $region21: #{_lambda_.3} parent=11 // pred_check
        %p342 = pneg %p230
      $region22: #{_lambda_.3} parent=11 // pred_check_branch
        %344 = sbr.rel (%p342) target = $region24
      $region23: #{_lambda_.3} parent=11 // pred_region
        _
      $region24: #{_lambda_.3} parent=11 // pred_fallthru
        _
      // Predicated region
      $region25: #{_lambda_.3} parent=11 // pred_check
        %p345 = pneg %p251
      $region26: #{_lambda_.3} parent=11 // pred_check_branch
        %347 = sbr.rel (%p345) target = $region28
      $region27: #{_lambda_.3} parent=11 // pred_region
        _
      $region28: #{_lambda_.3} parent=11 // pred_fallthru
        _
      // Predicated region
      $region29: #{_lambda_.3} parent=11 // pred_check
        %p348 = pneg %p272
      $region30: #{_lambda_.3} parent=11 // pred_check_branch
        %350 = sbr.rel (%p348) target = $region32
      $region31: #{_lambda_.3} parent=11 // pred_region
        _
      $region32: #{_lambda_.3} parent=11 // pred_fallthru
        _
      // Predicated region
      $region33: #{_lambda_.3} parent=11 // pred_check
        %p351 = pneg %p293
      $region34: #{_lambda_.3} parent=11 // pred_check_branch
        %353 = sbr.rel (%p351) target = $region36
      $region35: #{_lambda_.3} parent=11 // pred_region
        _
      $region36: #{_lambda_.3} parent=11 // pred_fallthru
        _
    $region12: #{_lambda_.3} parent=5 // pred_fallthru
      _
    %p354 = scmp.lt.s32.totalorder %s17, 2
    // Predicated region
    $region37: #{_lambda_.3} parent=5 // pred_check
      %p355 = pneg %p354
    $region38: #{_lambda_.3} parent=5 // pred_check_branch
      %357 = sbr.rel (%p355) target = $region40
    $region39: #{_lambda_.3} parent=5 // pred_region
      // Predicated region
      $region41: #{_lambda_.3} parent=39 // pred_check
        %p358 = pneg %p49
      $region42: #{_lambda_.3} parent=39 // pred_check_branch
        %360 = sbr.rel (%p358) target = $region44
      $region43: #{_lambda_.3} parent=39 // pred_region
        %p361 = scmp.lt.s32.totalorder %s24, 1
        %s362 = scalar_select %p361, %s24, 1
        %s363 = smul.addr %s362, 4
        %s364 = scalar_lea.vmem %s0, %s363
      $region44: #{_lambda_.3} parent=39 // pred_fallthru
        _
      // Predicated region
      $region45: #{_lambda_.3} parent=39 // pred_check
        %p365 = pneg %p77
      $region46: #{_lambda_.3} parent=39 // pred_check_branch
        %367 = sbr.rel (%p365) target = $region48
      $region47: #{_lambda_.3} parent=39 // pred_region
        %s368 = smul.u32 8, %s25
        %p369 = scmp.lt.s32.totalorder %s24, 1
        %s370 = scalar_select %p369, %s24, 1
        %p371 = scmp.lt.s32.totalorder %s368, 7
        %s372 = scalar_select %p371, %s368, 7
        %s373 = smul.addr %s370, 8
        %s374 = sadd.s32 %s372, %s373
        %s375 = smul.addr %s374, 4
        %s376 = scalar_lea.vmem %s1, %s375
        %s377 = smul.u32 8, %s25
      $region48: #{_lambda_.3} parent=39 // pred_fallthru
        _
      // Predicated region
      $region49: #{_lambda_.3} parent=39 // pred_check
        %p378 = pneg %p105
      $region50: #{_lambda_.3} parent=39 // pred_check_branch
        %380 = sbr.rel (%p378) target = $region52
      $region51: #{_lambda_.3} parent=39 // pred_region
        %s381 = smul.u32 8, %s25
        %p382 = scmp.lt.s32.totalorder %s24, 1
        %s383 = scalar_select %p382, %s24, 1
        %p384 = scmp.lt.s32.totalorder %s381, 7
        %s385 = scalar_select %p384, %s381, 7
        %s386 = smul.addr %s383, 8
        %s387 = sadd.s32 %s385, %s386
        %s388 = smul.addr %s387, 4
        %s389 = scalar_lea.vmem %s2, %s388
        %s390 = smul.u32 8, %s25
      $region52: #{_lambda_.3} parent=39 // pred_fallthru
        _
      // Predicated region
      $region53: #{_lambda_.3} parent=39 // pred_check
        %p391 = pneg %p133
      $region54: #{_lambda_.3} parent=39 // pred_check_branch
        %393 = sbr.rel (%p391) target = $region56
      $region55: #{_lambda_.3} parent=39 // pred_region
        %s394 = smul.u32 8, %s25
        %p395 = scmp.lt.s32.totalorder %s24, 1
        %s396 = scalar_select %p395, %s24, 1
        %p397 = scmp.lt.s32.totalorder %s394, 7
        %s398 = scalar_select %p397, %s394, 7
        %s399 = smul.addr %s396, 8
        %s400 = sadd.s32 %s398, %s399
        %s401 = smul.addr %s400, 4
        %s402 = scalar_lea.vmem %s3, %s401
        %s403 = smul.u32 8, %s25
      $region56: #{_lambda_.3} parent=39 // pred_fallthru
        _
      // Predicated region
      $region57: #{_lambda_.3} parent=39 // pred_check
        %p404 = pneg %p161
      $region58: #{_lambda_.3} parent=39 // pred_check_branch
        %406 = sbr.rel (%p404) target = $region60
      $region59: #{_lambda_.3} parent=39 // pred_region
        %s407 = smul.u32 8, %s25
        %p408 = scmp.lt.s32.totalorder %s24, 1
        %s409 = scalar_select %p408, %s24, 1
        %p410 = scmp.lt.s32.totalorder %s407, 7
        %s411 = scalar_select %p410, %s407, 7
        %s412 = smul.addr %s409, 8
        %s413 = sadd.s32 %s411, %s412
        %s414 = smul.addr %s413, 8
        %s415 = scalar_lea.vmem %s4, %s414
        %s416 = smul.u32 8, %s25
      $region60: #{_lambda_.3} parent=39 // pred_fallthru
        _
    $region40: #{_lambda_.3} parent=5 // pred_fallthru
      _
    %p417 = scmp.le.s32.totalorder 1, %s17
    %p418 = scmp.lt.s32.totalorder %s17, 3
    %p419 = pnand %p417, %p418
    %p420 = pneg %p419
    // Predicated region
    $region61: #{_lambda_.3} parent=5 // pred_check
      _
    $region62: #{_lambda_.3} parent=5 // pred_check_branch
      %422 = sbr.rel (%p419) target = $region64
    $region63: #{_lambda_.3} parent=5 // pred_region
      %s423 = ssub.s32 %s17, 1
      %p424 = scmp.lt.s32.totalorder %s26, 1
      %s425 = scalar_select %p424, %s26, 1
      %s426 = smul.addr %s425, 4
      %s427 = scalar_lea.vmem %s0, %s426
      %p428 = pneg %p55
      %p429 = pneg %p52
      %s430 = smul.u32 8, %s27
      %p431 = scmp.lt.s32.totalorder %s26, 1
      %s432 = scalar_select %p431, %s26, 1
      %p433 = scmp.lt.s32.totalorder %s430, 7
      %s434 = scalar_select %p433, %s430, 7
      %s435 = smul.addr %s432, 8
      %s436 = sadd.s32 %s434, %s435
      %s437 = smul.addr %s436, 4
      %s438 = scalar_lea.vmem %s1, %s437
      %p439 = pneg %p83
      %p440 = pneg %p80
      %s441 = smul.u32 8, %s27
      %p442 = scmp.lt.s32.totalorder %s26, 1
      %s443 = scalar_select %p442, %s26, 1
      %p444 = scmp.lt.s32.totalorder %s441, 7
      %s445 = scalar_select %p444, %s441, 7
      %s446 = smul.addr %s443, 8
      %s447 = sadd.s32 %s445, %s446
      %s448 = smul.addr %s447, 4
      %s449 = scalar_lea.vmem %s2, %s448
      %p450 = pneg %p111
      %p451 = pneg %p108
      %s452 = smul.u32 8, %s27
      %p453 = scmp.lt.s32.totalorder %s26, 1
      %s454 = scalar_select %p453, %s26, 1
      %p455 = scmp.lt.s32.totalorder %s452, 7
      %s456 = scalar_select %p455, %s452, 7
      %s457 = smul.addr %s454, 8
      %s458 = sadd.s32 %s456, %s457
      %s459 = smul.addr %s458, 4
      %s460 = scalar_lea.vmem %s3, %s459
      %p461 = pneg %p139
      %p462 = pneg %p136
      %s463 = smul.u32 8, %s27
      %p464 = scmp.lt.s32.totalorder %s26, 1
      %s465 = scalar_select %p464, %s26, 1
      %p466 = scmp.lt.s32.totalorder %s463, 7
      %s467 = scalar_select %p466, %s463, 7
      %s468 = smul.addr %s465, 8
      %s469 = sadd.s32 %s467, %s468
      %s470 = smul.addr %s469, 8
      %s471 = scalar_lea.vmem %s4, %s470
      %p472 = pneg %p167
      %p473 = pneg %p164
      %p474 = pneg %p188
      %p475 = pneg %p185
      %p476 = pneg %p209
      %p477 = pneg %p206
      %p478 = pneg %p230
      %p479 = pneg %p227
      %p480 = pneg %p251
      %p481 = pneg %p248
      %p482 = pneg %p272
      %p483 = pneg %p269
      %p484 = pneg %p293
      %p485 = pneg %p290
      %p486 = pneg %p321
      %p487 = pneg %p318
      %s488 = smul.u32 8, %s27
      %p489 = scmp.lt.s32.totalorder %s26, 1
      %s490 = scalar_select %p489, %s26, 1
      %p491 = scmp.lt.s32.totalorder %s488, 7
      %s492 = scalar_select %p491, %s488, 7
      %s493 = smul.addr %s490, 8
      %s494 = sadd.s32 %s492, %s493
      %s495 = smul.addr %s494, 8
      %s496 = scalar_lea.vmem %s11, %s495
      %p497 = scmp.lt.s32.totalorder %s26, 1
      %s498 = scalar_select %p497, %s26, 1
      %s499 = smul.addr %s498, 4
      %s500 = scalar_lea.vmem %s0, %s499
      %s501 = smul.u32 8, %s27
      %p502 = scmp.lt.s32.totalorder %s26, 1
      %s503 = scalar_select %p502, %s26, 1
      %p504 = scmp.lt.s32.totalorder %s501, 7
      %s505 = scalar_select %p504, %s501, 7
      %s506 = smul.addr %s503, 8
      %s507 = sadd.s32 %s505, %s506
      %s508 = smul.addr %s507, 4
      %s509 = scalar_lea.vmem %s1, %s508
      %s510 = smul.u32 8, %s27
      %s511 = smul.u32 8, %s27
      %p512 = scmp.lt.s32.totalorder %s26, 1
      %s513 = scalar_select %p512, %s26, 1
      %p514 = scmp.lt.s32.totalorder %s511, 7
      %s515 = scalar_select %p514, %s511, 7
      %s516 = smul.addr %s513, 8
      %s517 = sadd.s32 %s515, %s516
      %s518 = smul.addr %s517, 4
      %s519 = scalar_lea.vmem %s2, %s518
      %s520 = smul.u32 8, %s27
      %s521 = smul.u32 8, %s27
      %p522 = scmp.lt.s32.totalorder %s26, 1
      %s523 = scalar_select %p522, %s26, 1
      %p524 = scmp.lt.s32.totalorder %s521, 7
      %s525 = scalar_select %p524, %s521, 7
      %s526 = smul.addr %s523, 8
      %s527 = sadd.s32 %s525, %s526
      %s528 = smul.addr %s527, 4
      %s529 = scalar_lea.vmem %s3, %s528
      %s530 = smul.u32 8, %s27
      %s531 = smul.u32 8, %s27
      %p532 = scmp.lt.s32.totalorder %s26, 1
      %s533 = scalar_select %p532, %s26, 1
      %p534 = scmp.lt.s32.totalorder %s531, 7
      %s535 = scalar_select %p534, %s531, 7
      %s536 = smul.addr %s533, 8
      %s537 = sadd.s32 %s535, %s536
      %s538 = smul.addr %s537, 8
      %s539 = scalar_lea.vmem %s4, %s538
      %s540 = smul.u32 8, %s27
      %s541 = smul.u32 8, %s27
      %p542 = scmp.lt.s32.totalorder %s26, 1
      %s543 = scalar_select %p542, %s26, 1
      %p544 = scmp.lt.s32.totalorder %s541, 7
      %s545 = scalar_select %p544, %s541, 7
      %s546 = smul.addr %s543, 8
      %s547 = sadd.s32 %s545, %s546
      %s548 = smul.addr %s547, 8
      %s549 = scalar_lea.vmem %s11, %s548
      %s550 = smul.u32 8, %s27
      %v552 = vld [vmem:[%s500] sm:$0x7]
      %v553 = vld [vmem:[%s509] sm:$0xf]
      %v554 = vld [vmem:[%s509 + $0x4] sm:$0xf]
      %v555 = vld [vmem:[%s509 + $0x8] sm:$0xf]
      %v556 = vld [vmem:[%s509 + $0xc] sm:$0xf]
      %v557 = vld [vmem:[%s509 + $0x10] sm:$0xf]
      %v558 = vld [vmem:[%s509 + $0x14] sm:$0xf]
      %v559 = vld [vmem:[%s509 + $0x18] sm:$0xf]
      %v560 = vld [vmem:[%s509 + $0x1c] sm:$0xf]
      %v561 = vunpack.c.l.bf16 %v553
      %v562 = vunpack.c.l.bf16 %v554
      %v563 = vunpack.c.l.bf16 %v555
      %v564 = vunpack.c.l.bf16 %v556
      %v565 = vunpack.c.l.bf16 %v557
      %v566 = vunpack.c.l.bf16 %v558
      %v567 = vunpack.c.l.bf16 %v559
      %v568 = vunpack.c.l.bf16 %v560
      %v569 = vlaneseq
      %v570 = vshrl.u32 %v569, 7
      %v571 = vsub.s32 0, %v570
      %v572 = vrot.slane %v552, %v571
      %v573 = vmul.f32 %v572, %v561
      %v574 = vmul.f32 %v572, %v562
      %v575 = vmul.f32 %v572, %v563
      %v576 = vmul.f32 %v572, %v564
      %v577 = vmul.f32 %v572, %v565
      %v578 = vmul.f32 %v572, %v566
      %v579 = vmul.f32 %v572, %v567
      %v580 = vmul.f32 %v572, %v568
      %v581 = vld [vmem:[%s519] sm:$0xf]
      %v582 = vld [vmem:[%s519 + $0x4] sm:$0xf]
      %v583 = vld [vmem:[%s519 + $0x8] sm:$0xf]
      %v584 = vld [vmem:[%s519 + $0xc] sm:$0xf]
      %v585 = vld [vmem:[%s519 + $0x10] sm:$0xf]
      %v586 = vld [vmem:[%s519 + $0x14] sm:$0xf]
      %v587 = vld [vmem:[%s519 + $0x18] sm:$0xf]
      %v588 = vld [vmem:[%s519 + $0x1c] sm:$0xf]
      %v589 = vunpack.c.l.bf16 %v581
      %v590 = vunpack.c.l.bf16 %v582
      %v591 = vunpack.c.l.bf16 %v583
      %v592 = vunpack.c.l.bf16 %v584
      %v593 = vunpack.c.l.bf16 %v585
      %v594 = vunpack.c.l.bf16 %v586
      %v595 = vunpack.c.l.bf16 %v587
      %v596 = vunpack.c.l.bf16 %v588
      %v597 = vlaneseq
      %v598 = vshrl.u32 %v597, 7
      %v599 = vsub.s32 1, %v598
      %v600 = vrot.slane %v552, %v599
      %v601 = vmul.f32 %v600, %v589
      %v602 = vmul.f32 %v600, %v590
      %v603 = vmul.f32 %v600, %v591
      %v604 = vmul.f32 %v600, %v592
      %v605 = vmul.f32 %v600, %v593
      %v606 = vmul.f32 %v600, %v594
      %v607 = vmul.f32 %v600, %v595
      %v608 = vmul.f32 %v600, %v596
      %v609 = vadd.f32 %v573, %v601
      %v610 = vadd.f32 %v574, %v602
      %v611 = vadd.f32 %v575, %v603
      %v612 = vadd.f32 %v576, %v604
      %v613 = vadd.f32 %v577, %v605
      %v614 = vadd.f32 %v578, %v606
      %v615 = vadd.f32 %v579, %v607
      %v616 = vadd.f32 %v580, %v608
      %v617 = vld [vmem:[%s529] sm:$0xf]
      %v618 = vld [vmem:[%s529 + $0x4] sm:$0xf]
      %v619 = vld [vmem:[%s529 + $0x8] sm:$0xf]
      %v620 = vld [vmem:[%s529 + $0xc] sm:$0xf]
      %v621 = vld [vmem:[%s529 + $0x10] sm:$0xf]
      %v622 = vld [vmem:[%s529 + $0x14] sm:$0xf]
      %v623 = vld [vmem:[%s529 + $0x18] sm:$0xf]
      %v624 = vld [vmem:[%s529 + $0x1c] sm:$0xf]
      %v625 = vunpack.c.l.bf16 %v617
      %v626 = vunpack.c.l.bf16 %v618
      %v627 = vunpack.c.l.bf16 %v619
      %v628 = vunpack.c.l.bf16 %v620
      %v629 = vunpack.c.l.bf16 %v621
      %v630 = vunpack.c.l.bf16 %v622
      %v631 = vunpack.c.l.bf16 %v623
      %v632 = vunpack.c.l.bf16 %v624
      %v633 = vlaneseq
      %v634 = vshrl.u32 %v633, 7
      %v635 = vsub.s32 2, %v634
      %v636 = vrot.slane %v552, %v635
      %v637 = vmul.f32 %v636, %v625
      %v638 = vmul.f32 %v636, %v626
      %v639 = vmul.f32 %v636, %v627
      %v640 = vmul.f32 %v636, %v628
      %v641 = vmul.f32 %v636, %v629
      %v642 = vmul.f32 %v636, %v630
      %v643 = vmul.f32 %v636, %v631
      %v644 = vmul.f32 %v636, %v632
      %v645 = vadd.f32 %v609, %v637
      %v646 = vadd.f32 %v610, %v638
      %v647 = vadd.f32 %v611, %v639
      %v648 = vadd.f32 %v612, %v640
      %v649 = vadd.f32 %v613, %v641
      %v650 = vadd.f32 %v614, %v642
      %v651 = vadd.f32 %v615, %v643
      %v652 = vadd.f32 %v616, %v644
      %v653 = vld [vmem:[%s539] sm:$0xff]
      %v654 = vld [vmem:[%s539 + $0x8] sm:$0xff]
      %v655 = vld [vmem:[%s539 + $0x10] sm:$0xff]
      %v656 = vld [vmem:[%s539 + $0x18] sm:$0xff]
      %v657 = vld [vmem:[%s539 + $0x20] sm:$0xff]
      %v658 = vld [vmem:[%s539 + $0x28] sm:$0xff]
      %v659 = vld [vmem:[%s539 + $0x30] sm:$0xff]
      %v660 = vld [vmem:[%s539 + $0x38] sm:$0xff]
      %v661 = vadd.f32 %v645, %v653
      %v662 = vadd.f32 %v646, %v654
      %v663 = vadd.f32 %v647, %v655
      %v664 = vadd.f32 %v648, %v656
      %v665 = vadd.f32 %v649, %v657
      %v666 = vadd.f32 %v650, %v658
      %v667 = vadd.f32 %v651, %v659
      %v668 = vadd.f32 %v652, %v660
      %669 = vadd.xlane.f32.xlu0 %v661
      %v670 = vpop.xlane.xlu0 %669
      %671 = vadd.xlane.f32.xlu0 %v662
      %v672 = vpop.xlane.xlu0 %671
      %673 = vadd.xlane.f32.xlu0 %v663
      %v674 = vpop.xlane.xlu0 %673
      %675 = vadd.xlane.f32.xlu0 %v664
      %v676 = vpop.xlane.xlu0 %675
      %677 = vadd.xlane.f32.xlu0 %v665
      %v678 = vpop.xlane.xlu0 %677
      %679 = vadd.xlane.f32.xlu0 %v666
      %v680 = vpop.xlane.xlu0 %679
      %681 = vadd.xlane.f32.xlu0 %v667
      %v682 = vpop.xlane.xlu0 %681
      %683 = vadd.xlane.f32.xlu0 %v668
      %v684 = vpop.xlane.xlu0 %683
      %v685 = vrcp.pop 128.0
      %v686 = vmul.f32 %v670, %v685
      %v687 = vmul.f32 %v672, %v685
      %v688 = vmul.f32 %v674, %v685
      %v689 = vmul.f32 %v676, %v685
      %v690 = vmul.f32 %v678, %v685
      %v691 = vmul.f32 %v680, %v685
      %v692 = vmul.f32 %v682, %v685
      %v693 = vmul.f32 %v684, %v685
      %v694 = vsub.f32 %v661, %v686
      %v695 = vsub.f32 %v662, %v687
      %v696 = vsub.f32 %v663, %v688
      %v697 = vsub.f32 %v664, %v689
      %v698 = vsub.f32 %v665, %v690
      %v699 = vsub.f32 %v666, %v691
      %v700 = vsub.f32 %v667, %v692
      %v701 = vsub.f32 %v668, %v693
      %v702 = vmul.f32 %v694, %v694
      %v703 = vmul.f32 %v695, %v695
      %v704 = vmul.f32 %v696, %v696
      %v705 = vmul.f32 %v697, %v697
      %v706 = vmul.f32 %v698, %v698
      %v707 = vmul.f32 %v699, %v699
      %v708 = vmul.f32 %v700, %v700
      %v709 = vmul.f32 %v701, %v701
      %710 = vadd.xlane.f32.xlu0 %v702
      %v711 = vpop.xlane.xlu0 %710
      %712 = vadd.xlane.f32.xlu0 %v703
      %v713 = vpop.xlane.xlu0 %712
      %714 = vadd.xlane.f32.xlu0 %v704
      %v715 = vpop.xlane.xlu0 %714
      %716 = vadd.xlane.f32.xlu0 %v705
      %v717 = vpop.xlane.xlu0 %716
      %718 = vadd.xlane.f32.xlu0 %v706
      %v719 = vpop.xlane.xlu0 %718
      %720 = vadd.xlane.f32.xlu0 %v707
      %v721 = vpop.xlane.xlu0 %720
      %722 = vadd.xlane.f32.xlu0 %v708
      %v723 = vpop.xlane.xlu0 %722
      %724 = vadd.xlane.f32.xlu0 %v709
      %v725 = vpop.xlane.xlu0 %724
      %v726 = vmul.f32 %v711, %v685
      %v727 = vmul.f32 %v713, %v685
      %v728 = vmul.f32 %v715, %v685
      %v729 = vmul.f32 %v717, %v685
      %v730 = vmul.f32 %v719, %v685
      %v731 = vmul.f32 %v721, %v685
      %v732 = vmul.f32 %v723, %v685
      %v733 = vmul.f32 %v725, %v685
      %v734 = vadd.f32 %v726, 1e-05
      %v735 = vadd.f32 %v727, 1e-05
      %v736 = vadd.f32 %v728, 1e-05
      %v737 = vadd.f32 %v729, 1e-05
      %v738 = vadd.f32 %v730, 1e-05
      %v739 = vadd.f32 %v731, 1e-05
      %v740 = vadd.f32 %v732, 1e-05
      %v741 = vadd.f32 %v733, 1e-05
      %v742 = vrsqrt.pop %v734
      %v743 = vrsqrt.pop %v735
      %v744 = vrsqrt.pop %v736
      %v745 = vrsqrt.pop %v737
      %v746 = vrsqrt.pop %v738
      %v747 = vrsqrt.pop %v739
      %v748 = vrsqrt.pop %v740
      %v749 = vrsqrt.pop %v741
      %v750 = vmul.f32 %v694, %v742
      %v751 = vmul.f32 %v695, %v743
      %v752 = vmul.f32 %v696, %v744
      %v753 = vmul.f32 %v697, %v745
      %v754 = vmul.f32 %v698, %v746
      %v755 = vmul.f32 %v699, %v747
      %v756 = vmul.f32 %v700, %v748
      %v757 = vmul.f32 %v701, %v749
      %v758 = vld [vmem:[%s5] sm:$0x1]
      %v760 = vlaneseq
      %v761 = vshrl.u32 %v760, 7
      %v762 = vsub.s32 0, %v761
      %v763 = vrot.slane %v758, %v762
      %v765 = vmul.f32 %v750, %v763
      %v766 = vmul.f32 %v751, %v763
      %v767 = vmul.f32 %v752, %v763
      %v768 = vmul.f32 %v753, %v763
      %v769 = vmul.f32 %v754, %v763
      %v770 = vmul.f32 %v755, %v763
      %v771 = vmul.f32 %v756, %v763
      %v772 = vmul.f32 %v757, %v763
      %v773 = vld [vmem:[%s6] sm:$0x1]
      %v775 = vlaneseq
      %v776 = vshrl.u32 %v775, 7
      %v777 = vsub.s32 0, %v776
      %v778 = vrot.slane %v773, %v777
      %v780 = vadd.f32 %v765, %v778
      %v781 = vadd.f32 %v766, %v778
      %v782 = vadd.f32 %v767, %v778
      %v783 = vadd.f32 %v768, %v778
      %v784 = vadd.f32 %v769, %v778
      %v785 = vadd.f32 %v770, %v778
      %v786 = vadd.f32 %v771, %v778
      %v787 = vadd.f32 %v772, %v778
      %v788 = vpack.c.bf16 %v781, %v780
      %v789 = vpack.c.bf16 %v783, %v782
      %v790 = vpack.c.bf16 %v785, %v784
      %v791 = vpack.c.bf16 %v787, %v786
      %v792 = vld [vmem:[%s7] sm:$0xff]
      %v793 = vld [vmem:[%s7 + $0x8] sm:$0xff]
      %v794 = vld [vmem:[%s7 + $0x10] sm:$0xff]
      %v795 = vld [vmem:[%s7 + $0x18] sm:$0xff]
      %v796 = vld [vmem:[%s7 + $0x20] sm:$0xff]
      %v797 = vld [vmem:[%s7 + $0x28] sm:$0xff]
      %v798 = vld [vmem:[%s7 + $0x30] sm:$0xff]
      %v799 = vld [vmem:[%s7 + $0x38] sm:$0xff]
      %v800 = vld [vmem:[%s7 + $0x40] sm:$0xff]
      %v801 = vld [vmem:[%s7 + $0x48] sm:$0xff]
      %v802 = vld [vmem:[%s7 + $0x50] sm:$0xff]
      %v803 = vld [vmem:[%s7 + $0x58] sm:$0xff]
      %v804 = vld [vmem:[%s7 + $0x60] sm:$0xff]
      %v805 = vld [vmem:[%s7 + $0x68] sm:$0xff]
      %v806 = vld [vmem:[%s7 + $0x70] sm:$0xff]
      %v807 = vld [vmem:[%s7 + $0x78] sm:$0xff]
      %v808 = vld [vmem:[%s7 + $0x80] sm:$0xff]
      %v809 = vld [vmem:[%s7 + $0x88] sm:$0xff]
      %v810 = vld [vmem:[%s7 + $0x90] sm:$0xff]
      %v811 = vld [vmem:[%s7 + $0x98] sm:$0xff]
      %v812 = vld [vmem:[%s7 + $0xa0] sm:$0xff]
      %v813 = vld [vmem:[%s7 + $0xa8] sm:$0xff]
      %v814 = vld [vmem:[%s7 + $0xb0] sm:$0xff]
      %v815 = vld [vmem:[%s7 + $0xb8] sm:$0xff]
      %v816 = vld [vmem:[%s7 + $0xc0] sm:$0xff]
      %v817 = vld [vmem:[%s7 + $0xc8] sm:$0xff]
      %v818 = vld [vmem:[%s7 + $0xd0] sm:$0xff]
      %v819 = vld [vmem:[%s7 + $0xd8] sm:$0xff]
      %v820 = vld [vmem:[%s7 + $0xe0] sm:$0xff]
      %v821 = vld [vmem:[%s7 + $0xe8] sm:$0xff]
      %v822 = vld [vmem:[%s7 + $0xf0] sm:$0xff]
      %v823 = vld [vmem:[%s7 + $0xf8] sm:$0xff]
      %v824 = vld [vmem:[%s8] sm:$0xf]
      %v826 = vlaneseq
      %v827 = vshrl.u32 %v826, 7
      %v828 = vsub.s32 0, %v827
      %v829 = vrot.slane %v824, %v828
      %v830 = vlaneseq
      %v831 = vshrl.u32 %v830, 7
      %v832 = vsub.s32 1, %v831
      %v833 = vrot.slane %v824, %v832
      %v834 = vlaneseq
      %v835 = vshrl.u32 %v834, 7
      %v836 = vsub.s32 2, %v835
      %v837 = vrot.slane %v824, %v836
      %v838 = vlaneseq
      %v839 = vshrl.u32 %v838, 7
      %v840 = vsub.s32 3, %v839
      %v841 = vrot.slane %v824, %v840
      %v878 = vunpack.c.l.b16 %v792
      %v879 = vunpack.c.h.b16 %v792
      %v880 = vunpack.c.l.b16 %v793
      %v881 = vunpack.c.h.b16 %v793
      %v882 = vunpack.c.l.b16 %v794
      %v883 = vunpack.c.h.b16 %v794
      %v884 = vunpack.c.l.b16 %v795
      %v885 = vunpack.c.h.b16 %v795
      %v886 = vunpack.c.l.b16 %v796
      %v887 = vunpack.c.h.b16 %v796
      %v888 = vunpack.c.l.b16 %v797
      %v889 = vunpack.c.h.b16 %v797
      %v890 = vunpack.c.l.b16 %v798
      %v891 = vunpack.c.h.b16 %v798
      %v892 = vunpack.c.l.b16 %v799
      %v893 = vunpack.c.h.b16 %v799
      %v894 = vunpack.c.l.b16 %v800
      %v895 = vunpack.c.h.b16 %v800
      %v896 = vunpack.c.l.b16 %v801
      %v897 = vunpack.c.h.b16 %v801
      %v898 = vunpack.c.l.b16 %v802
      %v899 = vunpack.c.h.b16 %v802
      %v900 = vunpack.c.l.b16 %v803
      %v901 = vunpack.c.h.b16 %v803
      %v902 = vunpack.c.l.b16 %v804
      %v903 = vunpack.c.h.b16 %v804
      %v904 = vunpack.c.l.b16 %v805
      %v905 = vunpack.c.h.b16 %v805
      %v906 = vunpack.c.l.b16 %v806
      %v907 = vunpack.c.h.b16 %v806
      %v908 = vunpack.c.l.b16 %v807
      %v909 = vunpack.c.h.b16 %v807
      %v910 = vunpack.c.l.b16 %v808
      %v911 = vunpack.c.h.b16 %v808
      %v912 = vunpack.c.l.b16 %v809
      %v913 = vunpack.c.h.b16 %v809
      %v914 = vunpack.c.l.b16 %v810
      %v915 = vunpack.c.h.b16 %v810
      %v916 = vunpack.c.l.b16 %v811
      %v917 = vunpack.c.h.b16 %v811
      %v918 = vunpack.c.l.b16 %v812
      %v919 = vunpack.c.h.b16 %v812
      %v920 = vunpack.c.l.b16 %v813
      %v921 = vunpack.c.h.b16 %v813
      %v922 = vunpack.c.l.b16 %v814
      %v923 = vunpack.c.h.b16 %v814
      %v924 = vunpack.c.l.b16 %v815
      %v925 = vunpack.c.h.b16 %v815
      %v926 = vunpack.c.l.b16 %v816
      %v927 = vunpack.c.h.b16 %v816
      %v928 = vunpack.c.l.b16 %v817
      %v929 = vunpack.c.h.b16 %v817
      %v930 = vunpack.c.l.b16 %v818
      %v931 = vunpack.c.h.b16 %v818
      %v932 = vunpack.c.l.b16 %v819
      %v933 = vunpack.c.h.b16 %v819
      %v934 = vunpack.c.l.b16 %v820
      %v935 = vunpack.c.h.b16 %v820
      %v936 = vunpack.c.l.b16 %v821
      %v937 = vunpack.c.h.b16 %v821
      %v938 = vunpack.c.l.b16 %v822
      %v939 = vunpack.c.h.b16 %v822
      %v940 = vunpack.c.l.b16 %v823
      %v941 = vunpack.c.h.b16 %v823
      %v942 = vpack.c.b16 %v882, %v878
      %v943 = vpack.c.b16 %v883, %v879
      %v944 = vpack.c.b16 %v884, %v880
      %v945 = vpack.c.b16 %v885, %v881
      %v946 = vpack.c.b16 %v890, %v886
      %v947 = vpack.c.b16 %v891, %v887
      %v948 = vpack.c.b16 %v892, %v888
      %v949 = vpack.c.b16 %v893, %v889
      %v950 = vpack.c.b16 %v898, %v894
      %v951 = vpack.c.b16 %v899, %v895
      %v952 = vpack.c.b16 %v900, %v896
      %v953 = vpack.c.b16 %v901, %v897
      %v954 = vpack.c.b16 %v906, %v902
      %v955 = vpack.c.b16 %v907, %v903
      %v956 = vpack.c.b16 %v908, %v904
      %v957 = vpack.c.b16 %v909, %v905
      %v958 = vpack.c.b16 %v914, %v910
      %v959 = vpack.c.b16 %v915, %v911
      %v960 = vpack.c.b16 %v916, %v912
      %v961 = vpack.c.b16 %v917, %v913
      %v962 = vpack.c.b16 %v922, %v918
      %v963 = vpack.c.b16 %v923, %v919
      %v964 = vpack.c.b16 %v924, %v920
      %v965 = vpack.c.b16 %v925, %v921
      %v966 = vpack.c.b16 %v930, %v926
      %v967 = vpack.c.b16 %v931, %v927
      %v968 = vpack.c.b16 %v932, %v928
      %v969 = vpack.c.b16 %v933, %v929
      %v970 = vpack.c.b16 %v938, %v934
      %v971 = vpack.c.b16 %v939, %v935
      %v972 = vpack.c.b16 %v940, %v936
      %v973 = vpack.c.b16 %v941, %v937
      %1006 = vmatprep.subr.bf16.mxu0 %v943
      %1007 = vmatpush1.bf16.msra.mxu0 %v942
      %1008 = vmatprep.subr.bf16.mxu0 %v947
      %1009 = vmatpush1.bf16.msra.mxu0 %v946
      %1010 = vmatprep.subr.bf16.mxu0 %v951
      %1011 = vmatpush1.bf16.msra.mxu0 %v950
      %1012 = vmatprep.subr.bf16.mxu0 %v955
      %1013 = vmatpush1.bf16.msra.mxu0 %v954
      %1014 = vmatprep.subr.bf16.mxu0 %v959
      %1015 = vmatpush1.bf16.msra.mxu0 %v958
      %1016 = vmatprep.subr.bf16.mxu0 %v963
      %1017 = vmatpush1.bf16.msra.mxu0 %v962
      %1018 = vmatprep.subr.bf16.mxu0 %v967
      %1019 = vmatpush1.bf16.msra.mxu0 %v966
      %1020 = vmatprep.subr.bf16.mxu0 %v971
      %1021 = vmatpush1.bf16.msra.mxu0 %v970
      %1022 = vmatprep.subr.bf16.mxu0 0
      %1023 = vmatpush1.bf16.msra.mxu0 0
      %1024 = vmatprep.subr.bf16.mxu0 0
      %1025 = vmatpush1.bf16.msra.mxu0 0
      %1026 = vmatprep.subr.bf16.mxu0 0
      %1027 = vmatpush1.bf16.msra.mxu0 0
      %1028 = vmatprep.subr.bf16.mxu0 0
      %1029 = vmatpush1.bf16.msra.mxu0 0
      %1030 = vmatprep.subr.bf16.mxu0 0
      %1031 = vmatpush1.bf16.msra.mxu0 0
      %1032 = vmatprep.subr.bf16.mxu0 0
      %1033 = vmatpush1.bf16.msra.mxu0 0
      %1034 = vmatprep.subr.bf16.mxu0 0
      %1035 = vmatpush1.bf16.msra.mxu0 0
      %1036 = vmatprep.subr.bf16.mxu0 0
      %1037 = vmatpush1.bf16.msra.mxu0 0
      %1038 = vmatprep.mubr.bf16.mxu0 0
      %1039 = vmatmul.mubr.bf16.gmra.mrb[0].mxu0 %v788
      %v1040 = vpop.f32.mrb[0].mxu0
      %v1041 = vadd.f32 %v829, %v1040
      %v1042 = vpop.f32.mrb[0].mxu0
      %v1043 = vadd.f32 %v833, %v1042
      %v1044 = vpop.f32.mrb[0].mxu0
      %v1045 = vadd.f32 %v829, %v1044
      %v1046 = vpop.f32.mrb[0].mxu0
      %v1047 = vadd.f32 %v833, %v1046
      %1048 = vmatprep.mubr.bf16.mxu0 0
      %1049 = vmatmul.mubr.bf16.gmra.mrb[0].mxu0 %v789
      %v1050 = vpop.f32.mrb[0].mxu0
      %v1051 = vadd.f32 %v829, %v1050
      %v1052 = vpop.f32.mrb[0].mxu0
      %v1053 = vadd.f32 %v833, %v1052
      %v1054 = vpop.f32.mrb[0].mxu0
      %v1055 = vadd.f32 %v829, %v1054
      %v1056 = vpop.f32.mrb[0].mxu0
      %v1057 = vadd.f32 %v833, %v1056
      %1058 = vmatprep.mubr.bf16.mxu0 0
      %1059 = vmatmul.mubr.bf16.gmra.mrb[0].mxu0 %v790
      %v1060 = vpop.f32.mrb[0].mxu0
      %v1061 = vadd.f32 %v829, %v1060
      %v1062 = vpop.f32.mrb[0].mxu0
      %v1063 = vadd.f32 %v833, %v1062
      %v1064 = vpop.f32.mrb[0].mxu0
      %v1065 = vadd.f32 %v829, %v1064
      %v1066 = vpop.f32.mrb[0].mxu0
      %v1067 = vadd.f32 %v833, %v1066
      %1068 = vmatprep.mubr.bf16.mxu0 0
      %1069 = vmatmul.mubr.bf16.gmra.mrb[0].mxu0 %v791
      %v1070 = vpop.f32.mrb[0].mxu0
      %v1071 = vadd.f32 %v829, %v1070
      %v1072 = vpop.f32.mrb[0].mxu0
      %v1073 = vadd.f32 %v833, %v1072
      %v1074 = vpop.f32.mrb[0].mxu0
      %v1075 = vadd.f32 %v829, %v1074
      %v1076 = vpop.f32.mrb[0].mxu0
      %v1077 = vadd.f32 %v833, %v1076
      %1078 = vdwg.mxu0
      %1079 = vmatprep.subr.bf16.mxu0 %v945
      %1080 = vmatpush1.bf16.msra.mxu0 %v944
      %1081 = vmatprep.subr.bf16.mxu0 %v949
      %1082 = vmatpush1.bf16.msra.mxu0 %v948
      %1083 = vmatprep.subr.bf16.mxu0 %v953
      %1084 = vmatpush1.bf16.msra.mxu0 %v952
      %1085 = vmatprep.subr.bf16.mxu0 %v957
      %1086 = vmatpush1.bf16.msra.mxu0 %v956
      %1087 = vmatprep.subr.bf16.mxu0 %v961
      %1088 = vmatpush1.bf16.msra.mxu0 %v960
      %1089 = vmatprep.subr.bf16.mxu0 %v965
      %1090 = vmatpush1.bf16.msra.mxu0 %v964
      %1091 = vmatprep.subr.bf16.mxu0 %v969
      %1092 = vmatpush1.bf16.msra.mxu0 %v968
      %1093 = vmatprep.subr.bf16.mxu0 %v973
      %1094 = vmatpush1.bf16.msra.mxu0 %v972
      %1095 = vmatprep.subr.bf16.mxu0 0
      %1096 = vmatpush1.bf16.msra.mxu0 0
      %1097 = vmatprep.subr.bf16.mxu0 0
      %1098 = vmatpush1.bf16.msra.mxu0 0
      %1099 = vmatprep.subr.bf16.mxu0 0
      %1100 = vmatpush1.bf16.msra.mxu0 0
      %1101 = vmatprep.subr.bf16.mxu0 0
      %1102 = vmatpush1.bf16.msra.mxu0 0
      %1103 = vmatprep.subr.bf16.mxu0 0
      %1104 = vmatpush1.bf16.msra.mxu0 0
      %1105 = vmatprep.subr.bf16.mxu0 0
      %1106 = vmatpush1.bf16.msra.mxu0 0
      %1107 = vmatprep.subr.bf16.mxu0 0
      %1108 = vmatpush1.bf16.msra.mxu0 0
      %1109 = vmatprep.subr.bf16.mxu0 0
      %1110 = vmatpush1.bf16.msra.mxu0 0
      %1111 = vmatprep.mubr.bf16.mxu0 0
      %1112 = vmatmul.mubr.bf16.gmra.mrb[0].mxu0 %v788
      %v1113 = vpop.f32.mrb[0].mxu0
      %v1114 = vadd.f32 %v837, %v1113
      %v1115 = vpop.f32.mrb[0].mxu0
      %v1116 = vadd.f32 %v841, %v1115
      %v1117 = vpop.f32.mrb[0].mxu0
      %v1118 = vadd.f32 %v837, %v1117
      %v1119 = vpop.f32.mrb[0].mxu0
      %v1120 = vadd.f32 %v841, %v1119
      %1121 = vmatprep.mubr.bf16.mxu0 0
      %1122 = vmatmul.mubr.bf16.gmra.mrb[0].mxu0 %v789
      %v1123 = vpop.f32.mrb[0].mxu0
      %v1124 = vadd.f32 %v837, %v1123
      %v1125 = vpop.f32.mrb[0].mxu0
      %v1126 = vadd.f32 %v841, %v1125
      %v1127 = vpop.f32.mrb[0].mxu0
      %v1128 = vadd.f32 %v837, %v1127
      %v1129 = vpop.f32.mrb[0].mxu0
      %v1130 = vadd.f32 %v841, %v1129
      %1131 = vmatprep.mubr.bf16.mxu0 0
      %1132 = vmatmul.mubr.bf16.gmra.mrb[0].mxu0 %v790
      %v1133 = vpop.f32.mrb[0].mxu0
      %v1134 = vadd.f32 %v837, %v1133
      %v1135 = vpop.f32.mrb[0].mxu0
      %v1136 = vadd.f32 %v841, %v1135
      %v1137 = vpop.f32.mrb[0].mxu0
      %v1138 = vadd.f32 %v837, %v1137
      %v1139 = vpop.f32.mrb[0].mxu0
      %v1140 = vadd.f32 %v841, %v1139
      %1141 = vmatprep.mubr.bf16.mxu0 0
      %1142 = vmatmul.mubr.bf16.gmra.mrb[0].mxu0 %v791
      %v1143 = vpop.f32.mrb[0].mxu0
      %v1144 = vadd.f32 %v837, %v1143
      %v1145 = vpop.f32.mrb[0].mxu0
      %v1146 = vadd.f32 %v841, %v1145
      %v1147 = vpop.f32.mrb[0].mxu0
      %v1148 = vadd.f32 %v837, %v1147
      %v1149 = vpop.f32.mrb[0].mxu0
      %v1150 = vadd.f32 %v841, %v1149
      %1151 = vdwg.mxu0
      %v1152 = vmul.f32 %v1041, 0.5
      %v1153 = vmul.f32 %v1043, 0.5
      %v1154 = vmul.f32 %v1114, 0.5
      %v1155 = vmul.f32 %v1116, 0.5
      %v1156 = vmul.f32 %v1045, 0.5
      %v1157 = vmul.f32 %v1047, 0.5
      %v1158 = vmul.f32 %v1118, 0.5
      %v1159 = vmul.f32 %v1120, 0.5
      %v1160 = vmul.f32 %v1051, 0.5
      %v1161 = vmul.f32 %v1053, 0.5
      %v1162 = vmul.f32 %v1124, 0.5
      %v1163 = vmul.f32 %v1126, 0.5
      %v1164 = vmul.f32 %v1055, 0.5
      %v1165 = vmul.f32 %v1057, 0.5
      %v1166 = vmul.f32 %v1128, 0.5
      %v1167 = vmul.f32 %v1130, 0.5
      %v1168 = vmul.f32 %v1061, 0.5
      %v1169 = vmul.f32 %v1063, 0.5
      %v1170 = vmul.f32 %v1134, 0.5
      %v1171 = vmul.f32 %v1136, 0.5
      %v1172 = vmul.f32 %v1065, 0.5
      %v1173 = vmul.f32 %v1067, 0.5
      %v1174 = vmul.f32 %v1138, 0.5
      %v1175 = vmul.f32 %v1140, 0.5
      %v1176 = vmul.f32 %v1071, 0.5
      %v1177 = vmul.f32 %v1073, 0.5
      %v1178 = vmul.f32 %v1144, 0.5
      %v1179 = vmul.f32 %v1146, 0.5
      %v1180 = vmul.f32 %v1075, 0.5
      %v1181 = vmul.f32 %v1077, 0.5
      %v1182 = vmul.f32 %v1148, 0.5
      %v1183 = vmul.f32 %v1150, 0.5
      %v1184 = vmul.f32 %v1041, 0.70710677
      %v1185 = vmul.f32 %v1043, 0.70710677
      %v1186 = vmul.f32 %v1114, 0.70710677
      %v1187 = vmul.f32 %v1116, 0.70710677
      %v1188 = vmul.f32 %v1045, 0.70710677
      %v1189 = vmul.f32 %v1047, 0.70710677
      %v1190 = vmul.f32 %v1118, 0.70710677
      %v1191 = vmul.f32 %v1120, 0.70710677
      %v1192 = vmul.f32 %v1051, 0.70710677
      %v1193 = vmul.f32 %v1053, 0.70710677
      %v1194 = vmul.f32 %v1124, 0.70710677
      %v1195 = vmul.f32 %v1126, 0.70710677
      %v1196 = vmul.f32 %v1055, 0.70710677
      %v1197 = vmul.f32 %v1057, 0.70710677
      %v1198 = vmul.f32 %v1128, 0.70710677
      %v1199 = vmul.f32 %v1130, 0.70710677
      %v1200 = vmul.f32 %v1061, 0.70710677
      %v1201 = vmul.f32 %v1063, 0.70710677
      %v1202 = vmul.f32 %v1134, 0.70710677
      %v1203 = vmul.f32 %v1136, 0.70710677
      %v1204 = vmul.f32 %v1065, 0.70710677
      %v1205 = vmul.f32 %v1067, 0.70710677
      %v1206 = vmul.f32 %v1138, 0.70710677
      %v1207 = vmul.f32 %v1140, 0.70710677
      %v1208 = vmul.f32 %v1071, 0.70710677
      %v1209 = vmul.f32 %v1073, 0.70710677
      %v1210 = vmul.f32 %v1144, 0.70710677
      %v1211 = vmul.f32 %v1146, 0.70710677
      %v1212 = vmul.f32 %v1075, 0.70710677
      %v1213 = vmul.f32 %v1077, 0.70710677
      %v1214 = vmul.f32 %v1148, 0.70710677
      %v1215 = vmul.f32 %v1150, 0.70710677
      %v1216 = verf.f32.pop %v1184
      %v1217 = verf.f32.pop %v1185
      %v1218 = verf.f32.pop %v1186
      %v1219 = verf.f32.pop %v1187
      %v1220 = verf.f32.pop %v1188
      %v1221 = verf.f32.pop %v1189
      %v1222 = verf.f32.pop %v1190
      %v1223 = verf.f32.pop %v1191
      %v1224 = verf.f32.pop %v1192
      %v1225 = verf.f32.pop %v1193
      %v1226 = verf.f32.pop %v1194
      %v1227 = verf.f32.pop %v1195
      %v1228 = verf.f32.pop %v1196
      %v1229 = verf.f32.pop %v1197
      %v1230 = verf.f32.pop %v1198
      %v1231 = verf.f32.pop %v1199
      %v1232 = verf.f32.pop %v1200
      %v1233 = verf.f32.pop %v1201
      %v1234 = verf.f32.pop %v1202
      %v1235 = verf.f32.pop %v1203
      %v1236 = verf.f32.pop %v1204
      %v1237 = verf.f32.pop %v1205
      %v1238 = verf.f32.pop %v1206
      %v1239 = verf.f32.pop %v1207
      %v1240 = verf.f32.pop %v1208
      %v1241 = verf.f32.pop %v1209
      %v1242 = verf.f32.pop %v1210
      %v1243 = verf.f32.pop %v1211
      %v1244 = verf.f32.pop %v1212
      %v1245 = verf.f32.pop %v1213
      %v1246 = verf.f32.pop %v1214
      %v1247 = verf.f32.pop %v1215
      %v1248 = vadd.f32 %v1216, 1.0
      %v1249 = vadd.f32 %v1217, 1.0
      %v1250 = vadd.f32 %v1218, 1.0
      %v1251 = vadd.f32 %v1219, 1.0
      %v1252 = vadd.f32 %v1220, 1.0
      %v1253 = vadd.f32 %v1221, 1.0
      %v1254 = vadd.f32 %v1222, 1.0
      %v1255 = vadd.f32 %v1223, 1.0
      %v1256 = vadd.f32 %v1224, 1.0
      %v1257 = vadd.f32 %v1225, 1.0
      %v1258 = vadd.f32 %v1226, 1.0
      %v1259 = vadd.f32 %v1227, 1.0
      %v1260 = vadd.f32 %v1228, 1.0
      %v1261 = vadd.f32 %v1229, 1.0
      %v1262 = vadd.f32 %v1230, 1.0
      %v1263 = vadd.f32 %v1231, 1.0
      %v1264 = vadd.f32 %v1232, 1.0
      %v1265 = vadd.f32 %v1233, 1.0
      %v1266 = vadd.f32 %v1234, 1.0
      %v1267 = vadd.f32 %v1235, 1.0
      %v1268 = vadd.f32 %v1236, 1.0
      %v1269 = vadd.f32 %v1237, 1.0
      %v1270 = vadd.f32 %v1238, 1.0
      %v1271 = vadd.f32 %v1239, 1.0
      %v1272 = vadd.f32 %v1240, 1.0
      %v1273 = vadd.f32 %v1241, 1.0
      %v1274 = vadd.f32 %v1242, 1.0
      %v1275 = vadd.f32 %v1243, 1.0
      %v1276 = vadd.f32 %v1244, 1.0
      %v1277 = vadd.f32 %v1245, 1.0
      %v1278 = vadd.f32 %v1246, 1.0
      %v1279 = vadd.f32 %v1247, 1.0
      %v1280 = vmul.f32 %v1152, %v1248
      %v1281 = vmul.f32 %v1153, %v1249
      %v1282 = vmul.f32 %v1154, %v1250
      %v1283 = vmul.f32 %v1155, %v1251
      %v1284 = vmul.f32 %v1156, %v1252
      %v1285 = vmul.f32 %v1157, %v1253
      %v1286 = vmul.f32 %v1158, %v1254
      %v1287 = vmul.f32 %v1159, %v1255
      %v1288 = vmul.f32 %v1160, %v1256
      %v1289 = vmul.f32 %v1161, %v1257
      %v1290 = vmul.f32 %v1162, %v1258
      %v1291 = vmul.f32 %v1163, %v1259
      %v1292 = vmul.f32 %v1164, %v1260
      %v1293 = vmul.f32 %v1165, %v1261
      %v1294 = vmul.f32 %v1166, %v1262
      %v1295 = vmul.f32 %v1167, %v1263
      %v1296 = vmul.f32 %v1168, %v1264
      %v1297 = vmul.f32 %v1169, %v1265
      %v1298 = vmul.f32 %v1170, %v1266
      %v1299 = vmul.f32 %v1171, %v1267
      %v1300 = vmul.f32 %v1172, %v1268
      %v1301 = vmul.f32 %v1173, %v1269
      %v1302 = vmul.f32 %v1174, %v1270
      %v1303 = vmul.f32 %v1175, %v1271
      %v1304 = vmul.f32 %v1176, %v1272
      %v1305 = vmul.f32 %v1177, %v1273
      %v1306 = vmul.f32 %v1178, %v1274
      %v1307 = vmul.f32 %v1179, %v1275
      %v1308 = vmul.f32 %v1180, %v1276
      %v1309 = vmul.f32 %v1181, %v1277
      %v1310 = vmul.f32 %v1182, %v1278
      %v1311 = vmul.f32 %v1183, %v1279
      %v1312 = vpack.c.bf16 %v1284, %v1280
      %v1313 = vpack.c.bf16 %v1285, %v1281
      %v1314 = vpack.c.bf16 %v1286, %v1282
      %v1315 = vpack.c.bf16 %v1287, %v1283
      %v1316 = vpack.c.bf16 %v1292, %v1288
      %v1317 = vpack.c.bf16 %v1293, %v1289
      %v1318 = vpack.c.bf16 %v1294, %v1290
      %v1319 = vpack.c.bf16 %v1295, %v1291
      %v1320 = vpack.c.bf16 %v1300, %v1296
      %v1321 = vpack.c.bf16 %v1301, %v1297
      %v1322 = vpack.c.bf16 %v1302, %v1298
      %v1323 = vpack.c.bf16 %v1303, %v1299
      %v1324 = vpack.c.bf16 %v1308, %v1304
      %v1325 = vpack.c.bf16 %v1309, %v1305
      %v1326 = vpack.c.bf16 %v1310, %v1306
      %v1327 = vpack.c.bf16 %v1311, %v1307
      %v1328 = vld [vmem:[%s9] sm:$0xf]
      %v1329 = vld [vmem:[%s9 + $0x4] sm:$0xf]
      %v1330 = vld [vmem:[%s9 + $0x8] sm:$0xf]
      %v1331 = vld [vmem:[%s9 + $0xc] sm:$0xf]
      %v1332 = vld [vmem:[%s9 + $0x10] sm:$0xf]
      %v1333 = vld [vmem:[%s9 + $0x14] sm:$0xf]
      %v1334 = vld [vmem:[%s9 + $0x18] sm:$0xf]
      %v1335 = vld [vmem:[%s9 + $0x1c] sm:$0xf]
      %v1336 = vld [vmem:[%s9 + $0x20] sm:$0xf]
      %v1337 = vld [vmem:[%s9 + $0x24] sm:$0xf]
      %v1338 = vld [vmem:[%s9 + $0x28] sm:$0xf]
      %v1339 = vld [vmem:[%s9 + $0x2c] sm:$0xf]
      %v1340 = vld [vmem:[%s9 + $0x30] sm:$0xf]
      %v1341 = vld [vmem:[%s9 + $0x34] sm:$0xf]
      %v1342 = vld [vmem:[%s9 + $0x38] sm:$0xf]
      %v1343 = vld [vmem:[%s9 + $0x3c] sm:$0xf]
      %v1344 = vld [vmem:[%s9 + $0x40] sm:$0xf]
      %v1345 = vld [vmem:[%s9 + $0x44] sm:$0xf]
      %v1346 = vld [vmem:[%s9 + $0x48] sm:$0xf]
      %v1347 = vld [vmem:[%s9 + $0x4c] sm:$0xf]
      %v1348 = vld [vmem:[%s9 + $0x50] sm:$0xf]
      %v1349 = vld [vmem:[%s9 + $0x54] sm:$0xf]
      %v1350 = vld [vmem:[%s9 + $0x58] sm:$0xf]
      %v1351 = vld [vmem:[%s9 + $0x5c] sm:$0xf]
      %v1352 = vld [vmem:[%s9 + $0x60] sm:$0xf]
      %v1353 = vld [vmem:[%s9 + $0x64] sm:$0xf]
      %v1354 = vld [vmem:[%s9 + $0x68] sm:$0xf]
      %v1355 = vld [vmem:[%s9 + $0x6c] sm:$0xf]
      %v1356 = vld [vmem:[%s9 + $0x70] sm:$0xf]
      %v1357 = vld [vmem:[%s9 + $0x74] sm:$0xf]
      %v1358 = vld [vmem:[%s9 + $0x78] sm:$0xf]
      %v1359 = vld [vmem:[%s9 + $0x7c] sm:$0xf]
      %v1360 = vld [vmem:[%s9 + $0x80] sm:$0xf]
      %v1361 = vld [vmem:[%s9 + $0x84] sm:$0xf]
      %v1362 = vld [vmem:[%s9 + $0x88] sm:$0xf]
      %v1363 = vld [vmem:[%s9 + $0x8c] sm:$0xf]
      %v1364 = vld [vmem:[%s9 + $0x90] sm:$0xf]
      %v1365 = vld [vmem:[%s9 + $0x94] sm:$0xf]
      %v1366 = vld [vmem:[%s9 + $0x98] sm:$0xf]
      %v1367 = vld [vmem:[%s9 + $0x9c] sm:$0xf]
      %v1368 = vld [vmem:[%s9 + $0xa0] sm:$0xf]
      %v1369 = vld [vmem:[%s9 + $0xa4] sm:$0xf]
      %v1370 = vld [vmem:[%s9 + $0xa8] sm:$0xf]
      %v1371 = vld [vmem:[%s9 + $0xac] sm:$0xf]
      %v1372 = vld [vmem:[%s9 + $0xb0] sm:$0xf]
      %v1373 = vld [vmem:[%s9 + $0xb4] sm:$0xf]
      %v1374 = vld [vmem:[%s9 + $0xb8] sm:$0xf]
      %v1375 = vld [vmem:[%s9 + $0xbc] sm:$0xf]
      %v1376 = vld [vmem:[%s9 + $0xc0] sm:$0xf]
      %v1377 = vld [vmem:[%s9 + $0xc4] sm:$0xf]
      %v1378 = vld [vmem:[%s9 + $0xc8] sm:$0xf]
      %v1379 = vld [vmem:[%s9 + $0xcc] sm:$0xf]
      %v1380 = vld [vmem:[%s9 + $0xd0] sm:$0xf]
      %v1381 = vld [vmem:[%s9 + $0xd4] sm:$0xf]
      %v1382 = vld [vmem:[%s9 + $0xd8] sm:$0xf]
      %v1383 = vld [vmem:[%s9 + $0xdc] sm:$0xf]
      %v1384 = vld [vmem:[%s9 + $0xe0] sm:$0xf]
      %v1385 = vld [vmem:[%s9 + $0xe4] sm:$0xf]
      %v1386 = vld [vmem:[%s9 + $0xe8] sm:$0xf]
      %v1387 = vld [vmem:[%s9 + $0xec] sm:$0xf]
      %v1388 = vld [vmem:[%s9 + $0xf0] sm:$0xf]
      %v1389 = vld [vmem:[%s9 + $0xf4] sm:$0xf]
      %v1390 = vld [vmem:[%s9 + $0xf8] sm:$0xf]
      %v1391 = vld [vmem:[%s9 + $0xfc] sm:$0xf]
      %v1392 = vld [vmem:[%s10] sm:$0x1]
      %v1394 = vlaneseq
      %v1395 = vshrl.u32 %v1394, 7
      %v1396 = vsub.s32 0, %v1395
      %v1397 = vrot.slane %v1392, %v1396
      %v1463 = vunpack.c.l.b16 %v1328
      %v1464 = vunpack.c.l.b16 %v1329
      %v1465 = vunpack.c.l.b16 %v1330
      %v1466 = vunpack.c.l.b16 %v1331
      %v1467 = vunpack.c.l.b16 %v1332
      %v1468 = vunpack.c.l.b16 %v1333
      %v1469 = vunpack.c.l.b16 %v1334
      %v1470 = vunpack.c.l.b16 %v1335
      %v1471 = vunpack.c.l.b16 %v1336
      %v1472 = vunpack.c.l.b16 %v1337
      %v1473 = vunpack.c.l.b16 %v1338
      %v1474 = vunpack.c.l.b16 %v1339
      %v1475 = vunpack.c.l.b16 %v1340
      %v1476 = vunpack.c.l.b16 %v1341
      %v1477 = vunpack.c.l.b16 %v1342
      %v1478 = vunpack.c.l.b16 %v1343
      %v1479 = vunpack.c.l.b16 %v1344
      %v1480 = vunpack.c.l.b16 %v1345
      %v1481 = vunpack.c.l.b16 %v1346
      %v1482 = vunpack.c.l.b16 %v1347
      %v1483 = vunpack.c.l.b16 %v1348
      %v1484 = vunpack.c.l.b16 %v1349
      %v1485 = vunpack.c.l.b16 %v1350
      %v1486 = vunpack.c.l.b16 %v1351
      %v1487 = vunpack.c.l.b16 %v1352
      %v1488 = vunpack.c.l.b16 %v1353
      %v1489 = vunpack.c.l.b16 %v1354
      %v1490 = vunpack.c.l.b16 %v1355
      %v1491 = vunpack.c.l.b16 %v1356
      %v1492 = vunpack.c.l.b16 %v1357
      %v1493 = vunpack.c.l.b16 %v1358
      %v1494 = vunpack.c.l.b16 %v1359
      %v1495 = vunpack.c.l.b16 %v1360
      %v1496 = vunpack.c.l.b16 %v1361
      %v1497 = vunpack.c.l.b16 %v1362
      %v1498 = vunpack.c.l.b16 %v1363
      %v1499 = vunpack.c.l.b16 %v1364
      %v1500 = vunpack.c.l.b16 %v1365
      %v1501 = vunpack.c.l.b16 %v1366
      %v1502 = vunpack.c.l.b16 %v1367
      %v1503 = vunpack.c.l.b16 %v1368
      %v1504 = vunpack.c.l.b16 %v1369
      %v1505 = vunpack.c.l.b16 %v1370
      %v1506 = vunpack.c.l.b16 %v1371
      %v1507 = vunpack.c.l.b16 %v1372
      %v1508 = vunpack.c.l.b16 %v1373
      %v1509 = vunpack.c.l.b16 %v1374
      %v1510 = vunpack.c.l.b16 %v1375
      %v1511 = vunpack.c.l.b16 %v1376
      %v1512 = vunpack.c.l.b16 %v1377
      %v1513 = vunpack.c.l.b16 %v1378
      %v1514 = vunpack.c.l.b16 %v1379
      %v1515 = vunpack.c.l.b16 %v1380
      %v1516 = vunpack.c.l.b16 %v1381
      %v1517 = vunpack.c.l.b16 %v1382
      %v1518 = vunpack.c.l.b16 %v1383
      %v1519 = vunpack.c.l.b16 %v1384
      %v1520 = vunpack.c.l.b16 %v1385
      %v1521 = vunpack.c.l.b16 %v1386
      %v1522 = vunpack.c.l.b16 %v1387
      %v1523 = vunpack.c.l.b16 %v1388
      %v1524 = vunpack.c.l.b16 %v1389
      %v1525 = vunpack.c.l.b16 %v1390
      %v1526 = vunpack.c.l.b16 %v1391
      %v1527 = vpack.c.b16 %v1464, %v1463
      %v1528 = vpack.c.b16 %v1466, %v1465
      %v1529 = vpack.c.b16 %v1468, %v1467
      %v1530 = vpack.c.b16 %v1470, %v1469
      %v1531 = vpack.c.b16 %v1472, %v1471
      %v1532 = vpack.c.b16 %v1474, %v1473
      %v1533 = vpack.c.b16 %v1476, %v1475
      %v1534 = vpack.c.b16 %v1478, %v1477
      %v1535 = vpack.c.b16 %v1480, %v1479
      %v1536 = vpack.c.b16 %v1482, %v1481
      %v1537 = vpack.c.b16 %v1484, %v1483
      %v1538 = vpack.c.b16 %v1486, %v1485
      %v1539 = vpack.c.b16 %v1488, %v1487
      %v1540 = vpack.c.b16 %v1490, %v1489
      %v1541 = vpack.c.b16 %v1492, %v1491
      %v1542 = vpack.c.b16 %v1494, %v1493
      %v1543 = vpack.c.b16 %v1496, %v1495
      %v1544 = vpack.c.b16 %v1498, %v1497
      %v1545 = vpack.c.b16 %v1500, %v1499
      %v1546 = vpack.c.b16 %v1502, %v1501
      %v1547 = vpack.c.b16 %v1504, %v1503
      %v1548 = vpack.c.b16 %v1506, %v1505
      %v1549 = vpack.c.b16 %v1508, %v1507
      %v1550 = vpack.c.b16 %v1510, %v1509
      %v1551 = vpack.c.b16 %v1512, %v1511
      %v1552 = vpack.c.b16 %v1514, %v1513
      %v1553 = vpack.c.b16 %v1516, %v1515
      %v1554 = vpack.c.b16 %v1518, %v1517
      %v1555 = vpack.c.b16 %v1520, %v1519
      %v1556 = vpack.c.b16 %v1522, %v1521
      %v1557 = vpack.c.b16 %v1524, %v1523
      %v1558 = vpack.c.b16 %v1526, %v1525
      %1591 = vmatprep.subr.bf16.mxu0 0
      %1592 = vmatpush1.bf16.msra.mxu0 %v1527
      %1593 = vmatprep.subr.bf16.mxu0 0
      %1594 = vmatpush1.bf16.msra.mxu0 %v1528
      %1595 = vmatprep.subr.bf16.mxu0 0
      %1596 = vmatpush1.bf16.msra.mxu0 %v1529
      %1597 = vmatprep.subr.bf16.mxu0 0
      %1598 = vmatpush1.bf16.msra.mxu0 %v1530
      %1599 = vmatprep.subr.bf16.mxu0 0
      %1600 = vmatpush1.bf16.msra.mxu0 %v1531
      %1601 = vmatprep.subr.bf16.mxu0 0
      %1602 = vmatpush1.bf16.msra.mxu0 %v1532
      %1603 = vmatprep.subr.bf16.mxu0 0
      %1604 = vmatpush1.bf16.msra.mxu0 %v1533
      %1605 = vmatprep.subr.bf16.mxu0 0
      %1606 = vmatpush1.bf16.msra.mxu0 %v1534
      %1607 = vmatprep.subr.bf16.mxu0 0
      %1608 = vmatpush1.bf16.msra.mxu0 %v1535
      %1609 = vmatprep.subr.bf16.mxu0 0
      %1610 = vmatpush1.bf16.msra.mxu0 %v1536
      %1611 = vmatprep.subr.bf16.mxu0 0
      %1612 = vmatpush1.bf16.msra.mxu0 %v1537
      %1613 = vmatprep.subr.bf16.mxu0 0
      %1614 = vmatpush1.bf16.msra.mxu0 %v1538
      %1615 = vmatprep.subr.bf16.mxu0 0
      %1616 = vmatpush1.bf16.msra.mxu0 %v1539
      %1617 = vmatprep.subr.bf16.mxu0 0
      %1618 = vmatpush1.bf16.msra.mxu0 %v1540
      %1619 = vmatprep.subr.bf16.mxu0 0
      %1620 = vmatpush1.bf16.msra.mxu0 %v1541
      %1621 = vmatprep.subr.bf16.mxu0 0
      %1622 = vmatpush1.bf16.msra.mxu0 %v1542
      %1623 = vmatprep.mubr.bf16.mxu0 %v1313
      %1624 = vmatmul.mubr.bf16.gmra.mrb[0].mxu0 %v1312
      %v1625 = vpop.f32.mrb[0].mxu0
      %v1626 = vadd.f32 %v1397, %v1625
      %v1627 = vpop.f32.mrb[0].mxu0
      %v1628 = vpop.f32.mrb[0].mxu0
      %v1629 = vadd.f32 %v1397, %v1628
      %v1630 = vpop.f32.mrb[0].mxu0
      %1631 = vmatprep.mubr.bf16.mxu0 %v1317
      %1632 = vmatmul.mubr.bf16.gmra.mrb[0].mxu0 %v1316
      %v1633 = vpop.f32.mrb[0].mxu0
      %v1634 = vadd.f32 %v1397, %v1633
      %v1635 = vpop.f32.mrb[0].mxu0
      %v1636 = vpop.f32.mrb[0].mxu0
      %v1637 = vadd.f32 %v1397, %v1636
      %v1638 = vpop.f32.mrb[0].mxu0
      %1639 = vmatprep.mubr.bf16.mxu0 %v1321
      %1640 = vmatmul.mubr.bf16.gmra.mrb[0].mxu0 %v1320
      %v1641 = vpop.f32.mrb[0].mxu0
      %v1642 = vadd.f32 %v1397, %v1641
      %v1643 = vpop.f32.mrb[0].mxu0
      %v1644 = vpop.f32.mrb[0].mxu0
      %v1645 = vadd.f32 %v1397, %v1644
      %v1646 = vpop.f32.mrb[0].mxu0
      %1647 = vmatprep.mubr.bf16.mxu0 %v1325
      %1648 = vmatmul.mubr.bf16.gmra.mrb[0].mxu0 %v1324
      %v1649 = vpop.f32.mrb[0].mxu0
      %v1650 = vadd.f32 %v1397, %v1649
      %v1651 = vpop.f32.mrb[0].mxu0
      %v1652 = vpop.f32.mrb[0].mxu0
      %v1653 = vadd.f32 %v1397, %v1652
      %v1654 = vpop.f32.mrb[0].mxu0
      %1655 = vdwg.mxu0
      %1656 = vmatprep.subr.bf16.mxu0 0
      %1657 = vmatpush1.bf16.msra.mxu0 %v1543
      %1658 = vmatprep.subr.bf16.mxu0 0
      %1659 = vmatpush1.bf16.msra.mxu0 %v1544
      %1660 = vmatprep.subr.bf16.mxu0 0
      %1661 = vmatpush1.bf16.msra.mxu0 %v1545
      %1662 = vmatprep.subr.bf16.mxu0 0
      %1663 = vmatpush1.bf16.msra.mxu0 %v1546
      %1664 = vmatprep.subr.bf16.mxu0 0
      %1665 = vmatpush1.bf16.msra.mxu0 %v1547
      %1666 = vmatprep.subr.bf16.mxu0 0
      %1667 = vmatpush1.bf16.msra.mxu0 %v1548
      %1668 = vmatprep.subr.bf16.mxu0 0
      %1669 = vmatpush1.bf16.msra.mxu0 %v1549
      %1670 = vmatprep.subr.bf16.mxu0 0
      %1671 = vmatpush1.bf16.msra.mxu0 %v1550
      %1672 = vmatprep.subr.bf16.mxu0 0
      %1673 = vmatpush1.bf16.msra.mxu0 %v1551
      %1674 = vmatprep.subr.bf16.mxu0 0
      %1675 = vmatpush1.bf16.msra.mxu0 %v1552
      %1676 = vmatprep.subr.bf16.mxu0 0
      %1677 = vmatpush1.bf16.msra.mxu0 %v1553
      %1678 = vmatprep.subr.bf16.mxu0 0
      %1679 = vmatpush1.bf16.msra.mxu0 %v1554
      %1680 = vmatprep.subr.bf16.mxu0 0
      %1681 = vmatpush1.bf16.msra.mxu0 %v1555
      %1682 = vmatprep.subr.bf16.mxu0 0
      %1683 = vmatpush1.bf16.msra.mxu0 %v1556
      %1684 = vmatprep.subr.bf16.mxu0 0
      %1685 = vmatpush1.bf16.msra.mxu0 %v1557
      %1686 = vmatprep.subr.bf16.mxu0 0
      %1687 = vmatpush1.bf16.msra.mxu0 %v1558
      %1688 = vmatprep.mubr.bf16.mxu0 %v1315
      %1689 = vmatmul.mubr.bf16.gmra.mrb[0].mxu0 %v1314
      %v1690 = vpop.f32.mrb[0].mxu0
      %v1691 = vadd.f32 %v1626, %v1690
      %v1692 = vpop.f32.mrb[0].mxu0
      %v1693 = vpop.f32.mrb[0].mxu0
      %v1694 = vadd.f32 %v1629, %v1693
      %v1695 = vpop.f32.mrb[0].mxu0
      %1696 = vmatprep.mubr.bf16.mxu0 %v1319
      %1697 = vmatmul.mubr.bf16.gmra.mrb[0].mxu0 %v1318
      %v1698 = vpop.f32.mrb[0].mxu0
      %v1699 = vadd.f32 %v1634, %v1698
      %v1700 = vpop.f32.mrb[0].mxu0
      %v1701 = vpop.f32.mrb[0].mxu0
      %v1702 = vadd.f32 %v1637, %v1701
      %v1703 = vpop.f32.mrb[0].mxu0
      %1704 = vmatprep.mubr.bf16.mxu0 %v1323
      %1705 = vmatmul.mubr.bf16.gmra.mrb[0].mxu0 %v1322
      %v1706 = vpop.f32.mrb[0].mxu0
      %v1707 = vadd.f32 %v1642, %v1706
      %v1708 = vpop.f32.mrb[0].mxu0
      %v1709 = vpop.f32.mrb[0].mxu0
      %v1710 = vadd.f32 %v1645, %v1709
      %v1711 = vpop.f32.mrb[0].mxu0
      %1712 = vmatprep.mubr.bf16.mxu0 %v1327
      %1713 = vmatmul.mubr.bf16.gmra.mrb[0].mxu0 %v1326
      %v1714 = vpop.f32.mrb[0].mxu0
      %v1715 = vadd.f32 %v1650, %v1714
      %v1716 = vpop.f32.mrb[0].mxu0
      %v1717 = vpop.f32.mrb[0].mxu0
      %v1718 = vadd.f32 %v1653, %v1717
      %v1719 = vpop.f32.mrb[0].mxu0
      %1720 = vdwg.mxu0
      %v1721 = vadd.f32 %v1691, %v661
      %v1722 = vadd.f32 %v1694, %v662
      %v1723 = vadd.f32 %v1699, %v663
      %v1724 = vadd.f32 %v1702, %v664
      %v1725 = vadd.f32 %v1707, %v665
      %v1726 = vadd.f32 %v1710, %v666
      %v1727 = vadd.f32 %v1715, %v667
      %v1728 = vadd.f32 %v1718, %v668
      %1729 = vst [vmem:[%s549] sm:$0xff] %v1721
      %1730 = vst [vmem:[%s549 + $0x8] sm:$0xff] %v1722
      %1731 = vst [vmem:[%s549 + $0x10] sm:$0xff] %v1723
      %1732 = vst [vmem:[%s549 + $0x18] sm:$0xff] %v1724
      %1733 = vst [vmem:[%s549 + $0x20] sm:$0xff] %v1725
      %1734 = vst [vmem:[%s549 + $0x28] sm:$0xff] %v1726
      %1735 = vst [vmem:[%s549 + $0x30] sm:$0xff] %v1727
      %1736 = vst [vmem:[%s549 + $0x38] sm:$0xff] %v1728
      %s1737 = smul.u32 8, %s27
      %p1738 = scmp.lt.s32.totalorder %s26, 1
      %s1739 = scalar_select %p1738, %s26, 1
      %p1740 = scmp.lt.s32.totalorder %s1737, 7
      %s1741 = scalar_select %p1740, %s1737, 7
      %s1742 = smul.addr %s1739, 8
      %s1743 = sadd.s32 %s1741, %s1742
      %s1744 = smul.addr %s1743, 8
      %s1745 = scalar_lea.vmem %s11, %s1744
      // Predicated region
      $region65: #{_lambda_.3} parent=63 // pred_check
        %p1746 = pneg %p318
      $region66: #{_lambda_.3} parent=63 // pred_check_branch
        %1748 = sbr.rel (%p1746) target = $region68
      $region67: #{_lambda_.3} parent=63 // pred_region
        %s1749 = smul.u32 8, %s27
      $region68: #{_lambda_.3} parent=63 // pred_fallthru
        _
    $region64: #{_lambda_.3} parent=5 // pred_fallthru
      _
    %p1750 = scmp.le.s32.totalorder 2, %s17
    // Predicated region
    $region69: #{_lambda_.3} parent=5 // pred_check
      %p1751 = pneg %p1750
    $region70: #{_lambda_.3} parent=5 // pred_check_branch
      %1753 = sbr.rel (%p1751) target = $region72
    $region71: #{_lambda_.3} parent=5 // pred_region
      %s1754 = ssub.s32 %s17, 2
      // Predicated region
      $region73: #{_lambda_.3} parent=71 // pred_check
        %p1755 = pneg %p324
      $region74: #{_lambda_.3} parent=71 // pred_check_branch
        %1757 = sbr.rel (%p1755) target = $region76
      $region75: #{_lambda_.3} parent=71 // pred_region
        %s1758 = smul.u32 8, %s29
        %p1759 = scmp.lt.s32.totalorder %s28, 1
        %s1760 = scalar_select %p1759, %s28, 1
        %p1761 = scmp.lt.s32.totalorder %s1758, 7
        %s1762 = scalar_select %p1761, %s1758, 7
        %s1763 = smul.addr %s1760, 8
        %s1764 = sadd.s32 %s1762, %s1763
        %s1765 = smul.addr %s1764, 8
        %s1766 = scalar_lea.vmem %s11, %s1765
      $region76: #{_lambda_.3} parent=71 // pred_fallthru
        _
    $region72: #{_lambda_.3} parent=5 // pred_fallthru
      _
  $region6: #{_lambda_.3} parent=0 // loop_footer
    %s21 = sadd.s32 1, %s17
  $region7: #{_lambda_.3} parent=0 // loop_footer_branch
    %16 = sbr.rel target = $region3
  $region8: #{_lambda_.3} parent=0 // loop_exit
    _

</llo_original>
